<compile_context>
chip_gen: v5e
topology: v5e:2x2
jax: 0.10.0
libtpu: 0.0.40
codegen_flags: <defaults>
</compile_context>

<pallas_src>
import math
import functools

import jax
import jax.numpy as jnp
from jax.experimental import pallas as pl
from jax.experimental.pallas import tpu as pltpu


_MASK_VALUE = -1e30  # large negative instead of -inf (avoids inf-inf corner cases)


def _pick_tile(dim, target, align):
    """Largest `align`-aligned divisor of `dim` that is <= target; else the full dim."""
    if dim <= target:
        return dim
    t = (target // align) * align
    while t >= align:
        if dim % t == 0:
            return t
        t -= align
    return dim  # full dim is always a legal block


# ----------------------------------------------------------------------------
# Tiled linear (bias / gelu epilogue / transposed-weight contraction optional)
# ----------------------------------------------------------------------------

def _linear_kernel(*refs, activation, trans_w, has_bias):
    if has_bias:
        x_ref, w_ref, b_ref, o_ref, acc_ref = refs
    else:
        x_ref, w_ref, o_ref, acc_ref = refs
        b_ref = None

    k = pl.program_id(2)

    @pl.when(k == 0)
    def _init():
        acc_ref[...] = jnp.zeros_like(acc_ref)

    x = x_ref[...]
    w = w_ref[...]
    if trans_w:
        # contract x's K axis against w's axis 1 (w stored as (N, K)) — no w.T copy.
        acc_ref[...] += jax.lax.dot_general(
            x, w, (((1,), (1,)), ((), ())), preferred_element_type=jnp.float32)
    else:
        acc_ref[...] += jnp.dot(x, w, preferred_element_type=jnp.float32)

    @pl.when(k == pl.num_programs(2) - 1)
    def _store():
        out = acc_ref[...]
        if has_bias:
            out = out + b_ref[...].astype(jnp.float32)
        if activation == "gelu_tanh":
            c = math.sqrt(2.0 / math.pi)
            out = 0.5 * out * (1.0 + jnp.tanh(c * (out + 0.044715 * out * out * out)))
        o_ref[...] = out.astype(o_ref.dtype)


def linear(x, w, b=None, *, activation=None, trans_w=False, tm=256, tn=256, tk=512):
    """x: (M, K); w: (K, N) or (N, K) if trans_w; b: (N,) or None -> (M, N)."""
    M, K = x.shape
    N = w.shape[0] if trans_w else w.shape[1]

    tm = _pick_tile(M, tm, 8)
    tn = _pick_tile(N, tn, 128)
    tk = _pick_tile(K, tk, 128)
    grid = (M // tm, N // tn, K // tk)

    in_specs = [pl.BlockSpec((tm, tk), lambda i, j, k: (i, k))]
    if trans_w:
        in_specs.append(pl.BlockSpec((tn, tk), lambda i, j, k: (j, k)))
    else:
        in_specs.append(pl.BlockSpec((tk, tn), lambda i, j, k: (k, j)))
    args = [x, w]
    if b is not None:
        in_specs.append(pl.BlockSpec((1, tn), lambda i, j, k: (0, j)))
        args.append(b.reshape(1, N))

    kernel = functools.partial(_linear_kernel, activation=activation,
                               trans_w=trans_w, has_bias=b is not None)
    return pl.pallas_call(
        kernel,
        out_shape=jax.ShapeDtypeStruct((M, N), x.dtype),
        grid=grid,
        in_specs=in_specs,
        out_specs=pl.BlockSpec((tm, tn), lambda i, j, k: (i, j)),
        scratch_shapes=[pltpu.VMEM((tm, tn), jnp.float32)],
        compiler_params=pltpu.CompilerParams(
            dimension_semantics=("parallel", "parallel", "arbitrary")),
    )(*args)


# ----------------------------------------------------------------------------
# Fused (residual add + LayerNorm), row-tiled
# ----------------------------------------------------------------------------

def _add_ln_kernel(x_ref, res_ref, g_ref, b_ref, newres_ref, h_ref, *, eps):
    r = x_ref[...].astype(jnp.float32) + res_ref[...].astype(jnp.float32)
    newres_ref[...] = r.astype(newres_ref.dtype)
    mu = jnp.mean(r, axis=-1, keepdims=True)
    xc = r - mu
    var = jnp.mean(xc * xc, axis=-1, keepdims=True)
    inv = jax.lax.rsqrt(var + eps)
    h_ref[...] = ((xc * inv) * g_ref[...].astype(jnp.float32)
                  + b_ref[...].astype(jnp.float32)).astype(h_ref.dtype)


def add_layernorm(x, res, gamma, beta, eps, *, block_rows=256):
    """x, res: (M, D); returns (new_residual = x + res, LayerNorm(new_residual))."""
    M, D = x.shape
    tm = _pick_tile(M, block_rows, 8)
    grid = (M // tm,)
    row = pl.BlockSpec((tm, D), lambda i: (i, 0))
    vec = pl.BlockSpec((1, D), lambda i: (0, 0))
    return pl.pallas_call(
        functools.partial(_add_ln_kernel, eps=eps),
        out_shape=(jax.ShapeDtypeStruct((M, D), x.dtype),
                   jax.ShapeDtypeStruct((M, D), x.dtype)),
        grid=grid,
        in_specs=[row, row, vec, vec],
        out_specs=(row, row),
        compiler_params=pltpu.CompilerParams(dimension_semantics=("parallel",)),
    )(x, res, gamma.reshape(1, D), beta.reshape(1, D))


# ----------------------------------------------------------------------------
# Flash-style causal attention (online softmax, causal block skipping)
# ----------------------------------------------------------------------------

def _flash_attn_kernel(q_ref, k_ref, v_ref, o_ref, m_sc, l_sc, acc_sc, *, scale):
    tq, H, Dh = q_ref.shape
    tkv = k_ref.shape[0]
    qi = pl.program_id(1)
    ki = pl.program_id(2)

    @pl.when(ki == 0)
    def _init():
        m_sc[...] = jnp.full_like(m_sc, _MASK_VALUE)
        l_sc[...] = jnp.zeros_like(l_sc)
        acc_sc[...] = jnp.zeros_like(acc_sc)

    # Causal block skipping: process only kv blocks that overlap the past of this q block.
    @pl.when(ki * tkv <= qi * tq + (tq - 1))
    def _compute():
        q = q_ref[...].astype(jnp.float32) * scale          # (tq, H, Dh)
        k = k_ref[...].astype(jnp.float32)                  # (tkv, H, Dh)
        v = v_ref[...].astype(jnp.float32)                  # (tkv, H, Dh)
        row = qi * tq + jax.lax.broadcasted_iota(jnp.int32, (tq, tkv), 0)
        col = ki * tkv + jax.lax.broadcasted_iota(jnp.int32, (tq, tkv), 1)
        causal = col <= row

        for h in range(H):                                  # static unroll over heads
            # scores: contract Dh of q and k directly (no explicit k.T)
            s = jax.lax.dot_general(q[:, h, :], k[:, h, :],
                                    (((1,), (1,)), ((), ())),
                                    preferred_element_type=jnp.float32)   # (tq, tkv)
            s = jnp.where(causal, s, _MASK_VALUE)
            m_prev = m_sc[h]                                # (tq, 1)
            m_new = jnp.maximum(m_prev, jnp.max(s, axis=-1, keepdims=True))
            alpha = jnp.exp(m_prev - m_new)
            p = jnp.exp(s - m_new)
            l_sc[h] = alpha * l_sc[h] + jnp.sum(p, axis=-1, keepdims=True)
            acc_sc[h] = alpha * acc_sc[h] + jnp.dot(p, v[:, h, :],
                                                    preferred_element_type=jnp.float32)
            m_sc[h] = m_new

    @pl.when(ki == pl.num_programs(2) - 1)
    def _finalize():
        for h in range(H):
            inv_l = pl.reciprocal(l_sc[h], approx=True)      # EUP slot, off VALU path
            o_ref[:, h, :] = (acc_sc[h] * inv_l).astype(o_ref.dtype)


def flash_causal_attention(q, k, v, scale, *, tq=128, tkv=128):
    """q, k, v: (B, S, H, Dh) -> (B, S, H, Dh); causal softmax attention."""
    B, S, H, Dh = q.shape
    tq = _pick_tile(S, tq, 8)
    tkv = _pick_tile(S, tkv, 8)
    grid = (B, S // tq, S // tkv)
    q_spec = pl.BlockSpec((None, tq, H, Dh), lambda b, qi, ki: (b, qi, 0, 0))
    kv_spec = pl.BlockSpec((None, tkv, H, Dh), lambda b, qi, ki: (b, ki, 0, 0))
    o_spec = pl.BlockSpec((None, tq, H, Dh), lambda b, qi, ki: (b, qi, 0, 0))
    return pl.pallas_call(
        functools.partial(_flash_attn_kernel, scale=scale),
        out_shape=jax.ShapeDtypeStruct((B, S, H, Dh), q.dtype),
        grid=grid,
        in_specs=[q_spec, kv_spec, kv_spec],
        out_specs=o_spec,
        scratch_shapes=[pltpu.VMEM((H, tq, 1), jnp.float32),    # running max m
                        pltpu.VMEM((H, tq, 1), jnp.float32),    # running denom l
                        pltpu.VMEM((H, tq, Dh), jnp.float32)],  # running numerator
        compiler_params=pltpu.CompilerParams(
            dimension_semantics=("parallel", "parallel", "arbitrary")),
    )(q, k, v)


# ----------------------------------------------------------------------------
# Model: parameter init (mirrors _init_weights) and forward pass
# ----------------------------------------------------------------------------

def init_params(key, *, d_model, n_layer, d_inner, vocab_size, std=0.02):
    resc = std / math.sqrt(2 * n_layer)   # rescale_prenorm_residual for out_proj / fc2
    keys = jax.random.split(key, 1 + 6 * n_layer)
    ki = iter(keys)

    params = {
        # nn.Embedding: normal(std)
        "word_emb": std * jax.random.normal(next(ki), (vocab_size, d_model), jnp.float32),
        "ln_f_g": jnp.ones((d_model,), jnp.float32),
        "ln_f_b": jnp.zeros((d_model,), jnp.float32),
        "layers": [],
    }
    for _ in range(n_layer):
        lyr = {
            "ln1_g": jnp.ones((d_model,), jnp.float32),
            "ln1_b": jnp.zeros((d_model,), jnp.float32),
            # Wqkv: nn.Linear(d_model, 3*d_model) stored column-split as Wq/Wk/Wv,
            # each (K, N) for x @ W (same normal(std) init).
            "wq": std * jax.random.normal(next(ki), (d_model, d_model), jnp.float32),
            "wk": std * jax.random.normal(next(ki), (d_model, d_model), jnp.float32),
            "wv": std * jax.random.normal(next(ki), (d_model, d_model), jnp.float32),
            "bq": jnp.zeros((d_model,), jnp.float32),
            "bk": jnp.zeros((d_model,), jnp.float32),
            "bv": jnp.zeros((d_model,), jnp.float32),
            # out_proj: rescaled std
            "wout": resc * jax.random.normal(next(ki), (d_model, d_model), jnp.float32),
            "bout": jnp.zeros((d_model,), jnp.float32),
            "ln2_g": jnp.ones((d_model,), jnp.float32),
            "ln2_b": jnp.zeros((d_model,), jnp.float32),
            # fc1 / fc2
            "w1": std * jax.random.normal(next(ki), (d_model, d_inner), jnp.float32),
            "b1": jnp.zeros((d_inner,), jnp.float32),
            "w2": resc * jax.random.normal(next(ki), (d_inner, d_model), jnp.float32),
            "b2": jnp.zeros((d_model,), jnp.float32),
        }
        params["layers"].append(lyr)
    return params


def mha_mixer(x, lyr, *, n_heads, B, S, d_model):
    """Causal multi-head attention mixer. x: (B*S, D) -> (B*S, D)."""
    Dh = d_model // n_heads
    # Three column-slices of Wqkv; outputs viewed as (B, S, H, Dh) for free (no transpose copy).
    q = linear(x, lyr["wq"], lyr["bq"]).reshape(B, S, n_heads, Dh)
    k = linear(x, lyr["wk"], lyr["bk"]).reshape(B, S, n_heads, Dh)
    v = linear(x, lyr["wv"], lyr["bv"]).reshape(B, S, n_heads, Dh)
    ctx = flash_causal_attention(q, k, v, scale=1.0 / math.sqrt(Dh))
    ctx = ctx.reshape(B * S, d_model)    # free view back to the row-major slab
    return linear(ctx, lyr["wout"], lyr["bout"])


def conv_lm_head_model_forward(params, input_ids, *, n_heads, ln_eps=1e-5):
    """Returns lm_logits of shape (B, S, vocab_size)."""
    B, S = input_ids.shape
    d_model = params["word_emb"].shape[1]
    vocab = params["word_emb"].shape[0]

    # GPT2Embeddings (word embeddings only; max_position_embeddings=0).
    # TODO(synk): embedding gather kept in plain JAX (glue); no Pallas gather needed here.
    hidden = jnp.take(params["word_emb"], input_ids, axis=0).reshape(B * S, d_model)
    residual = jnp.zeros_like(hidden)                          # residual is None -> 0

    for lyr in params["layers"]:
        # dropout1(hidden) + residual ; norm1     (dropout = identity in eval)
        residual, h = add_layernorm(hidden, residual, lyr["ln1_g"], lyr["ln1_b"], ln_eps)
        # mixer (causal MHA; attn_layer_idx covers every layer)
        h = mha_mixer(h, lyr, n_heads=n_heads, B=B, S=S, d_model=d_model)
        # dropout2(h) + residual ; norm2
        residual, h = add_layernorm(h, residual, lyr["ln2_g"], lyr["ln2_b"], ln_eps)
        # Mlp: fc1 (+bias + gelu-tanh fused in matmul epilogue) -> fc2 (+bias)
        # TODO(synk): residual-add + LayerNorm not fused into fc2 epilogue (LN needs full rows
        # while the matmul is N-tiled); kept as a separate row-tiled kernel.
        h1 = linear(h, lyr["w1"], lyr["b1"], activation="gelu_tanh")
        hidden = linear(h1, lyr["w2"], lyr["b2"])

    # final: drop_f(hidden) + residual ; ln_f
    residual, hidden = add_layernorm(hidden, residual,
                                     params["ln_f_g"], params["ln_f_b"], ln_eps)

    # lm_head: weight tied to the word-embedding table, no bias; contract in place
    # (w stored (vocab, d_model), trans_w=True) so no word_emb.T copy and no zero bias.
    logits = linear(hidden, params["word_emb"], None, trans_w=True)
    return logits.reshape(B, S, vocab)


# ----------------------------------------------------------------------------
# Demo
# ----------------------------------------------------------------------------

if __name__ == "__main__":
    # Small config consistent with the module (pad_vocab_size_multiple handled by choice).
    d_model = 32
    n_layer = 2
    d_inner = 4 * d_model
    vocab_size = 128
    n_heads = 4
    B, S = 2, 8

    key = jax.random.PRNGKey(0)
    k_param, k_ids = jax.random.split(key)
    params = init_params(k_param, d_model=d_model, n_layer=n_layer,
                         d_inner=d_inner, vocab_size=vocab_size)
    input_ids = jax.random.randint(k_ids, (B, S), 0, vocab_size, dtype=jnp.int32)

    fwd = jax.jit(functools.partial(conv_lm_head_model_forward, n_heads=n_heads))
    logits = fwd(params, input_ids)
    jax.block_until_ready(logits)

    assert logits.shape == (B, S, vocab_size) and logits.dtype == jnp.float32
    assert bool(jnp.all(jnp.isfinite(logits)))
    print("KERNEL_OK")
</pallas_src>

<mosaic_0001>
module attributes {stable_mosaic.version = 11 : i64} {
  func.func @_linear_kernel(%arg0: i32, %arg1: i32, %arg2: i32, %arg3: memref<16x32xf32, #tpu.memory_space<vmem>>, %arg4: memref<32x32xf32, #tpu.memory_space<vmem>>, %arg5: memref<1x32xf32, #tpu.memory_space<vmem>>, %arg6: memref<16x32xf32, #tpu.memory_space<vmem>>, %arg7: memref<16x32xf32, #tpu.memory_space<vmem>>) attributes {dimension_semantics = [#tpu.dimension_semantics<parallel>, #tpu.dimension_semantics<parallel>, #tpu.dimension_semantics<arbitrary>], iteration_bounds = array<i64: 1, 1, 1>, scalar_prefetch = 0 : i64, scratch_operands = 1 : i64, tpu.core_type = #tpu.core_type<tc>, window_params = [{transform_indices = @transform_0, window_bounds = array<i64: 16, 32>}, {transform_indices = @transform_1, window_bounds = array<i64: 32, 32>}, {transform_indices = @transform_2, window_bounds = array<i64: 1, 32>}, {transform_indices = @transform_3, window_bounds = array<i64: 16, 32>}]} {
    %c0_i32 = arith.constant 0 : i32
    %0 = arith.cmpi eq, %arg2, %c0_i32 : i32
    %1 = arith.extui %0 : i1 to i32
    %c0_i32_0 = arith.constant 0 : i32
    %2 = arith.cmpi ne, %1, %c0_i32_0 : i32
    scf.if %2 {
      %cst_10 = arith.constant 0.000000e+00 : f32
      %12 = vector.broadcast %cst_10 : f32 to vector<16x32xf32>
      %c0_11 = arith.constant 0 : index
      %c0_12 = arith.constant 0 : index
      %13 = vector.load %arg7[%c0_11, %c0_12] : memref<16x32xf32, #tpu.memory_space<vmem>>, vector<16x32xf32>
      tpu.vector_store %arg7[%c0_11, %c0_12], %12 {strides = array<i32>} : memref<16x32xf32, #tpu.memory_space<vmem>>, vector<16x32xf32>,
    } else {
    }
    %c0 = arith.constant 0 : index
    %c0_1 = arith.constant 0 : index
    %3 = vector.load %arg3[%c0, %c0_1] : memref<16x32xf32, #tpu.memory_space<vmem>>, vector<16x32xf32>
    %c0_2 = arith.constant 0 : index
    %c0_3 = arith.constant 0 : index
    %4 = vector.load %arg4[%c0_2, %c0_3] : memref<32x32xf32, #tpu.memory_space<vmem>>, vector<32x32xf32>
    %c0_4 = arith.constant 0 : index
    %c0_5 = arith.constant 0 : index
    %5 = vector.load %arg7[%c0_4, %c0_5] : memref<16x32xf32, #tpu.memory_space<vmem>>, vector<16x32xf32>
    %cst = arith.constant dense<0.000000e+00> : vector<16x32xf32>
    %6 = tpu.matmul %3, %4, %cst {dimension_numbers = #tpu.dot_dimension_numbers<[1], [0], [0], [1], [0, 0, 1, 1], [], []>} : vector<16x32xf32>, vector<32x32xf32>, vector<16x32xf32> -> vector<16x32xf32>
    %7 = arith.addf %5, %6 : vector<16x32xf32>
    %c0_6 = arith.constant 0 : index
    %c0_7 = arith.constant 0 : index
    %8 = vector.load %arg7[%c0_6, %c0_7] : memref<16x32xf32, #tpu.memory_space<vmem>>, vector<16x32xf32>
    tpu.vector_store %arg7[%c0_6, %c0_7], %7 {strides = array<i32>} : memref<16x32xf32, #tpu.memory_space<vmem>>, vector<16x32xf32>,
    %c0_i32_8 = arith.constant 0 : i32
    %9 = arith.cmpi eq, %arg2, %c0_i32_8 : i32
    %10 = arith.extui %9 : i1 to i32
    %c0_i32_9 = arith.constant 0 : i32
    %11 = arith.cmpi ne, %10, %c0_i32_9 : i32
    scf.if %11 {
      %c0_10 = arith.constant 0 : index
      %c0_11 = arith.constant 0 : index
      %12 = vector.load %arg7[%c0_10, %c0_11] : memref<16x32xf32, #tpu.memory_space<vmem>>, vector<16x32xf32>
      %c0_12 = arith.constant 0 : index
      %c0_13 = arith.constant 0 : index
      %13 = vector.load %arg5[%c0_12, %c0_13] : memref<1x32xf32, #tpu.memory_space<vmem>>, vector<1x32xf32>
      %14 = vector.broadcast %13 : vector<1x32xf32> to vector<16x32xf32>
      %15 = arith.addf %12, %14 : vector<16x32xf32>
      %c0_14 = arith.constant 0 : index
      %c0_15 = arith.constant 0 : index
      %16 = vector.load %arg6[%c0_14, %c0_15] : memref<16x32xf32, #tpu.memory_space<vmem>>, vector<16x32xf32>
      tpu.vector_store %arg6[%c0_14, %c0_15], %15 {strides = array<i32>} : memref<16x32xf32, #tpu.memory_space<vmem>>, vector<16x32xf32>,
    } else {
    }
    return
  }
  func.func @transform_0(%arg0: i32, %arg1: i32, %arg2: i32) -> (i32, i32) {
    %c0_i32 = arith.constant 0 : i32
    return %arg0, %arg2 : i32, i32
  }
  func.func @transform_1(%arg0: i32, %arg1: i32, %arg2: i32) -> (i32, i32) {
    %c0_i32 = arith.constant 0 : i32
    return %arg2, %arg1 : i32, i32
  }
  func.func @transform_2(%arg0: i32, %arg1: i32, %arg2: i32) -> (i32, i32) {
    %c0_i32 = arith.constant 0 : i32
    %c0_i32_0 = arith.constant 0 : i32
    return %c0_i32, %arg1 : i32, i32
  }
  func.func @transform_3(%arg0: i32, %arg1: i32, %arg2: i32) -> (i32, i32) {
    %c0_i32 = arith.constant 0 : i32
    return %arg0, %arg1 : i32, i32
  }
}

module attributes {stable_mosaic.version = 11 : i64} {
  func.func @_add_ln_kernel(%arg0: i32, %arg1: memref<16x32xf32, #tpu.memory_space<vmem>>, %arg2: memref<16x32xf32, #tpu.memory_space<vmem>>, %arg3: memref<1x32xf32, #tpu.memory_space<vmem>>, %arg4: memref<1x32xf32, #tpu.memory_space<vmem>>, %arg5: memref<16x32xf32, #tpu.memory_space<vmem>>, %arg6: memref<16x32xf32, #tpu.memory_space<vmem>>) attributes {dimension_semantics = [#tpu.dimension_semantics<parallel>], iteration_bounds = array<i64: 1>, scalar_prefetch = 0 : i64, scratch_operands = 0 : i64, tpu.core_type = #tpu.core_type<tc>, window_params = [{transform_indices = @transform_0, window_bounds = array<i64: 16, 32>}, {transform_indices = @transform_1, window_bounds = array<i64: 16, 32>}, {pipeline_mode = #tpu.pipeline_mode<synchronous>, transform_indices = @transform_2, window_bounds = array<i64: 1, 32>}, {pipeline_mode = #tpu.pipeline_mode<synchronous>, transform_indices = @transform_3, window_bounds = array<i64: 1, 32>}, {transform_indices = @transform_4, window_bounds = array<i64: 16, 32>}, {transform_indices = @transform_5, window_bounds = array<i64: 16, 32>}]} {
    %c0 = arith.constant 0 : index
    %c0_0 = arith.constant 0 : index
    %0 = vector.load %arg1[%c0, %c0_0] : memref<16x32xf32, #tpu.memory_space<vmem>>, vector<16x32xf32>
    %c0_1 = arith.constant 0 : index
    %c0_2 = arith.constant 0 : index
    %1 = vector.load %arg2[%c0_1, %c0_2] : memref<16x32xf32, #tpu.memory_space<vmem>>, vector<16x32xf32>
    %2 = arith.addf %0, %1 : vector<16x32xf32>
    %c0_3 = arith.constant 0 : index
    %c0_4 = arith.constant 0 : index
    %3 = vector.load %arg5[%c0_3, %c0_4] : memref<16x32xf32, #tpu.memory_space<vmem>>, vector<16x32xf32>
    tpu.vector_store %arg5[%c0_3, %c0_4], %2 {strides = array<i32>} : memref<16x32xf32, #tpu.memory_space<vmem>>, vector<16x32xf32>,
    %cst = arith.constant dense<0.000000e+00> : vector<16xf32>
    %4 = vector.multi_reduction <add>, %2, %cst [1] : vector<16x32xf32> to vector<16xf32>
    %5 = vector.shape_cast %4 : vector<16xf32> to vector<16x1xf32>
    %cst_5 = arith.constant 3.200000e+01 : f32
    %6 = vector.broadcast %cst_5 : f32 to vector<16x1xf32>
    %7 = arith.divf %5, %6 : vector<16x1xf32>
    %8 = vector.broadcast %7 : vector<16x1xf32> to vector<16x32xf32>
    %9 = arith.subf %2, %8 : vector<16x32xf32>
    %10 = arith.mulf %9, %9 : vector<16x32xf32>
    %cst_6 = arith.constant dense<0.000000e+00> : vector<16xf32>
    %11 = vector.multi_reduction <add>, %10, %cst_6 [1] : vector<16x32xf32> to vector<16xf32>
    %12 = vector.shape_cast %11 : vector<16xf32> to vector<16x1xf32>
    %cst_7 = arith.constant 3.200000e+01 : f32
    %13 = vector.broadcast %cst_7 : f32 to vector<16x1xf32>
    %14 = arith.divf %12, %13 : vector<16x1xf32>
    %cst_8 = arith.constant 9.99999974E-6 : f32
    %15 = vector.broadcast %cst_8 : f32 to vector<16x1xf32>
    %16 = arith.addf %14, %15 : vector<16x1xf32>
    %17 = math.rsqrt %16 : vector<16x1xf32>
    %18 = vector.broadcast %17 : vector<16x1xf32> to vector<16x32xf32>
    %19 = arith.mulf %9, %18 : vector<16x32xf32>
    %c0_9 = arith.constant 0 : index
    %c0_10 = arith.constant 0 : index
    %20 = vector.load %arg3[%c0_9, %c0_10] : memref<1x32xf32, #tpu.memory_space<vmem>>, vector<1x32xf32>
    %21 = vector.broadcast %20 : vector<1x32xf32> to vector<16x32xf32>
    %22 = arith.mulf %19, %21 : vector<16x32xf32>
    %c0_11 = arith.constant 0 : index
    %c0_12 = arith.constant 0 : index
    %23 = vector.load %arg4[%c0_11, %c0_12] : memref<1x32xf32, #tpu.memory_space<vmem>>, vector<1x32xf32>
    %24 = vector.broadcast %23 : vector<1x32xf32> to vector<16x32xf32>
    %25 = arith.addf %22, %24 : vector<16x32xf32>
    %c0_13 = arith.constant 0 : index
    %c0_14 = arith.constant 0 : index
    %26 = vector.load %arg6[%c0_13, %c0_14] : memref<16x32xf32, #tpu.memory_space<vmem>>, vector<16x32xf32>
    tpu.vector_store %arg6[%c0_13, %c0_14], %25 {strides = array<i32>} : memref<16x32xf32, #tpu.memory_space<vmem>>, vector<16x32xf32>,
    return
  }
  func.func @transform_0(%arg0: i32) -> (i32, i32) {
    %c0_i32 = arith.constant 0 : i32
    %c0_i32_0 = arith.constant 0 : i32
    return %arg0, %c0_i32 : i32, i32
  }
  func.func @transform_1(%arg0: i32) -> (i32, i32) {
    %c0_i32 = arith.constant 0 : i32
    %c0_i32_0 = arith.constant 0 : i32
    return %arg0, %c0_i32 : i32, i32
  }
  func.func @transform_2(%arg0: i32) -> (i32, i32) {
    %c0_i32 = arith.constant 0 : i32
    %c0_i32_0 = arith.constant 0 : i32
    %c0_i32_1 = arith.constant 0 : i32
    return %c0_i32, %c0_i32_0 : i32, i32
  }
  func.func @transform_3(%arg0: i32) -> (i32, i32) {
    %c0_i32 = arith.constant 0 : i32
    %c0_i32_0 = arith.constant 0 : i32
    %c0_i32_1 = arith.constant 0 : i32
    return %c0_i32, %c0_i32_0 : i32, i32
  }
  func.func @transform_4(%arg0: i32) -> (i32, i32) {
    %c0_i32 = arith.constant 0 : i32
    %c0_i32_0 = arith.constant 0 : i32
    return %arg0, %c0_i32 : i32, i32
  }
  func.func @transform_5(%arg0: i32) -> (i32, i32) {
    %c0_i32 = arith.constant 0 : i32
    %c0_i32_0 = arith.constant 0 : i32
    return %arg0, %c0_i32 : i32, i32
  }
}

module attributes {stable_mosaic.version = 11 : i64} {
  func.func @_flash_attn_kernel(%arg0: i32, %arg1: i32, %arg2: i32, %arg3: memref<1x8x4x8xf32, #tpu.memory_space<vmem>>, %arg4: memref<1x8x4x8xf32, #tpu.memory_space<vmem>>, %arg5: memref<1x8x4x8xf32, #tpu.memory_space<vmem>>, %arg6: memref<1x8x4x8xf32, #tpu.memory_space<vmem>>, %arg7: memref<4x8x1xf32, #tpu.memory_space<vmem>>, %arg8: memref<4x8x1xf32, #tpu.memory_space<vmem>>, %arg9: memref<4x8x8xf32, #tpu.memory_space<vmem>>) attributes {dimension_semantics = [#tpu.dimension_semantics<parallel>, #tpu.dimension_semantics<parallel>, #tpu.dimension_semantics<arbitrary>], iteration_bounds = array<i64: 2, 1, 1>, scalar_prefetch = 0 : i64, scratch_operands = 3 : i64, tpu.core_type = #tpu.core_type<tc>, window_params = [{transform_indices = @transform_0, window_bounds = array<i64: 1, 8, 4, 8>}, {transform_indices = @transform_1, window_bounds = array<i64: 1, 8, 4, 8>}, {transform_indices = @transform_2, window_bounds = array<i64: 1, 8, 4, 8>}, {transform_indices = @transform_3, window_bounds = array<i64: 1, 8, 4, 8>}]} {
    %c0_i32 = arith.constant 0 : i32
    %0 = arith.cmpi eq, %arg2, %c0_i32 : i32
    %1 = arith.extui %0 : i1 to i32
    %c0_i32_0 = arith.constant 0 : i32
    %2 = arith.cmpi ne, %1, %c0_i32_0 : i32
    scf.if %2 {
      %cst = arith.constant -1.000000e+30 : f32
      %12 = vector.broadcast %cst : f32 to vector<4x8x1xf32>
      %c0 = arith.constant 0 : index
      %c0_5 = arith.constant 0 : index
      %c0_6 = arith.constant 0 : index
      %13 = vector.load %arg7[%c0, %c0_5, %c0_6] : memref<4x8x1xf32, #tpu.memory_space<vmem>>, vector<4x8x1xf32>
      tpu.vector_store %arg7[%c0, %c0_5, %c0_6], %12 {strides = array<i32>} : memref<4x8x1xf32, #tpu.memory_space<vmem>>, vector<4x8x1xf32>,
      %cst_7 = arith.constant 0.000000e+00 : f32
      %14 = vector.broadcast %cst_7 : f32 to vector<4x8x1xf32>
      %c0_8 = arith.constant 0 : index
      %c0_9 = arith.constant 0 : index
      %c0_10 = arith.constant 0 : index
      %15 = vector.load %arg8[%c0_8, %c0_9, %c0_10] : memref<4x8x1xf32, #tpu.memory_space<vmem>>, vector<4x8x1xf32>
      tpu.vector_store %arg8[%c0_8, %c0_9, %c0_10], %14 {strides = array<i32>} : memref<4x8x1xf32, #tpu.memory_space<vmem>>, vector<4x8x1xf32>,
      %cst_11 = arith.constant 0.000000e+00 : f32
      %16 = vector.broadcast %cst_11 : f32 to vector<4x8x8xf32>
      %c0_12 = arith.constant 0 : index
      %c0_13 = arith.constant 0 : index
      %c0_14 = arith.constant 0 : index
      %17 = vector.load %arg9[%c0_12, %c0_13, %c0_14] : memref<4x8x8xf32, #tpu.memory_space<vmem>>, vector<4x8x8xf32>
      tpu.vector_store %arg9[%c0_12, %c0_13, %c0_14], %16 {strides = array<i32>} : memref<4x8x8xf32, #tpu.memory_space<vmem>>, vector<4x8x8xf32>,
    } else {
    }
    %c8_i32 = arith.constant 8 : i32
    %3 = arith.muli %arg2, %c8_i32 : i32
    %c8_i32_1 = arith.constant 8 : i32
    %4 = arith.muli %arg1, %c8_i32_1 : i32
    %c7_i32 = arith.constant 7 : i32
    %5 = arith.addi %4, %c7_i32 : i32
    %6 = arith.cmpi sle, %3, %5 : i32
    %7 = arith.extui %6 : i1 to i32
    %c0_i32_2 = arith.constant 0 : i32
    %8 = arith.cmpi ne, %7, %c0_i32_2 : i32
    scf.if %8 {
      %c0 = arith.constant 0 : index
      %c0_5 = arith.constant 0 : index
      %c0_6 = arith.constant 0 : index
      %c0_7 = arith.constant 0 : index
      %12 = vector.load %arg3[%c0, %c0_5, %c0_6, %c0_7] : memref<1x8x4x8xf32, #tpu.memory_space<vmem>>, vector<1x8x4x8xf32>
      %13 = vector.shape_cast %12 : vector<1x8x4x8xf32> to vector<8x4x8xf32>
      %cst = arith.constant 0.353553385 : f32
      %14 = vector.broadcast %cst : f32 to vector<8x4x8xf32>
      %15 = arith.mulf %13, %14 : vector<8x4x8xf32>
      %c0_8 = arith.constant 0 : index
      %c0_9 = arith.constant 0 : index
      %c0_10 = arith.constant 0 : index
      %c0_11 = arith.constant 0 : index
      %16 = vector.load %arg4[%c0_8, %c0_9, %c0_10, %c0_11] : memref<1x8x4x8xf32, #tpu.memory_space<vmem>>, vector<1x8x4x8xf32>
      %17 = vector.shape_cast %16 : vector<1x8x4x8xf32> to vector<8x4x8xf32>
      %c0_12 = arith.constant 0 : index
      %c0_13 = arith.constant 0 : index
      %c0_14 = arith.constant 0 : index
      %c0_15 = arith.constant 0 : index
      %18 = vector.load %arg5[%c0_12, %c0_13, %c0_14, %c0_15] : memref<1x8x4x8xf32, #tpu.memory_space<vmem>>, vector<1x8x4x8xf32>
      %19 = vector.shape_cast %18 : vector<1x8x4x8xf32> to vector<8x4x8xf32>
      %c8_i32_16 = arith.constant 8 : i32
      %20 = arith.muli %arg1, %c8_i32_16 : i32
      %21 = tpu.iota {dimensions = array<i32: 0>} : vector<8x8xi32>
      %22 = vector.broadcast %20 : i32 to vector<8x8xi32>
      %23 = arith.addi %22, %21 : vector<8x8xi32>
      %c8_i32_17 = arith.constant 8 : i32
      %24 = arith.muli %arg2, %c8_i32_17 : i32
      %25 = tpu.iota {dimensions = array<i32: 1>} : vector<8x8xi32>
      %26 = vector.broadcast %24 : i32 to vector<8x8xi32>
      %27 = arith.addi %26, %25 : vector<8x8xi32>
      %28 = arith.cmpi sle, %27, %23 : vector<8x8xi32>
      %29 = vector.extract_strided_slice %15 {offsets = [0, 0, 0], sizes = [8, 1, 8], strides = [1, 1, 1]} : vector<8x4x8xf32> to vector<8x1x8xf32>
      %30 = vector.shape_cast %29 : vector<8x1x8xf32> to vector<8x8xf32>
      %31 = vector.extract_strided_slice %17 {offsets = [0, 0, 0], sizes = [8, 1, 8], strides = [1, 1, 1]} : vector<8x4x8xf32> to vector<8x1x8xf32>
      %32 = vector.shape_cast %31 : vector<8x1x8xf32> to vector<8x8xf32>
      %cst_18 = arith.constant dense<0.000000e+00> : vector<8x8xf32>
      %33 = tpu.matmul %30, %32, %cst_18 {dimension_numbers = #tpu.dot_dimension_numbers<[1], [1], [0], [0], [0, 0, 1, 0], [], []>} : vector<8x8xf32>, vector<8x8xf32>, vector<8x8xf32> -> vector<8x8xf32>
      %cst_19 = arith.constant -1.000000e+30 : f32
      %34 = vector.broadcast %cst_19 : f32 to vector<8x8xf32>
      %35 = arith.select %28, %33, %34 : vector<8x8xi1>, vector<8x8xf32>
      %c0_20 = arith.constant 0 : index
      %c0_21 = arith.constant 0 : index
      %c0_22 = arith.constant 0 : index
      %36 = vector.load %arg7[%c0_20, %c0_21, %c0_22] : memref<4x8x1xf32, #tpu.memory_space<vmem>>, vector<1x8x1xf32>
      %37 = vector.shape_cast %36 : vector<1x8x1xf32> to vector<8x1xf32>
      %cst_23 = arith.constant dense<0xFF800000> : vector<8xf32>
      %38 = vector.multi_reduction <maximumf>, %35, %cst_23 [1] : vector<8x8xf32> to vector<8xf32>
      %39 = vector.shape_cast %38 : vector<8xf32> to vector<8x1xf32>
      %40 = arith.maximumf %37, %39 : vector<8x1xf32>
      %41 = arith.subf %37, %40 : vector<8x1xf32>
      %42 = math.exp %41 : vector<8x1xf32>
      %43 = vector.broadcast %40 : vector<8x1xf32> to vector<8x8xf32>
      %44 = arith.subf %35, %43 : vector<8x8xf32>
      %45 = math.exp %44 : vector<8x8xf32>
      %c0_24 = arith.constant 0 : index
      %c0_25 = arith.constant 0 : index
      %c0_26 = arith.constant 0 : index
      %46 = vector.load %arg8[%c0_24, %c0_25, %c0_26] : memref<4x8x1xf32, #tpu.memory_space<vmem>>, vector<1x8x1xf32>
      %47 = vector.shape_cast %46 : vector<1x8x1xf32> to vector<8x1xf32>
      %48 = arith.mulf %42, %47 : vector<8x1xf32>
      %cst_27 = arith.constant dense<0.000000e+00> : vector<8xf32>
      %49 = vector.multi_reduction <add>, %45, %cst_27 [1] : vector<8x8xf32> to vector<8xf32>
      %50 = vector.shape_cast %49 : vector<8xf32> to vector<8x1xf32>
      %51 = arith.addf %48, %50 : vector<8x1xf32>
      %c0_28 = arith.constant 0 : index
      %c0_29 = arith.constant 0 : index
      %c0_30 = arith.constant 0 : index
      %52 = vector.load %arg8[%c0_28, %c0_29, %c0_30] : memref<4x8x1xf32, #tpu.memory_space<vmem>>, vector<1x8x1xf32>
      %53 = vector.shape_cast %52 : vector<1x8x1xf32> to vector<8x1xf32>
      %54 = vector.shape_cast %51 : vector<8x1xf32> to vector<1x8x1xf32>
      tpu.vector_store %arg8[%c0_28, %c0_29, %c0_30], %54 {strides = array<i32>} : memref<4x8x1xf32, #tpu.memory_space<vmem>>, vector<1x8x1xf32>,
      %c0_31 = arith.constant 0 : index
      %c0_32 = arith.constant 0 : index
      %c0_33 = arith.constant 0 : index
      %55 = vector.load %arg9[%c0_31, %c0_32, %c0_33] : memref<4x8x8xf32, #tpu.memory_space<vmem>>, vector<1x8x8xf32>
      %56 = vector.shape_cast %55 : vector<1x8x8xf32> to vector<8x8xf32>
      %57 = vector.broadcast %42 : vector<8x1xf32> to vector<8x8xf32>
      %58 = arith.mulf %57, %56 : vector<8x8xf32>
      %59 = vector.extract_strided_slice %19 {offsets = [0, 0, 0], sizes = [8, 1, 8], strides = [1, 1, 1]} : vector<8x4x8xf32> to vector<8x1x8xf32>
      %60 = vector.shape_cast %59 : vector<8x1x8xf32> to vector<8x8xf32>
      %cst_34 = arith.constant dense<0.000000e+00> : vector<8x8xf32>
      %61 = tpu.matmul %45, %60, %cst_34 {dimension_numbers = #tpu.dot_dimension_numbers<[1], [0], [0], [1], [0, 0, 1, 1], [], []>} : vector<8x8xf32>, vector<8x8xf32>, vector<8x8xf32> -> vector<8x8xf32>
      %62 = arith.addf %58, %61 : vector<8x8xf32>
      %c0_35 = arith.constant 0 : index
      %c0_36 = arith.constant 0 : index
      %c0_37 = arith.constant 0 : index
      %63 = vector.load %arg9[%c0_35, %c0_36, %c0_37] : memref<4x8x8xf32, #tpu.memory_space<vmem>>, vector<1x8x8xf32>
      %64 = vector.shape_cast %63 : vector<1x8x8xf32> to vector<8x8xf32>
      %65 = vector.shape_cast %62 : vector<8x8xf32> to vector<1x8x8xf32>
      tpu.vector_store %arg9[%c0_35, %c0_36, %c0_37], %65 {strides = array<i32>} : memref<4x8x8xf32, #tpu.memory_space<vmem>>, vector<1x8x8xf32>,
      %c0_38 = arith.constant 0 : index
      %c0_39 = arith.constant 0 : index
      %c0_40 = arith.constant 0 : index
      %66 = vector.load %arg7[%c0_38, %c0_39, %c0_40] : memref<4x8x1xf32, #tpu.memory_space<vmem>>, vector<1x8x1xf32>
      %67 = vector.shape_cast %66 : vector<1x8x1xf32> to vector<8x1xf32>
      %68 = vector.shape_cast %40 : vector<8x1xf32> to vector<1x8x1xf32>
      tpu.vector_store %arg7[%c0_38, %c0_39, %c0_40], %68 {strides = array<i32>} : memref<4x8x1xf32, #tpu.memory_space<vmem>>, vector<1x8x1xf32>,
      %69 = vector.extract_strided_slice %15 {offsets = [0, 1, 0], sizes = [8, 1, 8], strides = [1, 1, 1]} : vector<8x4x8xf32> to vector<8x1x8xf32>
      %70 = vector.shape_cast %69 : vector<8x1x8xf32> to vector<8x8xf32>
      %71 = vector.extract_strided_slice %17 {offsets = [0, 1, 0], sizes = [8, 1, 8], strides = [1, 1, 1]} : vector<8x4x8xf32> to vector<8x1x8xf32>
      %72 = vector.shape_cast %71 : vector<8x1x8xf32> to vector<8x8xf32>
      %cst_41 = arith.constant dense<0.000000e+00> : vector<8x8xf32>
      %73 = tpu.matmul %70, %72, %cst_41 {dimension_numbers = #tpu.dot_dimension_numbers<[1], [1], [0], [0], [0, 0, 1, 0], [], []>} : vector<8x8xf32>, vector<8x8xf32>, vector<8x8xf32> -> vector<8x8xf32>
      %cst_42 = arith.constant -1.000000e+30 : f32
      %74 = vector.broadcast %cst_42 : f32 to vector<8x8xf32>
      %75 = arith.select %28, %73, %74 : vector<8x8xi1>, vector<8x8xf32>
      %c1 = arith.constant 1 : index
      %c0_43 = arith.constant 0 : index
      %c0_44 = arith.constant 0 : index
      %76 = vector.load %arg7[%c1, %c0_43, %c0_44] : memref<4x8x1xf32, #tpu.memory_space<vmem>>, vector<1x8x1xf32>
      %77 = vector.shape_cast %76 : vector<1x8x1xf32> to vector<8x1xf32>
      %cst_45 = arith.constant dense<0xFF800000> : vector<8xf32>
      %78 = vector.multi_reduction <maximumf>, %75, %cst_45 [1] : vector<8x8xf32> to vector<8xf32>
      %79 = vector.shape_cast %78 : vector<8xf32> to vector<8x1xf32>
      %80 = arith.maximumf %77, %79 : vector<8x1xf32>
      %81 = arith.subf %77, %80 : vector<8x1xf32>
      %82 = math.exp %81 : vector<8x1xf32>
      %83 = vector.broadcast %80 : vector<8x1xf32> to vector<8x8xf32>
      %84 = arith.subf %75, %83 : vector<8x8xf32>
      %85 = math.exp %84 : vector<8x8xf32>
      %c1_46 = arith.constant 1 : index
      %c0_47 = arith.constant 0 : index
      %c0_48 = arith.constant 0 : index
      %86 = vector.load %arg8[%c1_46, %c0_47, %c0_48] : memref<4x8x1xf32, #tpu.memory_space<vmem>>, vector<1x8x1xf32>
      %87 = vector.shape_cast %86 : vector<1x8x1xf32> to vector<8x1xf32>
      %88 = arith.mulf %82, %87 : vector<8x1xf32>
      %cst_49 = arith.constant dense<0.000000e+00> : vector<8xf32>
      %89 = vector.multi_reduction <add>, %85, %cst_49 [1] : vector<8x8xf32> to vector<8xf32>
      %90 = vector.shape_cast %89 : vector<8xf32> to vector<8x1xf32>
      %91 = arith.addf %88, %90 : vector<8x1xf32>
      %c1_50 = arith.constant 1 : index
      %c0_51 = arith.constant 0 : index
      %c0_52 = arith.constant 0 : index
      %92 = vector.load %arg8[%c1_50, %c0_51, %c0_52] : memref<4x8x1xf32, #tpu.memory_space<vmem>>, vector<1x8x1xf32>
      %93 = vector.shape_cast %92 : vector<1x8x1xf32> to vector<8x1xf32>
      %94 = vector.shape_cast %91 : vector<8x1xf32> to vector<1x8x1xf32>
      tpu.vector_store %arg8[%c1_50, %c0_51, %c0_52], %94 {strides = array<i32>} : memref<4x8x1xf32, #tpu.memory_space<vmem>>, vector<1x8x1xf32>,
      %c1_53 = arith.constant 1 : index
      %c0_54 = arith.constant 0 : index
      %c0_55 = arith.constant 0 : index
      %95 = vector.load %arg9[%c1_53, %c0_54, %c0_55] : memref<4x8x8xf32, #tpu.memory_space<vmem>>, vector<1x8x8xf32>
      %96 = vector.shape_cast %95 : vector<1x8x8xf32> to vector<8x8xf32>
      %97 = vector.broadcast %82 : vector<8x1xf32> to vector<8x8xf32>
      %98 = arith.mulf %97, %96 : vector<8x8xf32>
      %99 = vector.extract_strided_slice %19 {offsets = [0, 1, 0], sizes = [8, 1, 8], strides = [1, 1, 1]} : vector<8x4x8xf32> to vector<8x1x8xf32>
      %100 = vector.shape_cast %99 : vector<8x1x8xf32> to vector<8x8xf32>
      %cst_56 = arith.constant dense<0.000000e+00> : vector<8x8xf32>
      %101 = tpu.matmul %85, %100, %cst_56 {dimension_numbers = #tpu.dot_dimension_numbers<[1], [0], [0], [1], [0, 0, 1, 1], [], []>} : vector<8x8xf32>, vector<8x8xf32>, vector<8x8xf32> -> vector<8x8xf32>
      %102 = arith.addf %98, %101 : vector<8x8xf32>
      %c1_57 = arith.constant 1 : index
      %c0_58 = arith.constant 0 : index
      %c0_59 = arith.constant 0 : index
      %103 = vector.load %arg9[%c1_57, %c0_58, %c0_59] : memref<4x8x8xf32, #tpu.memory_space<vmem>>, vector<1x8x8xf32>
      %104 = vector.shape_cast %103 : vector<1x8x8xf32> to vector<8x8xf32>
      %105 = vector.shape_cast %102 : vector<8x8xf32> to vector<1x8x8xf32>
      tpu.vector_store %arg9[%c1_57, %c0_58, %c0_59], %105 {strides = array<i32>} : memref<4x8x8xf32, #tpu.memory_space<vmem>>, vector<1x8x8xf32>,
      %c1_60 = arith.constant 1 : index
      %c0_61 = arith.constant 0 : index
      %c0_62 = arith.constant 0 : index
      %106 = vector.load %arg7[%c1_60, %c0_61, %c0_62] : memref<4x8x1xf32, #tpu.memory_space<vmem>>, vector<1x8x1xf32>
      %107 = vector.shape_cast %106 : vector<1x8x1xf32> to vector<8x1xf32>
      %108 = vector.shape_cast %80 : vector<8x1xf32> to vector<1x8x1xf32>
      tpu.vector_store %arg7[%c1_60, %c0_61, %c0_62], %108 {strides = array<i32>} : memref<4x8x1xf32, #tpu.memory_space<vmem>>, vector<1x8x1xf32>,
      %109 = vector.extract_strided_slice %15 {offsets = [0, 2, 0], sizes = [8, 1, 8], strides = [1, 1, 1]} : vector<8x4x8xf32> to vector<8x1x8xf32>
      %110 = vector.shape_cast %109 : vector<8x1x8xf32> to vector<8x8xf32>
      %111 = vector.extract_strided_slice %17 {offsets = [0, 2, 0], sizes = [8, 1, 8], strides = [1, 1, 1]} : vector<8x4x8xf32> to vector<8x1x8xf32>
      %112 = vector.shape_cast %111 : vector<8x1x8xf32> to vector<8x8xf32>
      %cst_63 = arith.constant dense<0.000000e+00> : vector<8x8xf32>
      %113 = tpu.matmul %110, %112, %cst_63 {dimension_numbers = #tpu.dot_dimension_numbers<[1], [1], [0], [0], [0, 0, 1, 0], [], []>} : vector<8x8xf32>, vector<8x8xf32>, vector<8x8xf32> -> vector<8x8xf32>
      %cst_64 = arith.constant -1.000000e+30 : f32
      %114 = vector.broadcast %cst_64 : f32 to vector<8x8xf32>
      %115 = arith.select %28, %113, %114 : vector<8x8xi1>, vector<8x8xf32>
      %c2 = arith.constant 2 : index
      %c0_65 = arith.constant 0 : index
      %c0_66 = arith.constant 0 : index
      %116 = vector.load %arg7[%c2, %c0_65, %c0_66] : memref<4x8x1xf32, #tpu.memory_space<vmem>>, vector<1x8x1xf32>
      %117 = vector.shape_cast %116 : vector<1x8x1xf32> to vector<8x1xf32>
      %cst_67 = arith.constant dense<0xFF800000> : vector<8xf32>
      %118 = vector.multi_reduction <maximumf>, %115, %cst_67 [1] : vector<8x8xf32> to vector<8xf32>
      %119 = vector.shape_cast %118 : vector<8xf32> to vector<8x1xf32>
      %120 = arith.maximumf %117, %119 : vector<8x1xf32>
      %121 = arith.subf %117, %120 : vector<8x1xf32>
      %122 = math.exp %121 : vector<8x1xf32>
      %123 = vector.broadcast %120 : vector<8x1xf32> to vector<8x8xf32>
      %124 = arith.subf %115, %123 : vector<8x8xf32>
      %125 = math.exp %124 : vector<8x8xf32>
      %c2_68 = arith.constant 2 : index
      %c0_69 = arith.constant 0 : index
      %c0_70 = arith.constant 0 : index
      %126 = vector.load %arg8[%c2_68, %c0_69, %c0_70] : memref<4x8x1xf32, #tpu.memory_space<vmem>>, vector<1x8x1xf32>
      %127 = vector.shape_cast %126 : vector<1x8x1xf32> to vector<8x1xf32>
      %128 = arith.mulf %122, %127 : vector<8x1xf32>
      %cst_71 = arith.constant dense<0.000000e+00> : vector<8xf32>
      %129 = vector.multi_reduction <add>, %125, %cst_71 [1] : vector<8x8xf32> to vector<8xf32>
      %130 = vector.shape_cast %129 : vector<8xf32> to vector<8x1xf32>
      %131 = arith.addf %128, %130 : vector<8x1xf32>
      %c2_72 = arith.constant 2 : index
      %c0_73 = arith.constant 0 : index
      %c0_74 = arith.constant 0 : index
      %132 = vector.load %arg8[%c2_72, %c0_73, %c0_74] : memref<4x8x1xf32, #tpu.memory_space<vmem>>, vector<1x8x1xf32>
      %133 = vector.shape_cast %132 : vector<1x8x1xf32> to vector<8x1xf32>
      %134 = vector.shape_cast %131 : vector<8x1xf32> to vector<1x8x1xf32>
      tpu.vector_store %arg8[%c2_72, %c0_73, %c0_74], %134 {strides = array<i32>} : memref<4x8x1xf32, #tpu.memory_space<vmem>>, vector<1x8x1xf32>,
      %c2_75 = arith.constant 2 : index
      %c0_76 = arith.constant 0 : index
      %c0_77 = arith.constant 0 : index
      %135 = vector.load %arg9[%c2_75, %c0_76, %c0_77] : memref<4x8x8xf32, #tpu.memory_space<vmem>>, vector<1x8x8xf32>
      %136 = vector.shape_cast %135 : vector<1x8x8xf32> to vector<8x8xf32>
      %137 = vector.broadcast %122 : vector<8x1xf32> to vector<8x8xf32>
      %138 = arith.mulf %137, %136 : vector<8x8xf32>
      %139 = vector.extract_strided_slice %19 {offsets = [0, 2, 0], sizes = [8, 1, 8], strides = [1, 1, 1]} : vector<8x4x8xf32> to vector<8x1x8xf32>
      %140 = vector.shape_cast %139 : vector<8x1x8xf32> to vector<8x8xf32>
      %cst_78 = arith.constant dense<0.000000e+00> : vector<8x8xf32>
      %141 = tpu.matmul %125, %140, %cst_78 {dimension_numbers = #tpu.dot_dimension_numbers<[1], [0], [0], [1], [0, 0, 1, 1], [], []>} : vector<8x8xf32>, vector<8x8xf32>, vector<8x8xf32> -> vector<8x8xf32>
      %142 = arith.addf %138, %141 : vector<8x8xf32>
      %c2_79 = arith.constant 2 : index
      %c0_80 = arith.constant 0 : index
      %c0_81 = arith.constant 0 : index
      %143 = vector.load %arg9[%c2_79, %c0_80, %c0_81] : memref<4x8x8xf32, #tpu.memory_space<vmem>>, vector<1x8x8xf32>
      %144 = vector.shape_cast %143 : vector<1x8x8xf32> to vector<8x8xf32>
      %145 = vector.shape_cast %142 : vector<8x8xf32> to vector<1x8x8xf32>
      tpu.vector_store %arg9[%c2_79, %c0_80, %c0_81], %145 {strides = array<i32>} : memref<4x8x8xf32, #tpu.memory_space<vmem>>, vector<1x8x8xf32>,
      %c2_82 = arith.constant 2 : index
      %c0_83 = arith.constant 0 : index
      %c0_84 = arith.constant 0 : index
      %146 = vector.load %arg7[%c2_82, %c0_83, %c0_84] : memref<4x8x1xf32, #tpu.memory_space<vmem>>, vector<1x8x1xf32>
      %147 = vector.shape_cast %146 : vector<1x8x1xf32> to vector<8x1xf32>
      %148 = vector.shape_cast %120 : vector<8x1xf32> to vector<1x8x1xf32>
      tpu.vector_store %arg7[%c2_82, %c0_83, %c0_84], %148 {strides = array<i32>} : memref<4x8x1xf32, #tpu.memory_space<vmem>>, vector<1x8x1xf32>,
      %149 = vector.extract_strided_slice %15 {offsets = [0, 3, 0], sizes = [8, 1, 8], strides = [1, 1, 1]} : vector<8x4x8xf32> to vector<8x1x8xf32>
      %150 = vector.shape_cast %149 : vector<8x1x8xf32> to vector<8x8xf32>
      %151 = vector.extract_strided_slice %17 {offsets = [0, 3, 0], sizes = [8, 1, 8], strides = [1, 1, 1]} : vector<8x4x8xf32> to vector<8x1x8xf32>
      %152 = vector.shape_cast %151 : vector<8x1x8xf32> to vector<8x8xf32>
      %cst_85 = arith.constant dense<0.000000e+00> : vector<8x8xf32>
      %153 = tpu.matmul %150, %152, %cst_85 {dimension_numbers = #tpu.dot_dimension_numbers<[1], [1], [0], [0], [0, 0, 1, 0], [], []>} : vector<8x8xf32>, vector<8x8xf32>, vector<8x8xf32> -> vector<8x8xf32>
      %cst_86 = arith.constant -1.000000e+30 : f32
      %154 = vector.broadcast %cst_86 : f32 to vector<8x8xf32>
      %155 = arith.select %28, %153, %154 : vector<8x8xi1>, vector<8x8xf32>
      %c3 = arith.constant 3 : index
      %c0_87 = arith.constant 0 : index
      %c0_88 = arith.constant 0 : index
      %156 = vector.load %arg7[%c3, %c0_87, %c0_88] : memref<4x8x1xf32, #tpu.memory_space<vmem>>, vector<1x8x1xf32>
      %157 = vector.shape_cast %156 : vector<1x8x1xf32> to vector<8x1xf32>
      %cst_89 = arith.constant dense<0xFF800000> : vector<8xf32>
      %158 = vector.multi_reduction <maximumf>, %155, %cst_89 [1] : vector<8x8xf32> to vector<8xf32>
      %159 = vector.shape_cast %158 : vector<8xf32> to vector<8x1xf32>
      %160 = arith.maximumf %157, %159 : vector<8x1xf32>
      %161 = arith.subf %157, %160 : vector<8x1xf32>
      %162 = math.exp %161 : vector<8x1xf32>
      %163 = vector.broadcast %160 : vector<8x1xf32> to vector<8x8xf32>
      %164 = arith.subf %155, %163 : vector<8x8xf32>
      %165 = math.exp %164 : vector<8x8xf32>
      %c3_90 = arith.constant 3 : index
      %c0_91 = arith.constant 0 : index
      %c0_92 = arith.constant 0 : index
      %166 = vector.load %arg8[%c3_90, %c0_91, %c0_92] : memref<4x8x1xf32, #tpu.memory_space<vmem>>, vector<1x8x1xf32>
      %167 = vector.shape_cast %166 : vector<1x8x1xf32> to vector<8x1xf32>
      %168 = arith.mulf %162, %167 : vector<8x1xf32>
      %cst_93 = arith.constant dense<0.000000e+00> : vector<8xf32>
      %169 = vector.multi_reduction <add>, %165, %cst_93 [1] : vector<8x8xf32> to vector<8xf32>
      %170 = vector.shape_cast %169 : vector<8xf32> to vector<8x1xf32>
      %171 = arith.addf %168, %170 : vector<8x1xf32>
      %c3_94 = arith.constant 3 : index
      %c0_95 = arith.constant 0 : index
      %c0_96 = arith.constant 0 : index
      %172 = vector.load %arg8[%c3_94, %c0_95, %c0_96] : memref<4x8x1xf32, #tpu.memory_space<vmem>>, vector<1x8x1xf32>
      %173 = vector.shape_cast %172 : vector<1x8x1xf32> to vector<8x1xf32>
      %174 = vector.shape_cast %171 : vector<8x1xf32> to vector<1x8x1xf32>
      tpu.vector_store %arg8[%c3_94, %c0_95, %c0_96], %174 {strides = array<i32>} : memref<4x8x1xf32, #tpu.memory_space<vmem>>, vector<1x8x1xf32>,
      %c3_97 = arith.constant 3 : index
      %c0_98 = arith.constant 0 : index
      %c0_99 = arith.constant 0 : index
      %175 = vector.load %arg9[%c3_97, %c0_98, %c0_99] : memref<4x8x8xf32, #tpu.memory_space<vmem>>, vector<1x8x8xf32>
      %176 = vector.shape_cast %175 : vector<1x8x8xf32> to vector<8x8xf32>
      %177 = vector.broadcast %162 : vector<8x1xf32> to vector<8x8xf32>
      %178 = arith.mulf %177, %176 : vector<8x8xf32>
      %179 = vector.extract_strided_slice %19 {offsets = [0, 3, 0], sizes = [8, 1, 8], strides = [1, 1, 1]} : vector<8x4x8xf32> to vector<8x1x8xf32>
      %180 = vector.shape_cast %179 : vector<8x1x8xf32> to vector<8x8xf32>
      %cst_100 = arith.constant dense<0.000000e+00> : vector<8x8xf32>
      %181 = tpu.matmul %165, %180, %cst_100 {dimension_numbers = #tpu.dot_dimension_numbers<[1], [0], [0], [1], [0, 0, 1, 1], [], []>} : vector<8x8xf32>, vector<8x8xf32>, vector<8x8xf32> -> vector<8x8xf32>
      %182 = arith.addf %178, %181 : vector<8x8xf32>
      %c3_101 = arith.constant 3 : index
      %c0_102 = arith.constant 0 : index
      %c0_103 = arith.constant 0 : index
      %183 = vector.load %arg9[%c3_101, %c0_102, %c0_103] : memref<4x8x8xf32, #tpu.memory_space<vmem>>, vector<1x8x8xf32>
      %184 = vector.shape_cast %183 : vector<1x8x8xf32> to vector<8x8xf32>
      %185 = vector.shape_cast %182 : vector<8x8xf32> to vector<1x8x8xf32>
      tpu.vector_store %arg9[%c3_101, %c0_102, %c0_103], %185 {strides = array<i32>} : memref<4x8x8xf32, #tpu.memory_space<vmem>>, vector<1x8x8xf32>,
      %c3_104 = arith.constant 3 : index
      %c0_105 = arith.constant 0 : index
      %c0_106 = arith.constant 0 : index
      %186 = vector.load %arg7[%c3_104, %c0_105, %c0_106] : memref<4x8x1xf32, #tpu.memory_space<vmem>>, vector<1x8x1xf32>
      %187 = vector.shape_cast %186 : vector<1x8x1xf32> to vector<8x1xf32>
      %188 = vector.shape_cast %160 : vector<8x1xf32> to vector<1x8x1xf32>
      tpu.vector_store %arg7[%c3_104, %c0_105, %c0_106], %188 {strides = array<i32>} : memref<4x8x1xf32, #tpu.memory_space<vmem>>, vector<1x8x1xf32>,
    } else {
    }
    %c0_i32_3 = arith.constant 0 : i32
    %9 = arith.cmpi eq, %arg2, %c0_i32_3 : i32
    %10 = arith.extui %9 : i1 to i32
    %c0_i32_4 = arith.constant 0 : i32
    %11 = arith.cmpi ne, %10, %c0_i32_4 : i32
    scf.if %11 {
      %c0 = arith.constant 0 : index
      %c0_5 = arith.constant 0 : index
      %c0_6 = arith.constant 0 : index
      %12 = vector.load %arg8[%c0, %c0_5, %c0_6] : memref<4x8x1xf32, #tpu.memory_space<vmem>>, vector<1x8x1xf32>
      %13 = vector.shape_cast %12 : vector<1x8x1xf32> to vector<8x1xf32>
      %14 = tpu.reciprocal %13 {approx = true} : vector<8x1xf32> -> vector<8x1xf32>
      %c0_7 = arith.constant 0 : index
      %c0_8 = arith.constant 0 : index
      %c0_9 = arith.constant 0 : index
      %15 = vector.load %arg9[%c0_7, %c0_8, %c0_9] : memref<4x8x8xf32, #tpu.memory_space<vmem>>, vector<1x8x8xf32>
      %16 = vector.shape_cast %15 : vector<1x8x8xf32> to vector<8x8xf32>
      %17 = vector.broadcast %14 : vector<8x1xf32> to vector<8x8xf32>
      %18 = arith.mulf %16, %17 : vector<8x8xf32>
      %c0_10 = arith.constant 0 : index
      %c0_11 = arith.constant 0 : index
      %c0_12 = arith.constant 0 : index
      %c0_13 = arith.constant 0 : index
      %19 = vector.load %arg6[%c0_10, %c0_11, %c0_12, %c0_13] : memref<1x8x4x8xf32, #tpu.memory_space<vmem>>, vector<1x8x1x8xf32>
      %20 = vector.shape_cast %19 : vector<1x8x1x8xf32> to vector<8x8xf32>
      %21 = vector.shape_cast %18 : vector<8x8xf32> to vector<1x8x1x8xf32>
      tpu.vector_store %arg6[%c0_10, %c0_11, %c0_12, %c0_13], %21 {strides = array<i32>} : memref<1x8x4x8xf32, #tpu.memory_space<vmem>>, vector<1x8x1x8xf32>,
      %c1 = arith.constant 1 : index
      %c0_14 = arith.constant 0 : index
      %c0_15 = arith.constant 0 : index
      %22 = vector.load %arg8[%c1, %c0_14, %c0_15] : memref<4x8x1xf32, #tpu.memory_space<vmem>>, vector<1x8x1xf32>
      %23 = vector.shape_cast %22 : vector<1x8x1xf32> to vector<8x1xf32>
      %24 = tpu.reciprocal %23 {approx = true} : vector<8x1xf32> -> vector<8x1xf32>
      %c1_16 = arith.constant 1 : index
      %c0_17 = arith.constant 0 : index
      %c0_18 = arith.constant 0 : index
      %25 = vector.load %arg9[%c1_16, %c0_17, %c0_18] : memref<4x8x8xf32, #tpu.memory_space<vmem>>, vector<1x8x8xf32>
      %26 = vector.shape_cast %25 : vector<1x8x8xf32> to vector<8x8xf32>
      %27 = vector.broadcast %24 : vector<8x1xf32> to vector<8x8xf32>
      %28 = arith.mulf %26, %27 : vector<8x8xf32>
      %c0_19 = arith.constant 0 : index
      %c0_20 = arith.constant 0 : index
      %c1_21 = arith.constant 1 : index
      %c0_22 = arith.constant 0 : index
      %29 = vector.load %arg6[%c0_19, %c0_20, %c1_21, %c0_22] : memref<1x8x4x8xf32, #tpu.memory_space<vmem>>, vector<1x8x1x8xf32>
      %30 = vector.shape_cast %29 : vector<1x8x1x8xf32> to vector<8x8xf32>
      %31 = vector.shape_cast %28 : vector<8x8xf32> to vector<1x8x1x8xf32>
      tpu.vector_store %arg6[%c0_19, %c0_20, %c1_21, %c0_22], %31 {strides = array<i32>} : memref<1x8x4x8xf32, #tpu.memory_space<vmem>>, vector<1x8x1x8xf32>,
      %c2 = arith.constant 2 : index
      %c0_23 = arith.constant 0 : index
      %c0_24 = arith.constant 0 : index
      %32 = vector.load %arg8[%c2, %c0_23, %c0_24] : memref<4x8x1xf32, #tpu.memory_space<vmem>>, vector<1x8x1xf32>
      %33 = vector.shape_cast %32 : vector<1x8x1xf32> to vector<8x1xf32>
      %34 = tpu.reciprocal %33 {approx = true} : vector<8x1xf32> -> vector<8x1xf32>
      %c2_25 = arith.constant 2 : index
      %c0_26 = arith.constant 0 : index
      %c0_27 = arith.constant 0 : index
      %35 = vector.load %arg9[%c2_25, %c0_26, %c0_27] : memref<4x8x8xf32, #tpu.memory_space<vmem>>, vector<1x8x8xf32>
      %36 = vector.shape_cast %35 : vector<1x8x8xf32> to vector<8x8xf32>
      %37 = vector.broadcast %34 : vector<8x1xf32> to vector<8x8xf32>
      %38 = arith.mulf %36, %37 : vector<8x8xf32>
      %c0_28 = arith.constant 0 : index
      %c0_29 = arith.constant 0 : index
      %c2_30 = arith.constant 2 : index
      %c0_31 = arith.constant 0 : index
      %39 = vector.load %arg6[%c0_28, %c0_29, %c2_30, %c0_31] : memref<1x8x4x8xf32, #tpu.memory_space<vmem>>, vector<1x8x1x8xf32>
      %40 = vector.shape_cast %39 : vector<1x8x1x8xf32> to vector<8x8xf32>
      %41 = vector.shape_cast %38 : vector<8x8xf32> to vector<1x8x1x8xf32>
      tpu.vector_store %arg6[%c0_28, %c0_29, %c2_30, %c0_31], %41 {strides = array<i32>} : memref<1x8x4x8xf32, #tpu.memory_space<vmem>>, vector<1x8x1x8xf32>,
      %c3 = arith.constant 3 : index
      %c0_32 = arith.constant 0 : index
      %c0_33 = arith.constant 0 : index
      %42 = vector.load %arg8[%c3, %c0_32, %c0_33] : memref<4x8x1xf32, #tpu.memory_space<vmem>>, vector<1x8x1xf32>
      %43 = vector.shape_cast %42 : vector<1x8x1xf32> to vector<8x1xf32>
      %44 = tpu.reciprocal %43 {approx = true} : vector<8x1xf32> -> vector<8x1xf32>
      %c3_34 = arith.constant 3 : index
      %c0_35 = arith.constant 0 : index
      %c0_36 = arith.constant 0 : index
      %45 = vector.load %arg9[%c3_34, %c0_35, %c0_36] : memref<4x8x8xf32, #tpu.memory_space<vmem>>, vector<1x8x8xf32>
      %46 = vector.shape_cast %45 : vector<1x8x8xf32> to vector<8x8xf32>
      %47 = vector.broadcast %44 : vector<8x1xf32> to vector<8x8xf32>
      %48 = arith.mulf %46, %47 : vector<8x8xf32>
      %c0_37 = arith.constant 0 : index
      %c0_38 = arith.constant 0 : index
      %c3_39 = arith.constant 3 : index
      %c0_40 = arith.constant 0 : index
      %49 = vector.load %arg6[%c0_37, %c0_38, %c3_39, %c0_40] : memref<1x8x4x8xf32, #tpu.memory_space<vmem>>, vector<1x8x1x8xf32>
      %50 = vector.shape_cast %49 : vector<1x8x1x8xf32> to vector<8x8xf32>
      %51 = vector.shape_cast %48 : vector<8x8xf32> to vector<1x8x1x8xf32>
      tpu.vector_store %arg6[%c0_37, %c0_38, %c3_39, %c0_40], %51 {strides = array<i32>} : memref<1x8x4x8xf32, #tpu.memory_space<vmem>>, vector<1x8x1x8xf32>,
    } else {
    }
    return
  }
  func.func @transform_0(%arg0: i32, %arg1: i32, %arg2: i32) -> (i32, i32, i32, i32) {
    %c0_i32 = arith.constant 0 : i32
    %c0_i32_0 = arith.constant 0 : i32
    %c0_i32_1 = arith.constant 0 : i32
    return %arg0, %arg1, %c0_i32, %c0_i32_0 : i32, i32, i32, i32
  }
  func.func @transform_1(%arg0: i32, %arg1: i32, %arg2: i32) -> (i32, i32, i32, i32) {
    %c0_i32 = arith.constant 0 : i32
    %c0_i32_0 = arith.constant 0 : i32
    %c0_i32_1 = arith.constant 0 : i32
    return %arg0, %arg2, %c0_i32, %c0_i32_0 : i32, i32, i32, i32
  }
  func.func @transform_2(%arg0: i32, %arg1: i32, %arg2: i32) -> (i32, i32, i32, i32) {
    %c0_i32 = arith.constant 0 : i32
    %c0_i32_0 = arith.constant 0 : i32
    %c0_i32_1 = arith.constant 0 : i32
    return %arg0, %arg2, %c0_i32, %c0_i32_0 : i32, i32, i32, i32
  }
  func.func @transform_3(%arg0: i32, %arg1: i32, %arg2: i32) -> (i32, i32, i32, i32) {
    %c0_i32 = arith.constant 0 : i32
    %c0_i32_0 = arith.constant 0 : i32
    %c0_i32_1 = arith.constant 0 : i32
    return %arg0, %arg1, %c0_i32, %c0_i32_0 : i32, i32, i32, i32
  }
}

module attributes {stable_mosaic.version = 11 : i64} {
  func.func @_linear_kernel(%arg0: i32, %arg1: i32, %arg2: i32, %arg3: memref<16x32xf32, #tpu.memory_space<vmem>>, %arg4: memref<32x128xf32, #tpu.memory_space<vmem>>, %arg5: memref<1x128xf32, #tpu.memory_space<vmem>>, %arg6: memref<16x128xf32, #tpu.memory_space<vmem>>, %arg7: memref<16x128xf32, #tpu.memory_space<vmem>>) attributes {dimension_semantics = [#tpu.dimension_semantics<parallel>, #tpu.dimension_semantics<parallel>, #tpu.dimension_semantics<arbitrary>], iteration_bounds = array<i64: 1, 1, 1>, scalar_prefetch = 0 : i64, scratch_operands = 1 : i64, tpu.core_type = #tpu.core_type<tc>, window_params = [{transform_indices = @transform_0, window_bounds = array<i64: 16, 32>}, {transform_indices = @transform_1, window_bounds = array<i64: 32, 128>}, {transform_indices = @transform_2, window_bounds = array<i64: 1, 128>}, {transform_indices = @transform_3, window_bounds = array<i64: 16, 128>}]} {
    %c0_i32 = arith.constant 0 : i32
    %0 = arith.cmpi eq, %arg2, %c0_i32 : i32
    %1 = arith.extui %0 : i1 to i32
    %c0_i32_0 = arith.constant 0 : i32
    %2 = arith.cmpi ne, %1, %c0_i32_0 : i32
    scf.if %2 {
      %cst_10 = arith.constant 0.000000e+00 : f32
      %12 = vector.broadcast %cst_10 : f32 to vector<16x128xf32>
      %c0_11 = arith.constant 0 : index
      %c0_12 = arith.constant 0 : index
      %13 = vector.load %arg7[%c0_11, %c0_12] : memref<16x128xf32, #tpu.memory_space<vmem>>, vector<16x128xf32>
      tpu.vector_store %arg7[%c0_11, %c0_12], %12 {strides = array<i32>} : memref<16x128xf32, #tpu.memory_space<vmem>>, vector<16x128xf32>,
    } else {
    }
    %c0 = arith.constant 0 : index
    %c0_1 = arith.constant 0 : index
    %3 = vector.load %arg3[%c0, %c0_1] : memref<16x32xf32, #tpu.memory_space<vmem>>, vector<16x32xf32>
    %c0_2 = arith.constant 0 : index
    %c0_3 = arith.constant 0 : index
    %4 = vector.load %arg4[%c0_2, %c0_3] : memref<32x128xf32, #tpu.memory_space<vmem>>, vector<32x128xf32>
    %c0_4 = arith.constant 0 : index
    %c0_5 = arith.constant 0 : index
    %5 = vector.load %arg7[%c0_4, %c0_5] : memref<16x128xf32, #tpu.memory_space<vmem>>, vector<16x128xf32>
    %cst = arith.constant dense<0.000000e+00> : vector<16x128xf32>
    %6 = tpu.matmul %3, %4, %cst {dimension_numbers = #tpu.dot_dimension_numbers<[1], [0], [0], [1], [0, 0, 1, 1], [], []>} : vector<16x32xf32>, vector<32x128xf32>, vector<16x128xf32> -> vector<16x128xf32>
    %7 = arith.addf %5, %6 : vector<16x128xf32>
    %c0_6 = arith.constant 0 : index
    %c0_7 = arith.constant 0 : index
    %8 = vector.load %arg7[%c0_6, %c0_7] : memref<16x128xf32, #tpu.memory_space<vmem>>, vector<16x128xf32>
    tpu.vector_store %arg7[%c0_6, %c0_7], %7 {strides = array<i32>} : memref<16x128xf32, #tpu.memory_space<vmem>>, vector<16x128xf32>,
    %c0_i32_8 = arith.constant 0 : i32
    %9 = arith.cmpi eq, %arg2, %c0_i32_8 : i32
    %10 = arith.extui %9 : i1 to i32
    %c0_i32_9 = arith.constant 0 : i32
    %11 = arith.cmpi ne, %10, %c0_i32_9 : i32
    scf.if %11 {
      %c0_10 = arith.constant 0 : index
      %c0_11 = arith.constant 0 : index
      %12 = vector.load %arg7[%c0_10, %c0_11] : memref<16x128xf32, #tpu.memory_space<vmem>>, vector<16x128xf32>
      %c0_12 = arith.constant 0 : index
      %c0_13 = arith.constant 0 : index
      %13 = vector.load %arg5[%c0_12, %c0_13] : memref<1x128xf32, #tpu.memory_space<vmem>>, vector<1x128xf32>
      %14 = vector.broadcast %13 : vector<1x128xf32> to vector<16x128xf32>
      %15 = arith.addf %12, %14 : vector<16x128xf32>
      %cst_14 = arith.constant 5.000000e-01 : f32
      %16 = vector.broadcast %cst_14 : f32 to vector<16x128xf32>
      %17 = arith.mulf %16, %15 : vector<16x128xf32>
      %cst_15 = arith.constant 4.471500e-02 : f32
      %18 = vector.broadcast %cst_15 : f32 to vector<16x128xf32>
      %19 = arith.mulf %18, %15 : vector<16x128xf32>
      %20 = arith.mulf %19, %15 : vector<16x128xf32>
      %21 = arith.mulf %20, %15 : vector<16x128xf32>
      %22 = arith.addf %15, %21 : vector<16x128xf32>
      %cst_16 = arith.constant 0.797884583 : f32
      %23 = vector.broadcast %cst_16 : f32 to vector<16x128xf32>
      %24 = arith.mulf %23, %22 : vector<16x128xf32>
      %25 = math.tanh %24 : vector<16x128xf32>
      %cst_17 = arith.constant 1.000000e+00 : f32
      %26 = vector.broadcast %cst_17 : f32 to vector<16x128xf32>
      %27 = arith.addf %26, %25 : vector<16x128xf32>
      %28 = arith.mulf %17, %27 : vector<16x128xf32>
      %c0_18 = arith.constant 0 : index
      %c0_19 = arith.constant 0 : index
      %29 = vector.load %arg6[%c0_18, %c0_19] : memref<16x128xf32, #tpu.memory_space<vmem>>, vector<16x128xf32>
      tpu.vector_store %arg6[%c0_18, %c0_19], %28 {strides = array<i32>} : memref<16x128xf32, #tpu.memory_space<vmem>>, vector<16x128xf32>,
    } else {
    }
    return
  }
  func.func @transform_0(%arg0: i32, %arg1: i32, %arg2: i32) -> (i32, i32) {
    %c0_i32 = arith.constant 0 : i32
    return %arg0, %arg2 : i32, i32
  }
  func.func @transform_1(%arg0: i32, %arg1: i32, %arg2: i32) -> (i32, i32) {
    %c0_i32 = arith.constant 0 : i32
    return %arg2, %arg1 : i32, i32
  }
  func.func @transform_2(%arg0: i32, %arg1: i32, %arg2: i32) -> (i32, i32) {
    %c0_i32 = arith.constant 0 : i32
    %c0_i32_0 = arith.constant 0 : i32
    return %c0_i32, %arg1 : i32, i32
  }
  func.func @transform_3(%arg0: i32, %arg1: i32, %arg2: i32) -> (i32, i32) {
    %c0_i32 = arith.constant 0 : i32
    return %arg0, %arg1 : i32, i32
  }
}

module attributes {stable_mosaic.version = 11 : i64} {
  func.func @_linear_kernel(%arg0: i32, %arg1: i32, %arg2: i32, %arg3: memref<16x128xf32, #tpu.memory_space<vmem>>, %arg4: memref<128x32xf32, #tpu.memory_space<vmem>>, %arg5: memref<1x32xf32, #tpu.memory_space<vmem>>, %arg6: memref<16x32xf32, #tpu.memory_space<vmem>>, %arg7: memref<16x32xf32, #tpu.memory_space<vmem>>) attributes {dimension_semantics = [#tpu.dimension_semantics<parallel>, #tpu.dimension_semantics<parallel>, #tpu.dimension_semantics<arbitrary>], iteration_bounds = array<i64: 1, 1, 1>, scalar_prefetch = 0 : i64, scratch_operands = 1 : i64, tpu.core_type = #tpu.core_type<tc>, window_params = [{transform_indices = @transform_0, window_bounds = array<i64: 16, 128>}, {transform_indices = @transform_1, window_bounds = array<i64: 128, 32>}, {transform_indices = @transform_2, window_bounds = array<i64: 1, 32>}, {transform_indices = @transform_3, window_bounds = array<i64: 16, 32>}]} {
    %c0_i32 = arith.constant 0 : i32
    %0 = arith.cmpi eq, %arg2, %c0_i32 : i32
    %1 = arith.extui %0 : i1 to i32
    %c0_i32_0 = arith.constant 0 : i32
    %2 = arith.cmpi ne, %1, %c0_i32_0 : i32
    scf.if %2 {
      %cst_10 = arith.constant 0.000000e+00 : f32
      %12 = vector.broadcast %cst_10 : f32 to vector<16x32xf32>
      %c0_11 = arith.constant 0 : index
      %c0_12 = arith.constant 0 : index
      %13 = vector.load %arg7[%c0_11, %c0_12] : memref<16x32xf32, #tpu.memory_space<vmem>>, vector<16x32xf32>
      tpu.vector_store %arg7[%c0_11, %c0_12], %12 {strides = array<i32>} : memref<16x32xf32, #tpu.memory_space<vmem>>, vector<16x32xf32>,
    } else {
    }
    %c0 = arith.constant 0 : index
    %c0_1 = arith.constant 0 : index
    %3 = vector.load %arg3[%c0, %c0_1] : memref<16x128xf32, #tpu.memory_space<vmem>>, vector<16x128xf32>
    %c0_2 = arith.constant 0 : index
    %c0_3 = arith.constant 0 : index
    %4 = vector.load %arg4[%c0_2, %c0_3] : memref<128x32xf32, #tpu.memory_space<vmem>>, vector<128x32xf32>
    %c0_4 = arith.constant 0 : index
    %c0_5 = arith.constant 0 : index
    %5 = vector.load %arg7[%c0_4, %c0_5] : memref<16x32xf32, #tpu.memory_space<vmem>>, vector<16x32xf32>
    %cst = arith.constant dense<0.000000e+00> : vector<16x32xf32>
    %6 = tpu.matmul %3, %4, %cst {dimension_numbers = #tpu.dot_dimension_numbers<[1], [0], [0], [1], [0, 0, 1, 1], [], []>} : vector<16x128xf32>, vector<128x32xf32>, vector<16x32xf32> -> vector<16x32xf32>
    %7 = arith.addf %5, %6 : vector<16x32xf32>
    %c0_6 = arith.constant 0 : index
    %c0_7 = arith.constant 0 : index
    %8 = vector.load %arg7[%c0_6, %c0_7] : memref<16x32xf32, #tpu.memory_space<vmem>>, vector<16x32xf32>
    tpu.vector_store %arg7[%c0_6, %c0_7], %7 {strides = array<i32>} : memref<16x32xf32, #tpu.memory_space<vmem>>, vector<16x32xf32>,
    %c0_i32_8 = arith.constant 0 : i32
    %9 = arith.cmpi eq, %arg2, %c0_i32_8 : i32
    %10 = arith.extui %9 : i1 to i32
    %c0_i32_9 = arith.constant 0 : i32
    %11 = arith.cmpi ne, %10, %c0_i32_9 : i32
    scf.if %11 {
      %c0_10 = arith.constant 0 : index
      %c0_11 = arith.constant 0 : index
      %12 = vector.load %arg7[%c0_10, %c0_11] : memref<16x32xf32, #tpu.memory_space<vmem>>, vector<16x32xf32>
      %c0_12 = arith.constant 0 : index
      %c0_13 = arith.constant 0 : index
      %13 = vector.load %arg5[%c0_12, %c0_13] : memref<1x32xf32, #tpu.memory_space<vmem>>, vector<1x32xf32>
      %14 = vector.broadcast %13 : vector<1x32xf32> to vector<16x32xf32>
      %15 = arith.addf %12, %14 : vector<16x32xf32>
      %c0_14 = arith.constant 0 : index
      %c0_15 = arith.constant 0 : index
      %16 = vector.load %arg6[%c0_14, %c0_15] : memref<16x32xf32, #tpu.memory_space<vmem>>, vector<16x32xf32>
      tpu.vector_store %arg6[%c0_14, %c0_15], %15 {strides = array<i32>} : memref<16x32xf32, #tpu.memory_space<vmem>>, vector<16x32xf32>,
    } else {
    }
    return
  }
  func.func @transform_0(%arg0: i32, %arg1: i32, %arg2: i32) -> (i32, i32) {
    %c0_i32 = arith.constant 0 : i32
    return %arg0, %arg2 : i32, i32
  }
  func.func @transform_1(%arg0: i32, %arg1: i32, %arg2: i32) -> (i32, i32) {
    %c0_i32 = arith.constant 0 : i32
    return %arg2, %arg1 : i32, i32
  }
  func.func @transform_2(%arg0: i32, %arg1: i32, %arg2: i32) -> (i32, i32) {
    %c0_i32 = arith.constant 0 : i32
    %c0_i32_0 = arith.constant 0 : i32
    return %c0_i32, %arg1 : i32, i32
  }
  func.func @transform_3(%arg0: i32, %arg1: i32, %arg2: i32) -> (i32, i32) {
    %c0_i32 = arith.constant 0 : i32
    return %arg0, %arg1 : i32, i32
  }
}

module attributes {stable_mosaic.version = 11 : i64} {
  func.func @_add_ln_kernel(%arg0: i32, %arg1: memref<16x32xf32, #tpu.memory_space<vmem>>, %arg2: memref<16x32xf32, #tpu.memory_space<vmem>>, %arg3: memref<1x32xf32, #tpu.memory_space<vmem>>, %arg4: memref<1x32xf32, #tpu.memory_space<vmem>>, %arg5: memref<16x32xf32, #tpu.memory_space<vmem>>, %arg6: memref<16x32xf32, #tpu.memory_space<vmem>>) attributes {dimension_semantics = [#tpu.dimension_semantics<parallel>], iteration_bounds = array<i64: 1>, scalar_prefetch = 0 : i64, scratch_operands = 0 : i64, tpu.core_type = #tpu.core_type<tc>, window_params = [{transform_indices = @transform_0, window_bounds = array<i64: 16, 32>}, {transform_indices = @transform_1, window_bounds = array<i64: 16, 32>}, {pipeline_mode = #tpu.pipeline_mode<synchronous>, transform_indices = @transform_2, window_bounds = array<i64: 1, 32>}, {pipeline_mode = #tpu.pipeline_mode<synchronous>, transform_indices = @transform_3, window_bounds = array<i64: 1, 32>}, {transform_indices = @transform_4, window_bounds = array<i64: 16, 32>}, {transform_indices = @transform_5, window_bounds = array<i64: 16, 32>}]} {
    %c0 = arith.constant 0 : index
    %c0_0 = arith.constant 0 : index
    %0 = vector.load %arg1[%c0, %c0_0] : memref<16x32xf32, #tpu.memory_space<vmem>>, vector<16x32xf32>
    %c0_1 = arith.constant 0 : index
    %c0_2 = arith.constant 0 : index
    %1 = vector.load %arg2[%c0_1, %c0_2] : memref<16x32xf32, #tpu.memory_space<vmem>>, vector<16x32xf32>
    %2 = arith.addf %0, %1 : vector<16x32xf32>
    %c0_3 = arith.constant 0 : index
    %c0_4 = arith.constant 0 : index
    %3 = vector.load %arg5[%c0_3, %c0_4] : memref<16x32xf32, #tpu.memory_space<vmem>>, vector<16x32xf32>
    tpu.vector_store %arg5[%c0_3, %c0_4], %2 {strides = array<i32>} : memref<16x32xf32, #tpu.memory_space<vmem>>, vector<16x32xf32>,
    %cst = arith.constant dense<0.000000e+00> : vector<16xf32>
    %4 = vector.multi_reduction <add>, %2, %cst [1] : vector<16x32xf32> to vector<16xf32>
    %5 = vector.shape_cast %4 : vector<16xf32> to vector<16x1xf32>
    %cst_5 = arith.constant 3.200000e+01 : f32
    %6 = vector.broadcast %cst_5 : f32 to vector<16x1xf32>
    %7 = arith.divf %5, %6 : vector<16x1xf32>
    %8 = vector.broadcast %7 : vector<16x1xf32> to vector<16x32xf32>
    %9 = arith.subf %2, %8 : vector<16x32xf32>
    %10 = arith.mulf %9, %9 : vector<16x32xf32>
    %cst_6 = arith.constant dense<0.000000e+00> : vector<16xf32>
    %11 = vector.multi_reduction <add>, %10, %cst_6 [1] : vector<16x32xf32> to vector<16xf32>
    %12 = vector.shape_cast %11 : vector<16xf32> to vector<16x1xf32>
    %cst_7 = arith.constant 3.200000e+01 : f32
    %13 = vector.broadcast %cst_7 : f32 to vector<16x1xf32>
    %14 = arith.divf %12, %13 : vector<16x1xf32>
    %cst_8 = arith.constant 9.99999974E-6 : f32
    %15 = vector.broadcast %cst_8 : f32 to vector<16x1xf32>
    %16 = arith.addf %14, %15 : vector<16x1xf32>
    %17 = math.rsqrt %16 : vector<16x1xf32>
    %18 = vector.broadcast %17 : vector<16x1xf32> to vector<16x32xf32>
    %19 = arith.mulf %9, %18 : vector<16x32xf32>
    %c0_9 = arith.constant 0 : index
    %c0_10 = arith.constant 0 : index
    %20 = vector.load %arg3[%c0_9, %c0_10] : memref<1x32xf32, #tpu.memory_space<vmem>>, vector<1x32xf32>
    %21 = vector.broadcast %20 : vector<1x32xf32> to vector<16x32xf32>
    %22 = arith.mulf %19, %21 : vector<16x32xf32>
    %c0_11 = arith.constant 0 : index
    %c0_12 = arith.constant 0 : index
    %23 = vector.load %arg4[%c0_11, %c0_12] : memref<1x32xf32, #tpu.memory_space<vmem>>, vector<1x32xf32>
    %24 = vector.broadcast %23 : vector<1x32xf32> to vector<16x32xf32>
    %25 = arith.addf %22, %24 : vector<16x32xf32>
    %c0_13 = arith.constant 0 : index
    %c0_14 = arith.constant 0 : index
    %26 = vector.load %arg6[%c0_13, %c0_14] : memref<16x32xf32, #tpu.memory_space<vmem>>, vector<16x32xf32>
    tpu.vector_store %arg6[%c0_13, %c0_14], %25 {strides = array<i32>} : memref<16x32xf32, #tpu.memory_space<vmem>>, vector<16x32xf32>,
    return
  }
  func.func @transform_0(%arg0: i32) -> (i32, i32) {
    %c0_i32 = arith.constant 0 : i32
    %c0_i32_0 = arith.constant 0 : i32
    return %arg0, %c0_i32 : i32, i32
  }
  func.func @transform_1(%arg0: i32) -> (i32, i32) {
    %c0_i32 = arith.constant 0 : i32
    %c0_i32_0 = arith.constant 0 : i32
    return %arg0, %c0_i32 : i32, i32
  }
  func.func @transform_2(%arg0: i32) -> (i32, i32) {
    %c0_i32 = arith.constant 0 : i32
    %c0_i32_0 = arith.constant 0 : i32
    %c0_i32_1 = arith.constant 0 : i32
    return %c0_i32, %c0_i32_0 : i32, i32
  }
  func.func @transform_3(%arg0: i32) -> (i32, i32) {
    %c0_i32 = arith.constant 0 : i32
    %c0_i32_0 = arith.constant 0 : i32
    %c0_i32_1 = arith.constant 0 : i32
    return %c0_i32, %c0_i32_0 : i32, i32
  }
  func.func @transform_4(%arg0: i32) -> (i32, i32) {
    %c0_i32 = arith.constant 0 : i32
    %c0_i32_0 = arith.constant 0 : i32
    return %arg0, %c0_i32 : i32, i32
  }
  func.func @transform_5(%arg0: i32) -> (i32, i32) {
    %c0_i32 = arith.constant 0 : i32
    %c0_i32_0 = arith.constant 0 : i32
    return %arg0, %c0_i32 : i32, i32
  }
}

module attributes {stable_mosaic.version = 11 : i64} {
  func.func @_linear_kernel(%arg0: i32, %arg1: i32, %arg2: i32, %arg3: memref<16x32xf32, #tpu.memory_space<vmem>>, %arg4: memref<128x32xf32, #tpu.memory_space<vmem>>, %arg5: memref<16x128xf32, #tpu.memory_space<vmem>>, %arg6: memref<16x128xf32, #tpu.memory_space<vmem>>) attributes {dimension_semantics = [#tpu.dimension_semantics<parallel>, #tpu.dimension_semantics<parallel>, #tpu.dimension_semantics<arbitrary>], iteration_bounds = array<i64: 1, 1, 1>, scalar_prefetch = 0 : i64, scratch_operands = 1 : i64, tpu.core_type = #tpu.core_type<tc>, window_params = [{transform_indices = @transform_0, window_bounds = array<i64: 16, 32>}, {transform_indices = @transform_1, window_bounds = array<i64: 128, 32>}, {transform_indices = @transform_2, window_bounds = array<i64: 16, 128>}]} {
    %c0_i32 = arith.constant 0 : i32
    %0 = arith.cmpi eq, %arg2, %c0_i32 : i32
    %1 = arith.extui %0 : i1 to i32
    %c0_i32_0 = arith.constant 0 : i32
    %2 = arith.cmpi ne, %1, %c0_i32_0 : i32
    scf.if %2 {
      %cst_10 = arith.constant 0.000000e+00 : f32
      %12 = vector.broadcast %cst_10 : f32 to vector<16x128xf32>
      %c0_11 = arith.constant 0 : index
      %c0_12 = arith.constant 0 : index
      %13 = vector.load %arg6[%c0_11, %c0_12] : memref<16x128xf32, #tpu.memory_space<vmem>>, vector<16x128xf32>
      tpu.vector_store %arg6[%c0_11, %c0_12], %12 {strides = array<i32>} : memref<16x128xf32, #tpu.memory_space<vmem>>, vector<16x128xf32>,
    } else {
    }
    %c0 = arith.constant 0 : index
    %c0_1 = arith.constant 0 : index
    %3 = vector.load %arg3[%c0, %c0_1] : memref<16x32xf32, #tpu.memory_space<vmem>>, vector<16x32xf32>
    %c0_2 = arith.constant 0 : index
    %c0_3 = arith.constant 0 : index
    %4 = vector.load %arg4[%c0_2, %c0_3] : memref<128x32xf32, #tpu.memory_space<vmem>>, vector<128x32xf32>
    %c0_4 = arith.constant 0 : index
    %c0_5 = arith.constant 0 : index
    %5 = vector.load %arg6[%c0_4, %c0_5] : memref<16x128xf32, #tpu.memory_space<vmem>>, vector<16x128xf32>
    %cst = arith.constant dense<0.000000e+00> : vector<16x128xf32>
    %6 = tpu.matmul %3, %4, %cst {dimension_numbers = #tpu.dot_dimension_numbers<[1], [1], [0], [0], [0, 0, 1, 0], [], []>} : vector<16x32xf32>, vector<128x32xf32>, vector<16x128xf32> -> vector<16x128xf32>
    %7 = arith.addf %5, %6 : vector<16x128xf32>
    %c0_6 = arith.constant 0 : index
    %c0_7 = arith.constant 0 : index
    %8 = vector.load %arg6[%c0_6, %c0_7] : memref<16x128xf32, #tpu.memory_space<vmem>>, vector<16x128xf32>
    tpu.vector_store %arg6[%c0_6, %c0_7], %7 {strides = array<i32>} : memref<16x128xf32, #tpu.memory_space<vmem>>, vector<16x128xf32>,
    %c0_i32_8 = arith.constant 0 : i32
    %9 = arith.cmpi eq, %arg2, %c0_i32_8 : i32
    %10 = arith.extui %9 : i1 to i32
    %c0_i32_9 = arith.constant 0 : i32
    %11 = arith.cmpi ne, %10, %c0_i32_9 : i32
    scf.if %11 {
      %c0_10 = arith.constant 0 : index
      %c0_11 = arith.constant 0 : index
      %12 = vector.load %arg6[%c0_10, %c0_11] : memref<16x128xf32, #tpu.memory_space<vmem>>, vector<16x128xf32>
      %c0_12 = arith.constant 0 : index
      %c0_13 = arith.constant 0 : index
      %13 = vector.load %arg5[%c0_12, %c0_13] : memref<16x128xf32, #tpu.memory_space<vmem>>, vector<16x128xf32>
      tpu.vector_store %arg5[%c0_12, %c0_13], %12 {strides = array<i32>} : memref<16x128xf32, #tpu.memory_space<vmem>>, vector<16x128xf32>,
    } else {
    }
    return
  }
  func.func @transform_0(%arg0: i32, %arg1: i32, %arg2: i32) -> (i32, i32) {
    %c0_i32 = arith.constant 0 : i32
    return %arg0, %arg2 : i32, i32
  }
  func.func @transform_1(%arg0: i32, %arg1: i32, %arg2: i32) -> (i32, i32) {
    %c0_i32 = arith.constant 0 : i32
    return %arg1, %arg2 : i32, i32
  }
  func.func @transform_2(%arg0: i32, %arg1: i32, %arg2: i32) -> (i32, i32) {
    %c0_i32 = arith.constant 0 : i32
    return %arg0, %arg1 : i32, i32
  }
}

</mosaic_0001>

<llo_original>
// kernel: conv_lm_head_model_forward.23
$region0: #{conv_lm_head_model_forward.23}
  #allocation0 [shape = 'u32[]', space=smem, size = 0x4, offset = 0x4, fixed_abs, tag = 'smem constant byte address 0x4 - core index']
  #allocation1 [shape = 'u32[72,128]{1,0:T(1,128)}', space=vmem, size = 0x9000, scoped, tag = 'internal scratch']
  #allocation2 [shape = 'f32[16,32]{1,0:T(8,128)}', space=vmem, size = 0x2000, scoped, tag = 'scratch operand']
  %s0 = inlined_call_operand.vmem [shape: f32[16,32], index: 0, kind: input, shape index: {}]
  %s1 = inlined_call_operand.vmem [shape: f32[32,32], index: 1, kind: input, shape index: {}]
  %s2 = inlined_call_operand.vmem [shape: f32[1,32], index: 2, kind: input, shape index: {}]
  %s3 = inlined_call_operand.vmem [shape: f32[16,32], index: 3, kind: output, shape index: {}]
  %s4 = sld [smem:[#allocation0]]
  $region30: #{conv_lm_head_model_forward.23} parent=0
    _
  %s6 = ssub.s32 1, %s4
  %s7 = scalar_select 0, %s6, %s4
  // Predicated region
  $region2: #{conv_lm_head_model_forward.23} parent=0 // pred_check
    _
  $region3: #{conv_lm_head_model_forward.23} parent=0 // pred_check_branch
    %9 = sbr.rel (0) target = $region5
  $region4: #{conv_lm_head_model_forward.23} parent=0 // pred_region
    _
  $region5: #{conv_lm_head_model_forward.23} parent=0 // pred_fallthru
    _
  // Predicated region
  $region6: #{conv_lm_head_model_forward.23} parent=0 // pred_check
    _
  $region7: #{conv_lm_head_model_forward.23} parent=0 // pred_check_branch
    %11 = sbr.rel (0) target = $region9
  $region8: #{conv_lm_head_model_forward.23} parent=0 // pred_region
    _
  $region9: #{conv_lm_head_model_forward.23} parent=0 // pred_fallthru
    _
  // Predicated region
  $region10: #{conv_lm_head_model_forward.23} parent=0 // pred_check
    _
  $region11: #{conv_lm_head_model_forward.23} parent=0 // pred_check_branch
    %13 = sbr.rel (0) target = $region13
  $region12: #{conv_lm_head_model_forward.23} parent=0 // pred_region
    _
  $region13: #{conv_lm_head_model_forward.23} parent=0 // pred_fallthru
    _
  %p14 = scmp.eq.s32.totalorder 0, 0
  // Predicated region
  $region14: #{conv_lm_head_model_forward.23} parent=0 // pred_check
    %p15 = pneg %p14
  $region15: #{conv_lm_head_model_forward.23} parent=0 // pred_check_branch
    %17 = sbr.rel (%p15) target = $region17
  $region16: #{conv_lm_head_model_forward.23} parent=0 // pred_region
    %vm18 = vcmask 261120
    %19 = vst.msk [vmem:[#allocation2] sm:$0xff] %vm18, 0.0
    %20 = vst.msk [vmem:[#allocation2 + $0x8] sm:$0xff] %vm18, 0.0
  $region17: #{conv_lm_head_model_forward.23} parent=0 // pred_fallthru
    _
  %v21 = vld [vmem:[%s0] sm:$0xff]
  %v22 = vld [vmem:[%s0 + $0x8] sm:$0xff]
  %v23 = vld [vmem:[%s1] sm:$0xff]
  %v24 = vld [vmem:[%s1 + $0x8] sm:$0xff]
  %v25 = vld [vmem:[%s1 + $0x10] sm:$0xff]
  %v26 = vld [vmem:[%s1 + $0x18] sm:$0xff]
  %v27 = vld [vmem:[#allocation2] sm:$0xff]
  %v28 = vld [vmem:[#allocation2 + $0x8] sm:$0xff]
  %vm29 = vcmask 261120
  %v31 = vsel %vm29, %v21, 0
  %v34 = vsel %vm29, %v22, 0
  %36 = vmatpush.msra.mxu0 0.0
  %37 = vmatpush.msra.mxu0 0.0
  %38 = vmatpush.msra.mxu0 0.0
  %39 = vmatpush.msra.mxu0 0.0
  %40 = vmatpush.msra.mxu0 0.0
  %41 = vmatpush.msra.mxu0 0.0
  %42 = vmatpush.msra.mxu0 0.0
  %43 = vmatpush.msra.mxu0 0.0
  %44 = vmatpush.msra.mxu0 0.0
  %45 = vmatpush.msra.mxu0 0.0
  %46 = vmatpush.msra.mxu0 0.0
  %47 = vmatpush.msra.mxu0 0.0
  %48 = vmatpush.msra.mxu0 %v26
  %49 = vmatpush.msra.mxu0 %v25
  %50 = vmatpush.msra.mxu0 %v24
  %51 = vmatpush.msra.mxu0 %v23
  %52 = vmatmul.f32.gmra.mxu0 %v31
  %v53 = vpop.f32.mrf.mxu0
  %v54 = vadd.f32 0.0, %v53
  %55 = vmatmul.f32.gmra.mxu0 %v34
  %v56 = vpop.f32.mrf.mxu0
  %v57 = vadd.f32 0.0, %v56
  %58 = vdwg.mxu0
  %v59 = vadd.f32 %v27, %v54
  %v60 = vadd.f32 %v28, %v57
  %61 = vst.msk [vmem:[#allocation2] sm:$0xff] %vm29, %v59
  %62 = vst.msk [vmem:[#allocation2 + $0x8] sm:$0xff] %vm29, %v60
  // Predicated region
  $region18: #{conv_lm_head_model_forward.23} parent=0 // pred_check
    %p63 = pneg %p14
  $region19: #{conv_lm_head_model_forward.23} parent=0 // pred_check_branch
    %65 = sbr.rel (%p63) target = $region21
  $region20: #{conv_lm_head_model_forward.23} parent=0 // pred_region
    %v66 = vld [vmem:[#allocation2] sm:$0xff]
    %v67 = vld [vmem:[#allocation2 + $0x8] sm:$0xff]
    %v68 = vld [vmem:[%s2] sm:$0x1]
    %v70 = vperm.slane %v68, 0
    %v72 = vadd.f32 %v66, %v70
    %v73 = vadd.f32 %v67, %v70
    %74 = vst.msk [vmem:[%s3] sm:$0xff] %vm29, %v72
    %75 = vst.msk [vmem:[%s3 + $0x8] sm:$0xff] %vm29, %v73
  $region21: #{conv_lm_head_model_forward.23} parent=0 // pred_fallthru
    _
  // Predicated region
  $region22: #{conv_lm_head_model_forward.23} parent=0 // pred_check
    _
  $region23: #{conv_lm_head_model_forward.23} parent=0 // pred_check_branch
    %77 = sbr.rel (0) target = $region25
  $region24: #{conv_lm_head_model_forward.23} parent=0 // pred_region
    _
  $region25: #{conv_lm_head_model_forward.23} parent=0 // pred_fallthru
    _
  // Predicated region
  $region26: #{conv_lm_head_model_forward.23} parent=0 // pred_check
    _
  $region27: #{conv_lm_head_model_forward.23} parent=0 // pred_check_branch
    %79 = sbr.rel (0) target = $region29
  $region28: #{conv_lm_head_model_forward.23} parent=0 // pred_region
    _
  $region29: #{conv_lm_head_model_forward.23} parent=0 // pred_fallthru
    _

// kernel: conv_lm_head_model_forward.20
$region0: #{conv_lm_head_model_forward.20}
  #allocation0 [shape = 'u32[]', space=smem, size = 0x4, offset = 0x4, fixed_abs, tag = 'smem constant byte address 0x4 - core index']
  #allocation1 [shape = 'u32[72,128]{1,0:T(1,128)}', space=vmem, size = 0x9000, scoped, tag = 'internal scratch']
  %s0 = inlined_call_operand.vmem [shape: f32[16,32], index: 0, kind: input, shape index: {}]
  %s1 = inlined_call_operand.vmem [shape: f32[16,32], index: 1, kind: input, shape index: {}]
  %s2 = inlined_call_operand.vmem [shape: f32[1,32], index: 2, kind: input, shape index: {}]
  %s3 = inlined_call_operand.vmem [shape: f32[1,32], index: 3, kind: input, shape index: {}]
  %s4 = inlined_call_operand.vmem [shape: f32[16,32], index: 4, kind: output, shape index: {0}]
  %s5 = inlined_call_operand.vmem [shape: f32[16,32], index: 5, kind: output, shape index: {1}]
  %6 = xla_tuple %s4, %s5
  %s7 = sld [smem:[#allocation0]]
  $region34: #{conv_lm_head_model_forward.20} parent=0
    _
  %s9 = ssub.s32 1, %s7
  %s10 = scalar_select 0, %s9, %s7
  // Predicated region
  $region2: #{conv_lm_head_model_forward.20} parent=0 // pred_check
    _
  $region3: #{conv_lm_head_model_forward.20} parent=0 // pred_check_branch
    %12 = sbr.rel (0) target = $region5
  $region4: #{conv_lm_head_model_forward.20} parent=0 // pred_region
    _
  $region5: #{conv_lm_head_model_forward.20} parent=0 // pred_fallthru
    _
  // Predicated region
  $region6: #{conv_lm_head_model_forward.20} parent=0 // pred_check
    _
  $region7: #{conv_lm_head_model_forward.20} parent=0 // pred_check_branch
    %14 = sbr.rel (0) target = $region9
  $region8: #{conv_lm_head_model_forward.20} parent=0 // pred_region
    _
  $region9: #{conv_lm_head_model_forward.20} parent=0 // pred_fallthru
    _
  // Predicated region
  $region10: #{conv_lm_head_model_forward.20} parent=0 // pred_check
    _
  $region11: #{conv_lm_head_model_forward.20} parent=0 // pred_check_branch
    %16 = sbr.rel (0) target = $region13
  $region12: #{conv_lm_head_model_forward.20} parent=0 // pred_region
    _
  $region13: #{conv_lm_head_model_forward.20} parent=0 // pred_fallthru
    _
  // Predicated region
  $region14: #{conv_lm_head_model_forward.20} parent=0 // pred_check
    _
  $region15: #{conv_lm_head_model_forward.20} parent=0 // pred_check_branch
    %18 = sbr.rel (0) target = $region17
  $region16: #{conv_lm_head_model_forward.20} parent=0 // pred_region
    _
  $region17: #{conv_lm_head_model_forward.20} parent=0 // pred_fallthru
    _
  %v19 = vld [vmem:[%s0] sm:$0xff]
  %v20 = vld [vmem:[%s0 + $0x8] sm:$0xff]
  %v21 = vld [vmem:[%s1] sm:$0xff]
  %v22 = vld [vmem:[%s1 + $0x8] sm:$0xff]
  %v23 = vadd.f32 %v19, %v21
  %v24 = vadd.f32 %v20, %v22
  %vm25 = vcmask 261120
  %26 = vst.msk [vmem:[%s4] sm:$0xff] %vm25, %v23
  %27 = vst.msk [vmem:[%s4 + $0x8] sm:$0xff] %vm25, %v24
  %v28 = vsel %vm25, %v23, 0.0
  %29 = vadd.xlane.f32.xlu0 %v28
  %v30 = vpop.xlane.xlu0 %29
  %v31 = vsel %vm25, %v24, 0.0
  %32 = vadd.xlane.f32.xlu0 %v31
  %v33 = vpop.xlane.xlu0 %32
  %v34 = vrcp.pop 32.0
  %v35 = vmul.f32 32.0, %v34
  %v36 = vsub.f32 1.0, %v35
  %v37 = vmul.f32 %v34, %v36
  %v38 = vadd.f32 %v34, %v37
  %vm39 = vweird.f32 %v34
  %v40 = vsel %vm39, %v34, %v38
  %v41 = vmul.f32 %v30, %v40
  %v42 = vmul.f32 %v33, %v40
  %v43 = vsub.f32 %v23, %v41
  %v44 = vsub.f32 %v24, %v42
  %v45 = vmul.f32 %v43, %v43
  %v46 = vmul.f32 %v44, %v44
  %v47 = vsel %vm25, %v45, 0.0
  %48 = vadd.xlane.f32.xlu0 %v47
  %v49 = vpop.xlane.xlu0 %48
  %v50 = vsel %vm25, %v46, 0.0
  %51 = vadd.xlane.f32.xlu0 %v50
  %v52 = vpop.xlane.xlu0 %51
  %v53 = vmul.f32 %v49, %v40
  %v54 = vmul.f32 %v52, %v40
  %v55 = vadd.f32 %v53, 1e-05
  %v56 = vadd.f32 %v54, 1e-05
  %v57 = vrsqrt.pop %v55
  %v58 = vmul.f32 %v57, %v55
  %v59 = vmul.f32 %v58, %v57
  %v60 = vmul.f32 0.5, %v59
  %v61 = vsub.f32 1.5, %v60
  %v62 = vmul.f32 %v57, %v61
  %vm63 = vweird.f32 %v55
  %vm64 = vweird.f32 %v57
  %vm65 = vmor %vm63, %vm64
  %v66 = vsel %vm65, %v57, %v62
  %v67 = vrsqrt.pop %v56
  %v68 = vmul.f32 %v67, %v56
  %v69 = vmul.f32 %v68, %v67
  %v70 = vmul.f32 0.5, %v69
  %v71 = vsub.f32 1.5, %v70
  %v72 = vmul.f32 %v67, %v71
  %vm73 = vweird.f32 %v56
  %vm74 = vweird.f32 %v67
  %vm75 = vmor %vm73, %vm74
  %v76 = vsel %vm75, %v67, %v72
  %v77 = vmul.f32 %v43, %v66
  %v78 = vmul.f32 %v44, %v76
  %v79 = vld [vmem:[%s2] sm:$0x1]
  %v81 = vperm.slane %v79, 0
  %v83 = vmul.f32 %v77, %v81
  %v84 = vmul.f32 %v78, %v81
  %v85 = vld [vmem:[%s3] sm:$0x1]
  %v87 = vperm.slane %v85, 0
  %v89 = vadd.f32 %v83, %v87
  %v90 = vadd.f32 %v84, %v87
  %91 = vst.msk [vmem:[%s5] sm:$0xff] %vm25, %v89
  %92 = vst.msk [vmem:[%s5 + $0x8] sm:$0xff] %vm25, %v90
  // Predicated region
  $region18: #{conv_lm_head_model_forward.20} parent=0 // pred_check
    _
  $region19: #{conv_lm_head_model_forward.20} parent=0 // pred_check_branch
    %94 = sbr.rel (0) target = $region21
  $region20: #{conv_lm_head_model_forward.20} parent=0 // pred_region
    _
  $region21: #{conv_lm_head_model_forward.20} parent=0 // pred_fallthru
    _
  // Predicated region
  $region22: #{conv_lm_head_model_forward.20} parent=0 // pred_check
    _
  $region23: #{conv_lm_head_model_forward.20} parent=0 // pred_check_branch
    %96 = sbr.rel (0) target = $region25
  $region24: #{conv_lm_head_model_forward.20} parent=0 // pred_region
    _
  $region25: #{conv_lm_head_model_forward.20} parent=0 // pred_fallthru
    _
  // Predicated region
  $region26: #{conv_lm_head_model_forward.20} parent=0 // pred_check
    _
  $region27: #{conv_lm_head_model_forward.20} parent=0 // pred_check_branch
    %98 = sbr.rel (0) target = $region29
  $region28: #{conv_lm_head_model_forward.20} parent=0 // pred_region
    _
  $region29: #{conv_lm_head_model_forward.20} parent=0 // pred_fallthru
    _
  // Predicated region
  $region30: #{conv_lm_head_model_forward.20} parent=0 // pred_check
    _
  $region31: #{conv_lm_head_model_forward.20} parent=0 // pred_check_branch
    %100 = sbr.rel (0) target = $region33
  $region32: #{conv_lm_head_model_forward.20} parent=0 // pred_region
    _
  $region33: #{conv_lm_head_model_forward.20} parent=0 // pred_fallthru
    _

// kernel: conv_lm_head_model_forward.27
$region0: #{conv_lm_head_model_forward.27}
  #allocation0 [shape = 'u32[]', space=smem, size = 0x4, offset = 0x4, fixed_abs, tag = 'smem constant byte address 0x4 - core index']
  #allocation1 [shape = 'u32[72,128]{1,0:T(1,128)}', space=vmem, size = 0x9000, scoped, tag = 'internal scratch']
  #allocation2 [shape = 'f32[16,128]{1,0:T(8,128)}', space=vmem, size = 0x2000, scoped, tag = 'scratch operand']
  %s0 = inlined_call_operand.vmem [shape: f32[16,32], index: 0, kind: input, shape index: {}]
  %s1 = inlined_call_operand.vmem [shape: f32[32,128], index: 1, kind: input, shape index: {}]
  %s2 = inlined_call_operand.vmem [shape: f32[1,128], index: 2, kind: input, shape index: {}]
  %s3 = inlined_call_operand.vmem [shape: f32[16,128], index: 3, kind: output, shape index: {}]
  %s4 = sld [smem:[#allocation0]]
  $region30: #{conv_lm_head_model_forward.27} parent=0
    _
  %s6 = ssub.s32 1, %s4
  %s7 = scalar_select 0, %s6, %s4
  // Predicated region
  $region2: #{conv_lm_head_model_forward.27} parent=0 // pred_check
    _
  $region3: #{conv_lm_head_model_forward.27} parent=0 // pred_check_branch
    %9 = sbr.rel (0) target = $region5
  $region4: #{conv_lm_head_model_forward.27} parent=0 // pred_region
    _
  $region5: #{conv_lm_head_model_forward.27} parent=0 // pred_fallthru
    _
  // Predicated region
  $region6: #{conv_lm_head_model_forward.27} parent=0 // pred_check
    _
  $region7: #{conv_lm_head_model_forward.27} parent=0 // pred_check_branch
    %11 = sbr.rel (0) target = $region9
  $region8: #{conv_lm_head_model_forward.27} parent=0 // pred_region
    _
  $region9: #{conv_lm_head_model_forward.27} parent=0 // pred_fallthru
    _
  // Predicated region
  $region10: #{conv_lm_head_model_forward.27} parent=0 // pred_check
    _
  $region11: #{conv_lm_head_model_forward.27} parent=0 // pred_check_branch
    %13 = sbr.rel (0) target = $region13
  $region12: #{conv_lm_head_model_forward.27} parent=0 // pred_region
    _
  $region13: #{conv_lm_head_model_forward.27} parent=0 // pred_fallthru
    _
  %p14 = scmp.eq.s32.totalorder 0, 0
  // Predicated region
  $region14: #{conv_lm_head_model_forward.27} parent=0 // pred_check
    %p15 = pneg %p14
  $region15: #{conv_lm_head_model_forward.27} parent=0 // pred_check_branch
    %17 = sbr.rel (%p15) target = $region17
  $region16: #{conv_lm_head_model_forward.27} parent=0 // pred_region
    %18 = vst [vmem:[#allocation2] sm:$0xff] 0.0
    %19 = vst [vmem:[#allocation2 + $0x8] sm:$0xff] 0.0
  $region17: #{conv_lm_head_model_forward.27} parent=0 // pred_fallthru
    _
  %v20 = vld [vmem:[%s0] sm:$0xff]
  %v21 = vld [vmem:[%s0 + $0x8] sm:$0xff]
  %v22 = vld [vmem:[%s1] sm:$0xff]
  %v23 = vld [vmem:[%s1 + $0x8] sm:$0xff]
  %v24 = vld [vmem:[%s1 + $0x10] sm:$0xff]
  %v25 = vld [vmem:[%s1 + $0x18] sm:$0xff]
  %v26 = vld [vmem:[#allocation2] sm:$0xff]
  %v27 = vld [vmem:[#allocation2 + $0x8] sm:$0xff]
  %vm28 = vcmask 261120
  %v30 = vsel %vm28, %v20, 0
  %v33 = vsel %vm28, %v21, 0
  %35 = vmatpush.msra.mxu0 0.0
  %36 = vmatpush.msra.mxu0 0.0
  %37 = vmatpush.msra.mxu0 0.0
  %38 = vmatpush.msra.mxu0 0.0
  %39 = vmatpush.msra.mxu0 0.0
  %40 = vmatpush.msra.mxu0 0.0
  %41 = vmatpush.msra.mxu0 0.0
  %42 = vmatpush.msra.mxu0 0.0
  %43 = vmatpush.msra.mxu0 0.0
  %44 = vmatpush.msra.mxu0 0.0
  %45 = vmatpush.msra.mxu0 0.0
  %46 = vmatpush.msra.mxu0 0.0
  %47 = vmatpush.msra.mxu0 %v25
  %48 = vmatpush.msra.mxu0 %v24
  %49 = vmatpush.msra.mxu0 %v23
  %50 = vmatpush.msra.mxu0 %v22
  %51 = vmatmul.f32.gmra.mxu0 %v30
  %v52 = vpop.f32.mrf.mxu0
  %v53 = vadd.f32 0.0, %v52
  %54 = vmatmul.f32.gmra.mxu0 %v33
  %v55 = vpop.f32.mrf.mxu0
  %v56 = vadd.f32 0.0, %v55
  %57 = vdwg.mxu0
  %v58 = vadd.f32 %v26, %v53
  %v59 = vadd.f32 %v27, %v56
  %60 = vst [vmem:[#allocation2] sm:$0xff] %v58
  %61 = vst [vmem:[#allocation2 + $0x8] sm:$0xff] %v59
  // Predicated region
  $region18: #{conv_lm_head_model_forward.27} parent=0 // pred_check
    %p62 = pneg %p14
  $region19: #{conv_lm_head_model_forward.27} parent=0 // pred_check_branch
    %64 = sbr.rel (%p62) target = $region21
  $region20: #{conv_lm_head_model_forward.27} parent=0 // pred_region
    %v65 = vld [vmem:[#allocation2] sm:$0xff]
    %v66 = vld [vmem:[#allocation2 + $0x8] sm:$0xff]
    %v67 = vld [vmem:[%s2] sm:$0x1]
    %v69 = vperm.slane %v67, 0
    %v71 = vadd.f32 %v65, %v69
    %v72 = vadd.f32 %v66, %v69
    %v73 = vmul.f32 %v71, 0.5
    %v74 = vmul.f32 %v72, 0.5
    %v75 = vmul.f32 %v71, 0.044715
    %v76 = vmul.f32 %v72, 0.044715
    %v77 = vmul.f32 %v75, %v71
    %v78 = vmul.f32 %v76, %v72
    %v79 = vmul.f32 %v77, %v71
    %v80 = vmul.f32 %v78, %v72
    %v81 = vadd.f32 %v71, %v79
    %v82 = vadd.f32 %v72, %v80
    %v83 = vmul.f32 %v81, 0.7978846
    %v84 = vmul.f32 %v82, 0.7978846
    %v85 = vtanh.pop %v83
    %v86 = vtanh.pop %v84
    %v87 = vadd.f32 %v85, 1.0
    %v88 = vadd.f32 %v86, 1.0
    %v89 = vmul.f32 %v73, %v87
    %v90 = vmul.f32 %v74, %v88
    %91 = vst [vmem:[%s3] sm:$0xff] %v89
    %92 = vst [vmem:[%s3 + $0x8] sm:$0xff] %v90
  $region21: #{conv_lm_head_model_forward.27} parent=0 // pred_fallthru
    _
  // Predicated region
  $region22: #{conv_lm_head_model_forward.27} parent=0 // pred_check
    _
  $region23: #{conv_lm_head_model_forward.27} parent=0 // pred_check_branch
    %94 = sbr.rel (0) target = $region25
  $region24: #{conv_lm_head_model_forward.27} parent=0 // pred_region
    _
  $region25: #{conv_lm_head_model_forward.27} parent=0 // pred_fallthru
    _
  // Predicated region
  $region26: #{conv_lm_head_model_forward.27} parent=0 // pred_check
    _
  $region27: #{conv_lm_head_model_forward.27} parent=0 // pred_check_branch
    %96 = sbr.rel (0) target = $region29
  $region28: #{conv_lm_head_model_forward.27} parent=0 // pred_region
    _
  $region29: #{conv_lm_head_model_forward.27} parent=0 // pred_fallthru
    _

// kernel: conv_lm_head_model_forward.24
$region0: #{conv_lm_head_model_forward.24}
  #allocation0 [shape = 'u32[]', space=smem, size = 0x4, offset = 0x4, fixed_abs, tag = 'smem constant byte address 0x4 - core index']
  #allocation1 [shape = 'u32[72,128]{1,0:T(1,128)}', space=vmem, size = 0x9000, scoped, tag = 'internal scratch']
  #allocation2 [shape = 'f32[4,8,1]{2,1,0:T(8,128)}', space=vmem, size = 0x4000, scoped, tag = 'scratch operand']
  #allocation3 [shape = 'f32[4,8,1]{2,1,0:T(8,128)}', space=vmem, size = 0x4000, scoped, tag = 'scratch operand']
  #allocation4 [shape = 'f32[4,8,8]{2,1,0:T(8,128)}', space=vmem, size = 0x4000, scoped, tag = 'scratch operand']
  %s0 = inlined_call_operand.vmem [shape: f32[2,8,4,8], index: 0, kind: input, shape index: {}]
  %s1 = inlined_call_operand.vmem [shape: f32[2,8,4,8], index: 1, kind: input, shape index: {}]
  %s2 = inlined_call_operand.vmem [shape: f32[2,8,4,8], index: 2, kind: input, shape index: {}]
  %s3 = inlined_call_operand.vmem [shape: f32[2,8,4,8], index: 3, kind: output, shape index: {}]
  %s4 = sld [smem:[#allocation0]]
  $region57: #{conv_lm_head_model_forward.24} parent=0
    _
  %s6 = ssub.s32 1, %s4
  %s7 = scalar_select 0, %s6, %s4
  loop: start=0, step=1, limit=4
  $region2: #{conv_lm_head_model_forward.24} parent=0 // loop_pre_header
    _
  $region3: #{conv_lm_head_model_forward.24} parent=0 // loop_header
    %s9 = sphi 0, %s13
    %p10 = scmp.ge.s32.totalorder %s9, 4
    %s16 = sphi 0, %s35
    %s17 = sphi 0, %s31
    %s18 = sphi 0, %s27
    %s19 = sphi 0, %s16
    %s20 = sphi 0, %s17
    %s21 = sphi 0, %s18
    %s22 = sphi 0, %s19
    %s23 = sphi 0, %s20
    %s24 = sphi 0, %s21
    %s40 = sphi 0, %s42
    %s43 = sphi 0, %s40
    %s44 = sphi 0, %s43
    %s60 = sphi 0, %s44
    %s68 = sphi 0, %s70
    %s71 = sphi 0, %s68
    %s72 = sphi 0, %s71
    %s88 = sphi 0, %s72
    %s96 = sphi 0, %s98
    %s99 = sphi 0, %s96
    %s100 = sphi 0, %s99
    %s116 = sphi 0, %s100
    %s124 = sphi 0, %s126
    %s127 = sphi 0, %s124
    %s128 = sphi 0, %s127
    %s144 = sphi 0, %s128
  $region4: #{conv_lm_head_model_forward.24} parent=0 // loop_header_branch
    %12 = sbr.rel (%p10) target = $region8
  $region5: #{conv_lm_head_model_forward.24} parent=0 // loop_body
    %s14 = ssub.s32 %s9, 1
    %s15 = ssub.s32 %s9, 2
    %s25 = sadd.s32 1, %s18
    %p26 = scmp.ge.s32.totalorder %s25, 1
    %s27 = scalar_select %p26, 0, %s25
    %s28 = sadd.s32 1, %s17
    %s29 = scalar_select %p26, %s28, %s17
    %p30 = scmp.ge.s32.totalorder %s29, 1
    %s31 = scalar_select %p30, 0, %s29
    %s32 = sadd.s32 1, %s16
    %s33 = scalar_select %p30, %s32, %s16
    %p34 = scmp.ge.s32.totalorder %s33, 2
    %s35 = scalar_select %p34, 0, %s33
    %s36 = ssub.s32 %s16, %s35
    %s37 = ssub.s32 %s17, %s31
    %s38 = sor.u32 %s36, %s37
    %p39 = scmp.eq.s32.totalorder %s38, 0
    %s41 = sadd.s32 %s40, 1
    %s42 = scalar_select %p39, %s40, %s41
    %p45 = pneg %p39
    %p46 = scmp.eq.s32.totalorder %s9, 1
    %p47 = por %p45, %p46
    %p48 = scmp.ne.s32.totalorder %s40, %s43
    %p49 = scmp.eq.s32.totalorder %s9, 0
    %p50 = por %p48, %p49
    %p51 = scmp.ne.s32.totalorder %s40, %s43
    %p52 = scmp.eq.s32.totalorder %s14, 1
    %p53 = por %p51, %p52
    %p54 = scmp.ne.s32.totalorder %s43, %s44
    %p55 = scmp.eq.s32.totalorder %s14, 0
    %p56 = por %p54, %p55
    %p57 = scmp.ne.s32.totalorder %s43, %s44
    %p58 = scmp.eq.s32.totalorder %s15, 1
    %p59 = por %p57, %p58
    %p61 = scmp.ne.s32.totalorder %s44, %s60
    %p62 = scmp.eq.s32.totalorder %s15, 0
    %p63 = por %p61, %p62
    %s64 = ssub.s32 %s16, %s35
    %s65 = ssub.s32 %s18, %s27
    %s66 = sor.u32 %s64, %s65
    %p67 = scmp.eq.s32.totalorder %s66, 0
    %s69 = sadd.s32 %s68, 1
    %s70 = scalar_select %p67, %s68, %s69
    %p73 = pneg %p67
    %p74 = scmp.eq.s32.totalorder %s9, 1
    %p75 = por %p73, %p74
    %p76 = scmp.ne.s32.totalorder %s68, %s71
    %p77 = scmp.eq.s32.totalorder %s9, 0
    %p78 = por %p76, %p77
    %p79 = scmp.ne.s32.totalorder %s68, %s71
    %p80 = scmp.eq.s32.totalorder %s14, 1
    %p81 = por %p79, %p80
    %p82 = scmp.ne.s32.totalorder %s71, %s72
    %p83 = scmp.eq.s32.totalorder %s14, 0
    %p84 = por %p82, %p83
    %p85 = scmp.ne.s32.totalorder %s71, %s72
    %p86 = scmp.eq.s32.totalorder %s15, 1
    %p87 = por %p85, %p86
    %p89 = scmp.ne.s32.totalorder %s72, %s88
    %p90 = scmp.eq.s32.totalorder %s15, 0
    %p91 = por %p89, %p90
    %s92 = ssub.s32 %s16, %s35
    %s93 = ssub.s32 %s18, %s27
    %s94 = sor.u32 %s92, %s93
    %p95 = scmp.eq.s32.totalorder %s94, 0
    %s97 = sadd.s32 %s96, 1
    %s98 = scalar_select %p95, %s96, %s97
    %p101 = pneg %p95
    %p102 = scmp.eq.s32.totalorder %s9, 1
    %p103 = por %p101, %p102
    %p104 = scmp.ne.s32.totalorder %s96, %s99
    %p105 = scmp.eq.s32.totalorder %s9, 0
    %p106 = por %p104, %p105
    %p107 = scmp.ne.s32.totalorder %s96, %s99
    %p108 = scmp.eq.s32.totalorder %s14, 1
    %p109 = por %p107, %p108
    %p110 = scmp.ne.s32.totalorder %s99, %s100
    %p111 = scmp.eq.s32.totalorder %s14, 0
    %p112 = por %p110, %p111
    %p113 = scmp.ne.s32.totalorder %s99, %s100
    %p114 = scmp.eq.s32.totalorder %s15, 1
    %p115 = por %p113, %p114
    %p117 = scmp.ne.s32.totalorder %s100, %s116
    %p118 = scmp.eq.s32.totalorder %s15, 0
    %p119 = por %p117, %p118
    %s120 = ssub.s32 %s16, %s35
    %s121 = ssub.s32 %s17, %s31
    %s122 = sor.u32 %s120, %s121
    %p123 = scmp.eq.s32.totalorder %s122, 0
    %s125 = sadd.s32 %s124, 1
    %s126 = scalar_select %p123, %s124, %s125
    %p129 = pneg %p123
    %p130 = scmp.eq.s32.totalorder %s9, 1
    %p131 = por %p129, %p130
    %p132 = scmp.ne.s32.totalorder %s124, %s127
    %p133 = scmp.eq.s32.totalorder %s9, 0
    %p134 = por %p132, %p133
    %p135 = scmp.ne.s32.totalorder %s124, %s127
    %p136 = scmp.eq.s32.totalorder %s14, 1
    %p137 = por %p135, %p136
    %p138 = scmp.ne.s32.totalorder %s127, %s128
    %p139 = scmp.eq.s32.totalorder %s14, 0
    %p140 = por %p138, %p139
    %p141 = scmp.ne.s32.totalorder %s127, %s128
    %p142 = scmp.eq.s32.totalorder %s15, 1
    %p143 = por %p141, %p142
    %p145 = scmp.ne.s32.totalorder %s128, %s144
    %p146 = scmp.eq.s32.totalorder %s15, 0
    %p147 = por %p145, %p146
    %p148 = scmp.le.s32.totalorder 1, %s9
    %p149 = scmp.lt.s32.totalorder %s9, 3
    %p150 = pnand %p148, %p149
    %p151 = pneg %p150
    // Predicated region
    $region9: #{conv_lm_head_model_forward.24} parent=5 // pred_check
      _
    $region10: #{conv_lm_head_model_forward.24} parent=5 // pred_check_branch
      %153 = sbr.rel (%p150) target = $region12
    $region11: #{conv_lm_head_model_forward.24} parent=5 // pred_region
      %s154 = ssub.s32 %s9, 1
    $region12: #{conv_lm_head_model_forward.24} parent=5 // pred_fallthru
      _
    %p155 = scmp.lt.s32.totalorder %s9, 2
    // Predicated region
    $region13: #{conv_lm_head_model_forward.24} parent=5 // pred_check
      %p156 = pneg %p155
    $region14: #{conv_lm_head_model_forward.24} parent=5 // pred_check_branch
      %158 = sbr.rel (%p156) target = $region16
    $region15: #{conv_lm_head_model_forward.24} parent=5 // pred_region
      // Predicated region
      $region17: #{conv_lm_head_model_forward.24} parent=15 // pred_check
        %p159 = pneg %p50
      $region18: #{conv_lm_head_model_forward.24} parent=15 // pred_check_branch
        %161 = sbr.rel (%p159) target = $region20
      $region19: #{conv_lm_head_model_forward.24} parent=15 // pred_region
        %s162 = smul.u32 8, %s17
        %p163 = scmp.lt.s32.totalorder %s16, 1
        %s164 = scalar_select %p163, %s16, 1
        %p165 = scmp.lt.s32.totalorder %s162, 7
        %s166 = scalar_select %p165, %s162, 7
        %s167 = smul.addr %s164, 8
        %s168 = sadd.s32 %s166, %s167
        %s169 = smul.addr %s168, 4
        %s170 = scalar_lea.vmem %s0, %s169
        %s171 = smul.u32 8, %s17
      $region20: #{conv_lm_head_model_forward.24} parent=15 // pred_fallthru
        _
      // Predicated region
      $region21: #{conv_lm_head_model_forward.24} parent=15 // pred_check
        %p172 = pneg %p78
      $region22: #{conv_lm_head_model_forward.24} parent=15 // pred_check_branch
        %174 = sbr.rel (%p172) target = $region24
      $region23: #{conv_lm_head_model_forward.24} parent=15 // pred_region
        %s175 = smul.u32 8, %s18
        %p176 = scmp.lt.s32.totalorder %s16, 1
        %s177 = scalar_select %p176, %s16, 1
        %p178 = scmp.lt.s32.totalorder %s175, 7
        %s179 = scalar_select %p178, %s175, 7
        %s180 = smul.addr %s177, 8
        %s181 = sadd.s32 %s179, %s180
        %s182 = smul.addr %s181, 4
        %s183 = scalar_lea.vmem %s1, %s182
        %s184 = smul.u32 8, %s18
      $region24: #{conv_lm_head_model_forward.24} parent=15 // pred_fallthru
        _
      // Predicated region
      $region25: #{conv_lm_head_model_forward.24} parent=15 // pred_check
        %p185 = pneg %p106
      $region26: #{conv_lm_head_model_forward.24} parent=15 // pred_check_branch
        %187 = sbr.rel (%p185) target = $region28
      $region27: #{conv_lm_head_model_forward.24} parent=15 // pred_region
        %s188 = smul.u32 8, %s18
        %p189 = scmp.lt.s32.totalorder %s16, 1
        %s190 = scalar_select %p189, %s16, 1
        %p191 = scmp.lt.s32.totalorder %s188, 7
        %s192 = scalar_select %p191, %s188, 7
        %s193 = smul.addr %s190, 8
        %s194 = sadd.s32 %s192, %s193
        %s195 = smul.addr %s194, 4
        %s196 = scalar_lea.vmem %s2, %s195
        %s197 = smul.u32 8, %s18
      $region28: #{conv_lm_head_model_forward.24} parent=15 // pred_fallthru
        _
    $region16: #{conv_lm_head_model_forward.24} parent=5 // pred_fallthru
      _
    %p198 = scmp.le.s32.totalorder 1, %s9
    %p199 = scmp.lt.s32.totalorder %s9, 3
    %p200 = pnand %p198, %p199
    %p201 = pneg %p200
    // Predicated region
    $region29: #{conv_lm_head_model_forward.24} parent=5 // pred_check
      _
    $region30: #{conv_lm_head_model_forward.24} parent=5 // pred_check_branch
      %203 = sbr.rel (%p200) target = $region32
    $region31: #{conv_lm_head_model_forward.24} parent=5 // pred_region
      %s204 = ssub.s32 %s9, 1
      %s205 = smul.u32 8, %s20
      %p206 = scmp.lt.s32.totalorder %s19, 1
      %s207 = scalar_select %p206, %s19, 1
      %p208 = scmp.lt.s32.totalorder %s205, 7
      %s209 = scalar_select %p208, %s205, 7
      %s210 = smul.addr %s207, 8
      %s211 = sadd.s32 %s209, %s210
      %s212 = smul.addr %s211, 4
      %s213 = scalar_lea.vmem %s0, %s212
      %p214 = pneg %p56
      %p215 = pneg %p53
      %s216 = smul.u32 8, %s21
      %p217 = scmp.lt.s32.totalorder %s19, 1
      %s218 = scalar_select %p217, %s19, 1
      %p219 = scmp.lt.s32.totalorder %s216, 7
      %s220 = scalar_select %p219, %s216, 7
      %s221 = smul.addr %s218, 8
      %s222 = sadd.s32 %s220, %s221
      %s223 = smul.addr %s222, 4
      %s224 = scalar_lea.vmem %s1, %s223
      %p225 = pneg %p84
      %p226 = pneg %p81
      %s227 = smul.u32 8, %s21
      %p228 = scmp.lt.s32.totalorder %s19, 1
      %s229 = scalar_select %p228, %s19, 1
      %p230 = scmp.lt.s32.totalorder %s227, 7
      %s231 = scalar_select %p230, %s227, 7
      %s232 = smul.addr %s229, 8
      %s233 = sadd.s32 %s231, %s232
      %s234 = smul.addr %s233, 4
      %s235 = scalar_lea.vmem %s2, %s234
      %p236 = pneg %p112
      %p237 = pneg %p109
      %p238 = pneg %p140
      %p239 = pneg %p137
      %s240 = smul.u32 8, %s20
      %p241 = scmp.lt.s32.totalorder %s19, 1
      %s242 = scalar_select %p241, %s19, 1
      %p243 = scmp.lt.s32.totalorder %s240, 7
      %s244 = scalar_select %p243, %s240, 7
      %s245 = smul.addr %s242, 8
      %s246 = sadd.s32 %s244, %s245
      %s247 = smul.addr %s246, 4
      %s248 = scalar_lea.vmem %s3, %s247
      %s249 = smul.u32 8, %s20
      %p250 = scmp.lt.s32.totalorder %s19, 1
      %s251 = scalar_select %p250, %s19, 1
      %p252 = scmp.lt.s32.totalorder %s249, 7
      %s253 = scalar_select %p252, %s249, 7
      %s254 = smul.addr %s251, 8
      %s255 = sadd.s32 %s253, %s254
      %s256 = smul.addr %s255, 4
      %s257 = scalar_lea.vmem %s0, %s256
      %s258 = smul.u32 8, %s20
      %s259 = smul.u32 8, %s21
      %p260 = scmp.lt.s32.totalorder %s19, 1
      %s261 = scalar_select %p260, %s19, 1
      %p262 = scmp.lt.s32.totalorder %s259, 7
      %s263 = scalar_select %p262, %s259, 7
      %s264 = smul.addr %s261, 8
      %s265 = sadd.s32 %s263, %s264
      %s266 = smul.addr %s265, 4
      %s267 = scalar_lea.vmem %s1, %s266
      %s268 = smul.u32 8, %s21
      %s269 = smul.u32 8, %s21
      %p270 = scmp.lt.s32.totalorder %s19, 1
      %s271 = scalar_select %p270, %s19, 1
      %p272 = scmp.lt.s32.totalorder %s269, 7
      %s273 = scalar_select %p272, %s269, 7
      %s274 = smul.addr %s271, 8
      %s275 = sadd.s32 %s273, %s274
      %s276 = smul.addr %s275, 4
      %s277 = scalar_lea.vmem %s2, %s276
      %s278 = smul.u32 8, %s21
      %s279 = smul.u32 8, %s20
      %p280 = scmp.lt.s32.totalorder %s19, 1
      %s281 = scalar_select %p280, %s19, 1
      %p282 = scmp.lt.s32.totalorder %s279, 7
      %s283 = scalar_select %p282, %s279, 7
      %s284 = smul.addr %s281, 8
      %s285 = sadd.s32 %s283, %s284
      %s286 = smul.addr %s285, 4
      %s287 = scalar_lea.vmem %s3, %s286
      %s288 = smul.u32 8, %s20
      %p289 = scmp.eq.s32.totalorder %s21, 0
      // Predicated region
      $region33: #{conv_lm_head_model_forward.24} parent=31 // pred_check
        %p290 = pneg %p289
      $region34: #{conv_lm_head_model_forward.24} parent=31 // pred_check_branch
        %292 = sbr.rel (%p290) target = $region36
      $region35: #{conv_lm_head_model_forward.24} parent=31 // pred_region
        %vm293 = vcmask 7168
        %294 = vst.msk [vmem:[#allocation2] sm:$0xff] %vm293, -1e+30
        %295 = vst.msk [vmem:[#allocation2 + $0x8] sm:$0xff] %vm293, -1e+30
        %296 = vst.msk [vmem:[#allocation2 + $0x10] sm:$0xff] %vm293, -1e+30
        %297 = vst.msk [vmem:[#allocation2 + $0x18] sm:$0xff] %vm293, -1e+30
        %298 = vst.msk [vmem:[#allocation3] sm:$0xff] %vm293, 0.0
        %299 = vst.msk [vmem:[#allocation3 + $0x8] sm:$0xff] %vm293, 0.0
        %300 = vst.msk [vmem:[#allocation3 + $0x10] sm:$0xff] %vm293, 0.0
        %301 = vst.msk [vmem:[#allocation3 + $0x18] sm:$0xff] %vm293, 0.0
        %vm302 = vcmask 64512
        %303 = vst.msk [vmem:[#allocation4] sm:$0xff] %vm302, 0.0
        %304 = vst.msk [vmem:[#allocation4 + $0x8] sm:$0xff] %vm302, 0.0
        %305 = vst.msk [vmem:[#allocation4 + $0x10] sm:$0xff] %vm302, 0.0
        %306 = vst.msk [vmem:[#allocation4 + $0x18] sm:$0xff] %vm302, 0.0
      $region36: #{conv_lm_head_model_forward.24} parent=31 // pred_fallthru
        _
      %s307 = smul.u32 %s21, 8
      %s308 = smul.u32 %s20, 8
      %s309 = sadd.s32 %s308, 7
      %p310 = scmp.le.s32.totalorder %s307, %s309
      // Predicated region
      $region37: #{conv_lm_head_model_forward.24} parent=31 // pred_check
        %p311 = pneg %p310
      $region38: #{conv_lm_head_model_forward.24} parent=31 // pred_check_branch
        %313 = sbr.rel (%p311) target = $region40
      $region39: #{conv_lm_head_model_forward.24} parent=31 // pred_region
        %v314 = vld [vmem:[%s257] sm:$0xf]
        %v315 = vld [vmem:[%s257 + $0x4] sm:$0xf]
        %v316 = vld [vmem:[%s257 + $0x8] sm:$0xf]
        %v317 = vld [vmem:[%s257 + $0xc] sm:$0xf]
        %v318 = vld [vmem:[%s257 + $0x10] sm:$0xf]
        %v319 = vld [vmem:[%s257 + $0x14] sm:$0xf]
        %v320 = vld [vmem:[%s257 + $0x18] sm:$0xf]
        %v321 = vld [vmem:[%s257 + $0x1c] sm:$0xf]
        %v322 = vmul.f32 %v314, 0.35355338
        %v323 = vmul.f32 %v315, 0.35355338
        %v324 = vmul.f32 %v316, 0.35355338
        %v325 = vmul.f32 %v317, 0.35355338
        %v326 = vmul.f32 %v318, 0.35355338
        %v327 = vmul.f32 %v319, 0.35355338
        %v328 = vmul.f32 %v320, 0.35355338
        %v329 = vmul.f32 %v321, 0.35355338
        %v330 = vld [vmem:[%s267] sm:$0xf]
        %v331 = vld [vmem:[%s267 + $0x4] sm:$0xf]
        %v332 = vld [vmem:[%s267 + $0x8] sm:$0xf]
        %v333 = vld [vmem:[%s267 + $0xc] sm:$0xf]
        %v334 = vld [vmem:[%s267 + $0x10] sm:$0xf]
        %v335 = vld [vmem:[%s267 + $0x14] sm:$0xf]
        %v336 = vld [vmem:[%s267 + $0x18] sm:$0xf]
        %v337 = vld [vmem:[%s267 + $0x1c] sm:$0xf]
        %v338 = vld [vmem:[%s277] sm:$0xf]
        %v339 = vld [vmem:[%s277 + $0x4] sm:$0xf]
        %v340 = vld [vmem:[%s277 + $0x8] sm:$0xf]
        %v341 = vld [vmem:[%s277 + $0xc] sm:$0xf]
        %v342 = vld [vmem:[%s277 + $0x10] sm:$0xf]
        %v343 = vld [vmem:[%s277 + $0x14] sm:$0xf]
        %v344 = vld [vmem:[%s277 + $0x18] sm:$0xf]
        %v345 = vld [vmem:[%s277 + $0x1c] sm:$0xf]
        %v346 = vlaneseq
        %v347 = vshrl.u32 %v346, 7
        %v348 = vstv %s308
        %v349 = vadd.s32 %v348, %v347
        %v350 = vlaneseq
        %v351 = vand.u32 %v350, 127
        %v352 = vstv %s307
        %v353 = vadd.s32 %v352, %v351
        %vm354 = vcmp.le.s32.totalorder %v353, %v349
        %v363 = vrot.slane %v323, 7
        %vm364 = vcmask 1041409
        %v365 = vsel %vm364, %v363, %v322
        %v366 = vrot.slane %v324, 6
        %vm367 = vcmask 1042434
        %v368 = vsel %vm367, %v366, %v365
        %v369 = vrot.slane %v325, 5
        %vm370 = vcmask 1043459
        %v371 = vsel %vm370, %v369, %v368
        %v372 = vrot.slane %v326, 4
        %vm373 = vcmask 1044484
        %v374 = vsel %vm373, %v372, %v371
        %v375 = vrot.slane %v327, 3
        %vm376 = vcmask 1045509
        %v377 = vsel %vm376, %v375, %v374
        %v378 = vrot.slane %v328, 2
        %vm379 = vcmask 1046534
        %v380 = vsel %vm379, %v378, %v377
        %v381 = vrot.slane %v329, 1
        %vm382 = vcmask 1047559
        %v383 = vsel %vm382, %v381, %v380
        %v392 = vrot.slane %v331, 7
        %v393 = vsel %vm364, %v392, %v330
        %v394 = vrot.slane %v332, 6
        %v395 = vsel %vm367, %v394, %v393
        %v396 = vrot.slane %v333, 5
        %v397 = vsel %vm370, %v396, %v395
        %v398 = vrot.slane %v334, 4
        %v399 = vsel %vm373, %v398, %v397
        %v400 = vrot.slane %v335, 3
        %v401 = vsel %vm376, %v400, %v399
        %v402 = vrot.slane %v336, 2
        %v403 = vsel %vm379, %v402, %v401
        %v404 = vrot.slane %v337, 1
        %v405 = vsel %vm382, %v404, %v403
        %vm406 = vcmask 64512
        %v407 = vsel %vm406, %v383, 0
        %v409 = vsel %vm406, %v405, 0
        %411 = vmatpush.xpose.msra.mxu0 0.0
        %412 = vmatpush.xpose.msra.mxu0 0.0
        %413 = vmatpush.xpose.msra.mxu0 0.0
        %414 = vmatpush.xpose.msra.mxu0 0.0
        %415 = vmatpush.xpose.msra.mxu0 0.0
        %416 = vmatpush.xpose.msra.mxu0 0.0
        %417 = vmatpush.xpose.msra.mxu0 0.0
        %418 = vmatpush.xpose.msra.mxu0 0.0
        %419 = vmatpush.xpose.msra.mxu0 0.0
        %420 = vmatpush.xpose.msra.mxu0 0.0
        %421 = vmatpush.xpose.msra.mxu0 0.0
        %422 = vmatpush.xpose.msra.mxu0 0.0
        %423 = vmatpush.xpose.msra.mxu0 0.0
        %424 = vmatpush.xpose.msra.mxu0 0.0
        %425 = vmatpush.xpose.msra.mxu0 0.0
        %426 = vmatpush.xpose.msra.mxu0 %v409
        %427 = vmatmul.f32.gmra.mxu0 %v407
        %v428 = vpop.f32.mrf.mxu0
        %v429 = vadd.f32 0.0, %v428
        %430 = vdwg.mxu0
        %v431 = vsel %vm354, %v429, -1e+30
        %v432 = vld [vmem:[#allocation2] sm:$0xff]
        %v433 = vsel %vm406, %v431, -inf
        %434 = vmax.xlane.f32.xlu0 %v433
        %v435 = vpop.xlane.xlu0 %434
        %v436 = vmax.f32 %v432, %v435
        %v437 = vsub.f32 %v432, %v436
        %v438 = vmul.f32 %v437, 1.442695
        %v439 = vpow.pop %v438
        %441 = vset.pattern.permute.xlu0 0
        %442 = vperm.xlu0 %441, %v436
        %v443 = vpop.permute.xlu0 %442
        %v445 = vsub.f32 %v431, %v443
        %v446 = vmul.f32 %v445, 1.442695
        %v447 = vpow.pop %v446
        %v448 = vld [vmem:[#allocation3] sm:$0xff]
        %v449 = vmul.f32 %v439, %v448
        %v450 = vsel %vm406, %v447, 0.0
        %451 = vadd.xlane.f32.xlu0 %v450
        %v452 = vpop.xlane.xlu0 %451
        %v453 = vadd.f32 %v449, %v452
        %vm454 = vcmask 7168
        %455 = vst.msk [vmem:[#allocation3] sm:$0xff] %vm454, %v453
        %v456 = vld [vmem:[#allocation4] sm:$0xff]
        %458 = vset.pattern.permute.xlu0 0
        %459 = vperm.xlu0 %458, %v439
        %v460 = vpop.permute.xlu0 %459
        %v462 = vmul.f32 %v460, %v456
        %v471 = vrot.slane %v339, 7
        %v472 = vsel %vm364, %v471, %v338
        %v473 = vrot.slane %v340, 6
        %v474 = vsel %vm367, %v473, %v472
        %v475 = vrot.slane %v341, 5
        %v476 = vsel %vm370, %v475, %v474
        %v477 = vrot.slane %v342, 4
        %v478 = vsel %vm373, %v477, %v476
        %v479 = vrot.slane %v343, 3
        %v480 = vsel %vm376, %v479, %v478
        %v481 = vrot.slane %v344, 2
        %v482 = vsel %vm379, %v481, %v480
        %v483 = vrot.slane %v345, 1
        %v484 = vsel %vm382, %v483, %v482
        %v487 = vsel %vm406, %v447, 0
        %489 = vmatpush.msra.mxu0 0.0
        %490 = vmatpush.msra.mxu0 0.0
        %491 = vmatpush.msra.mxu0 0.0
        %492 = vmatpush.msra.mxu0 0.0
        %493 = vmatpush.msra.mxu0 0.0
        %494 = vmatpush.msra.mxu0 0.0
        %495 = vmatpush.msra.mxu0 0.0
        %496 = vmatpush.msra.mxu0 0.0
        %497 = vmatpush.msra.mxu0 0.0
        %498 = vmatpush.msra.mxu0 0.0
        %499 = vmatpush.msra.mxu0 0.0
        %500 = vmatpush.msra.mxu0 0.0
        %501 = vmatpush.msra.mxu0 0.0
        %502 = vmatpush.msra.mxu0 0.0
        %503 = vmatpush.msra.mxu0 0.0
        %504 = vmatpush.msra.mxu0 %v484
        %505 = vmatmul.f32.gmra.mxu0 %v487
        %v506 = vpop.f32.mrf.mxu0
        %v507 = vadd.f32 0.0, %v506
        %508 = vdwg.mxu0
        %v509 = vadd.f32 %v462, %v507
        %510 = vst.msk [vmem:[#allocation4] sm:$0xff] %vm406, %v509
        %511 = vst.msk [vmem:[#allocation2] sm:$0xff] %vm454, %v436
        %v512 = vrot.slane %v322, 1
        %v513 = vsel %vm364, %v323, %v512
        %v514 = vrot.slane %v324, 7
        %v515 = vsel %vm367, %v514, %v513
        %v516 = vrot.slane %v325, 6
        %v517 = vsel %vm370, %v516, %v515
        %v518 = vrot.slane %v326, 5
        %v519 = vsel %vm373, %v518, %v517
        %v520 = vrot.slane %v327, 4
        %v521 = vsel %vm376, %v520, %v519
        %v522 = vrot.slane %v328, 3
        %v523 = vsel %vm379, %v522, %v521
        %v524 = vrot.slane %v329, 2
        %v525 = vsel %vm382, %v524, %v523
        %v526 = vrot.slane %v330, 1
        %v527 = vsel %vm364, %v331, %v526
        %v528 = vrot.slane %v332, 7
        %v529 = vsel %vm367, %v528, %v527
        %v530 = vrot.slane %v333, 6
        %v531 = vsel %vm370, %v530, %v529
        %v532 = vrot.slane %v334, 5
        %v533 = vsel %vm373, %v532, %v531
        %v534 = vrot.slane %v335, 4
        %v535 = vsel %vm376, %v534, %v533
        %v536 = vrot.slane %v336, 3
        %v537 = vsel %vm379, %v536, %v535
        %v538 = vrot.slane %v337, 2
        %v539 = vsel %vm382, %v538, %v537
        %v540 = vsel %vm406, %v525, 0
        %v542 = vsel %vm406, %v539, 0
        %544 = vmatpush.xpose.msra.mxu0 0.0
        %545 = vmatpush.xpose.msra.mxu0 0.0
        %546 = vmatpush.xpose.msra.mxu0 0.0
        %547 = vmatpush.xpose.msra.mxu0 0.0
        %548 = vmatpush.xpose.msra.mxu0 0.0
        %549 = vmatpush.xpose.msra.mxu0 0.0
        %550 = vmatpush.xpose.msra.mxu0 0.0
        %551 = vmatpush.xpose.msra.mxu0 0.0
        %552 = vmatpush.xpose.msra.mxu0 0.0
        %553 = vmatpush.xpose.msra.mxu0 0.0
        %554 = vmatpush.xpose.msra.mxu0 0.0
        %555 = vmatpush.xpose.msra.mxu0 0.0
        %556 = vmatpush.xpose.msra.mxu0 0.0
        %557 = vmatpush.xpose.msra.mxu0 0.0
        %558 = vmatpush.xpose.msra.mxu0 0.0
        %559 = vmatpush.xpose.msra.mxu0 %v542
        %560 = vmatmul.f32.gmra.mxu0 %v540
        %v561 = vpop.f32.mrf.mxu0
        %v562 = vadd.f32 0.0, %v561
        %563 = vdwg.mxu0
        %v564 = vsel %vm354, %v562, -1e+30
        %s565 = scalar_lea.vmem [#allocation2], 8
        %v566 = vld [vmem:[%s565] sm:$0xff]
        %v567 = vsel %vm406, %v564, -inf
        %568 = vmax.xlane.f32.xlu0 %v567
        %v569 = vpop.xlane.xlu0 %568
        %v570 = vmax.f32 %v566, %v569
        %v571 = vsub.f32 %v566, %v570
        %v572 = vmul.f32 %v571, 1.442695
        %v573 = vpow.pop %v572
        %575 = vset.pattern.permute.xlu0 0
        %576 = vperm.xlu0 %575, %v570
        %v577 = vpop.permute.xlu0 %576
        %v579 = vsub.f32 %v564, %v577
        %v580 = vmul.f32 %v579, 1.442695
        %v581 = vpow.pop %v580
        %s582 = scalar_lea.vmem [#allocation3], 8
        %v583 = vld [vmem:[%s582] sm:$0xff]
        %v584 = vmul.f32 %v573, %v583
        %v585 = vsel %vm406, %v581, 0.0
        %586 = vadd.xlane.f32.xlu0 %v585
        %v587 = vpop.xlane.xlu0 %586
        %v588 = vadd.f32 %v584, %v587
        %589 = vst.msk [vmem:[%s582] sm:$0xff] %vm454, %v588
        %s590 = scalar_lea.vmem [#allocation4], 8
        %v591 = vld [vmem:[%s590] sm:$0xff]
        %593 = vset.pattern.permute.xlu0 0
        %594 = vperm.xlu0 %593, %v573
        %v595 = vpop.permute.xlu0 %594
        %v597 = vmul.f32 %v595, %v591
        %v598 = vrot.slane %v338, 1
        %v599 = vsel %vm364, %v339, %v598
        %v600 = vrot.slane %v340, 7
        %v601 = vsel %vm367, %v600, %v599
        %v602 = vrot.slane %v341, 6
        %v603 = vsel %vm370, %v602, %v601
        %v604 = vrot.slane %v342, 5
        %v605 = vsel %vm373, %v604, %v603
        %v606 = vrot.slane %v343, 4
        %v607 = vsel %vm376, %v606, %v605
        %v608 = vrot.slane %v344, 3
        %v609 = vsel %vm379, %v608, %v607
        %v610 = vrot.slane %v345, 2
        %v611 = vsel %vm382, %v610, %v609
        %v614 = vsel %vm406, %v581, 0
        %616 = vmatpush.msra.mxu0 0.0
        %617 = vmatpush.msra.mxu0 0.0
        %618 = vmatpush.msra.mxu0 0.0
        %619 = vmatpush.msra.mxu0 0.0
        %620 = vmatpush.msra.mxu0 0.0
        %621 = vmatpush.msra.mxu0 0.0
        %622 = vmatpush.msra.mxu0 0.0
        %623 = vmatpush.msra.mxu0 0.0
        %624 = vmatpush.msra.mxu0 0.0
        %625 = vmatpush.msra.mxu0 0.0
        %626 = vmatpush.msra.mxu0 0.0
        %627 = vmatpush.msra.mxu0 0.0
        %628 = vmatpush.msra.mxu0 0.0
        %629 = vmatpush.msra.mxu0 0.0
        %630 = vmatpush.msra.mxu0 0.0
        %631 = vmatpush.msra.mxu0 %v611
        %632 = vmatmul.f32.gmra.mxu0 %v614
        %v633 = vpop.f32.mrf.mxu0
        %v634 = vadd.f32 0.0, %v633
        %635 = vdwg.mxu0
        %v636 = vadd.f32 %v597, %v634
        %637 = vst.msk [vmem:[%s590] sm:$0xff] %vm406, %v636
        %638 = vst.msk [vmem:[%s565] sm:$0xff] %vm454, %v570
        %v639 = vrot.slane %v322, 2
        %v640 = vrot.slane %v323, 1
        %v641 = vsel %vm364, %v640, %v639
        %v642 = vsel %vm367, %v324, %v641
        %v643 = vrot.slane %v325, 7
        %v644 = vsel %vm370, %v643, %v642
        %v645 = vrot.slane %v326, 6
        %v646 = vsel %vm373, %v645, %v644
        %v647 = vrot.slane %v327, 5
        %v648 = vsel %vm376, %v647, %v646
        %v649 = vrot.slane %v328, 4
        %v650 = vsel %vm379, %v649, %v648
        %v651 = vrot.slane %v329, 3
        %v652 = vsel %vm382, %v651, %v650
        %v653 = vrot.slane %v330, 2
        %v654 = vrot.slane %v331, 1
        %v655 = vsel %vm364, %v654, %v653
        %v656 = vsel %vm367, %v332, %v655
        %v657 = vrot.slane %v333, 7
        %v658 = vsel %vm370, %v657, %v656
        %v659 = vrot.slane %v334, 6
        %v660 = vsel %vm373, %v659, %v658
        %v661 = vrot.slane %v335, 5
        %v662 = vsel %vm376, %v661, %v660
        %v663 = vrot.slane %v336, 4
        %v664 = vsel %vm379, %v663, %v662
        %v665 = vrot.slane %v337, 3
        %v666 = vsel %vm382, %v665, %v664
        %v667 = vsel %vm406, %v652, 0
        %v669 = vsel %vm406, %v666, 0
        %671 = vmatpush.xpose.msra.mxu0 0.0
        %672 = vmatpush.xpose.msra.mxu0 0.0
        %673 = vmatpush.xpose.msra.mxu0 0.0
        %674 = vmatpush.xpose.msra.mxu0 0.0
        %675 = vmatpush.xpose.msra.mxu0 0.0
        %676 = vmatpush.xpose.msra.mxu0 0.0
        %677 = vmatpush.xpose.msra.mxu0 0.0
        %678 = vmatpush.xpose.msra.mxu0 0.0
        %679 = vmatpush.xpose.msra.mxu0 0.0
        %680 = vmatpush.xpose.msra.mxu0 0.0
        %681 = vmatpush.xpose.msra.mxu0 0.0
        %682 = vmatpush.xpose.msra.mxu0 0.0
        %683 = vmatpush.xpose.msra.mxu0 0.0
        %684 = vmatpush.xpose.msra.mxu0 0.0
        %685 = vmatpush.xpose.msra.mxu0 0.0
        %686 = vmatpush.xpose.msra.mxu0 %v669
        %687 = vmatmul.f32.gmra.mxu0 %v667
        %v688 = vpop.f32.mrf.mxu0
        %v689 = vadd.f32 0.0, %v688
        %690 = vdwg.mxu0
        %v691 = vsel %vm354, %v689, -1e+30
        %s692 = scalar_lea.vmem [#allocation2], 16
        %v693 = vld [vmem:[%s692] sm:$0xff]
        %v694 = vsel %vm406, %v691, -inf
        %695 = vmax.xlane.f32.xlu0 %v694
        %v696 = vpop.xlane.xlu0 %695
        %v697 = vmax.f32 %v693, %v696
        %v698 = vsub.f32 %v693, %v697
        %v699 = vmul.f32 %v698, 1.442695
        %v700 = vpow.pop %v699
        %702 = vset.pattern.permute.xlu0 0
        %703 = vperm.xlu0 %702, %v697
        %v704 = vpop.permute.xlu0 %703
        %v706 = vsub.f32 %v691, %v704
        %v707 = vmul.f32 %v706, 1.442695
        %v708 = vpow.pop %v707
        %s709 = scalar_lea.vmem [#allocation3], 16
        %v710 = vld [vmem:[%s709] sm:$0xff]
        %v711 = vmul.f32 %v700, %v710
        %v712 = vsel %vm406, %v708, 0.0
        %713 = vadd.xlane.f32.xlu0 %v712
        %v714 = vpop.xlane.xlu0 %713
        %v715 = vadd.f32 %v711, %v714
        %716 = vst.msk [vmem:[%s709] sm:$0xff] %vm454, %v715
        %s717 = scalar_lea.vmem [#allocation4], 16
        %v718 = vld [vmem:[%s717] sm:$0xff]
        %720 = vset.pattern.permute.xlu0 0
        %721 = vperm.xlu0 %720, %v700
        %v722 = vpop.permute.xlu0 %721
        %v724 = vmul.f32 %v722, %v718
        %v725 = vrot.slane %v338, 2
        %v726 = vrot.slane %v339, 1
        %v727 = vsel %vm364, %v726, %v725
        %v728 = vsel %vm367, %v340, %v727
        %v729 = vrot.slane %v341, 7
        %v730 = vsel %vm370, %v729, %v728
        %v731 = vrot.slane %v342, 6
        %v732 = vsel %vm373, %v731, %v730
        %v733 = vrot.slane %v343, 5
        %v734 = vsel %vm376, %v733, %v732
        %v735 = vrot.slane %v344, 4
        %v736 = vsel %vm379, %v735, %v734
        %v737 = vrot.slane %v345, 3
        %v738 = vsel %vm382, %v737, %v736
        %v741 = vsel %vm406, %v708, 0
        %743 = vmatpush.msra.mxu0 0.0
        %744 = vmatpush.msra.mxu0 0.0
        %745 = vmatpush.msra.mxu0 0.0
        %746 = vmatpush.msra.mxu0 0.0
        %747 = vmatpush.msra.mxu0 0.0
        %748 = vmatpush.msra.mxu0 0.0
        %749 = vmatpush.msra.mxu0 0.0
        %750 = vmatpush.msra.mxu0 0.0
        %751 = vmatpush.msra.mxu0 0.0
        %752 = vmatpush.msra.mxu0 0.0
        %753 = vmatpush.msra.mxu0 0.0
        %754 = vmatpush.msra.mxu0 0.0
        %755 = vmatpush.msra.mxu0 0.0
        %756 = vmatpush.msra.mxu0 0.0
        %757 = vmatpush.msra.mxu0 0.0
        %758 = vmatpush.msra.mxu0 %v738
        %759 = vmatmul.f32.gmra.mxu0 %v741
        %v760 = vpop.f32.mrf.mxu0
        %v761 = vadd.f32 0.0, %v760
        %762 = vdwg.mxu0
        %v763 = vadd.f32 %v724, %v761
        %764 = vst.msk [vmem:[%s717] sm:$0xff] %vm406, %v763
        %765 = vst.msk [vmem:[%s692] sm:$0xff] %vm454, %v697
        %v766 = vrot.slane %v322, 3
        %v767 = vrot.slane %v323, 2
        %v768 = vsel %vm364, %v767, %v766
        %v769 = vrot.slane %v324, 1
        %v770 = vsel %vm367, %v769, %v768
        %v771 = vsel %vm370, %v325, %v770
        %v772 = vrot.slane %v326, 7
        %v773 = vsel %vm373, %v772, %v771
        %v774 = vrot.slane %v327, 6
        %v775 = vsel %vm376, %v774, %v773
        %v776 = vrot.slane %v328, 5
        %v777 = vsel %vm379, %v776, %v775
        %v778 = vrot.slane %v329, 4
        %v779 = vsel %vm382, %v778, %v777
        %v780 = vrot.slane %v330, 3
        %v781 = vrot.slane %v331, 2
        %v782 = vsel %vm364, %v781, %v780
        %v783 = vrot.slane %v332, 1
        %v784 = vsel %vm367, %v783, %v782
        %v785 = vsel %vm370, %v333, %v784
        %v786 = vrot.slane %v334, 7
        %v787 = vsel %vm373, %v786, %v785
        %v788 = vrot.slane %v335, 6
        %v789 = vsel %vm376, %v788, %v787
        %v790 = vrot.slane %v336, 5
        %v791 = vsel %vm379, %v790, %v789
        %v792 = vrot.slane %v337, 4
        %v793 = vsel %vm382, %v792, %v791
        %v794 = vsel %vm406, %v779, 0
        %v796 = vsel %vm406, %v793, 0
        %798 = vmatpush.xpose.msra.mxu0 0.0
        %799 = vmatpush.xpose.msra.mxu0 0.0
        %800 = vmatpush.xpose.msra.mxu0 0.0
        %801 = vmatpush.xpose.msra.mxu0 0.0
        %802 = vmatpush.xpose.msra.mxu0 0.0
        %803 = vmatpush.xpose.msra.mxu0 0.0
        %804 = vmatpush.xpose.msra.mxu0 0.0
        %805 = vmatpush.xpose.msra.mxu0 0.0
        %806 = vmatpush.xpose.msra.mxu0 0.0
        %807 = vmatpush.xpose.msra.mxu0 0.0
        %808 = vmatpush.xpose.msra.mxu0 0.0
        %809 = vmatpush.xpose.msra.mxu0 0.0
        %810 = vmatpush.xpose.msra.mxu0 0.0
        %811 = vmatpush.xpose.msra.mxu0 0.0
        %812 = vmatpush.xpose.msra.mxu0 0.0
        %813 = vmatpush.xpose.msra.mxu0 %v796
        %814 = vmatmul.f32.gmra.mxu0 %v794
        %v815 = vpop.f32.mrf.mxu0
        %v816 = vadd.f32 0.0, %v815
        %817 = vdwg.mxu0
        %v818 = vsel %vm354, %v816, -1e+30
        %s819 = scalar_lea.vmem [#allocation2], 24
        %v820 = vld [vmem:[%s819] sm:$0xff]
        %v821 = vsel %vm406, %v818, -inf
        %822 = vmax.xlane.f32.xlu0 %v821
        %v823 = vpop.xlane.xlu0 %822
        %v824 = vmax.f32 %v820, %v823
        %v825 = vsub.f32 %v820, %v824
        %v826 = vmul.f32 %v825, 1.442695
        %v827 = vpow.pop %v826
        %829 = vset.pattern.permute.xlu0 0
        %830 = vperm.xlu0 %829, %v824
        %v831 = vpop.permute.xlu0 %830
        %v833 = vsub.f32 %v818, %v831
        %v834 = vmul.f32 %v833, 1.442695
        %v835 = vpow.pop %v834
        %s836 = scalar_lea.vmem [#allocation3], 24
        %v837 = vld [vmem:[%s836] sm:$0xff]
        %v838 = vmul.f32 %v827, %v837
        %v839 = vsel %vm406, %v835, 0.0
        %840 = vadd.xlane.f32.xlu0 %v839
        %v841 = vpop.xlane.xlu0 %840
        %v842 = vadd.f32 %v838, %v841
        %843 = vst.msk [vmem:[%s836] sm:$0xff] %vm454, %v842
        %s844 = scalar_lea.vmem [#allocation4], 24
        %v845 = vld [vmem:[%s844] sm:$0xff]
        %847 = vset.pattern.permute.xlu0 0
        %848 = vperm.xlu0 %847, %v827
        %v849 = vpop.permute.xlu0 %848
        %v851 = vmul.f32 %v849, %v845
        %v852 = vrot.slane %v338, 3
        %v853 = vrot.slane %v339, 2
        %v854 = vsel %vm364, %v853, %v852
        %v855 = vrot.slane %v340, 1
        %v856 = vsel %vm367, %v855, %v854
        %v857 = vsel %vm370, %v341, %v856
        %v858 = vrot.slane %v342, 7
        %v859 = vsel %vm373, %v858, %v857
        %v860 = vrot.slane %v343, 6
        %v861 = vsel %vm376, %v860, %v859
        %v862 = vrot.slane %v344, 5
        %v863 = vsel %vm379, %v862, %v861
        %v864 = vrot.slane %v345, 4
        %v865 = vsel %vm382, %v864, %v863
        %v868 = vsel %vm406, %v835, 0
        %870 = vmatpush.msra.mxu0 0.0
        %871 = vmatpush.msra.mxu0 0.0
        %872 = vmatpush.msra.mxu0 0.0
        %873 = vmatpush.msra.mxu0 0.0
        %874 = vmatpush.msra.mxu0 0.0
        %875 = vmatpush.msra.mxu0 0.0
        %876 = vmatpush.msra.mxu0 0.0
        %877 = vmatpush.msra.mxu0 0.0
        %878 = vmatpush.msra.mxu0 0.0
        %879 = vmatpush.msra.mxu0 0.0
        %880 = vmatpush.msra.mxu0 0.0
        %881 = vmatpush.msra.mxu0 0.0
        %882 = vmatpush.msra.mxu0 0.0
        %883 = vmatpush.msra.mxu0 0.0
        %884 = vmatpush.msra.mxu0 0.0
        %885 = vmatpush.msra.mxu0 %v865
        %886 = vmatmul.f32.gmra.mxu0 %v868
        %v887 = vpop.f32.mrf.mxu0
        %v888 = vadd.f32 0.0, %v887
        %889 = vdwg.mxu0
        %v890 = vadd.f32 %v851, %v888
        %891 = vst.msk [vmem:[%s844] sm:$0xff] %vm406, %v890
        %892 = vst.msk [vmem:[%s819] sm:$0xff] %vm454, %v824
      $region40: #{conv_lm_head_model_forward.24} parent=31 // pred_fallthru
        _
      // Predicated region
      $region41: #{conv_lm_head_model_forward.24} parent=31 // pred_check
        %p893 = pneg %p289
      $region42: #{conv_lm_head_model_forward.24} parent=31 // pred_check_branch
        %895 = sbr.rel (%p893) target = $region44
      $region43: #{conv_lm_head_model_forward.24} parent=31 // pred_region
        %v896 = vld [vmem:[#allocation3] sm:$0xff]
        %v897 = vrcp.pop %v896
        %v898 = vld [vmem:[#allocation4] sm:$0xff]
        %900 = vset.pattern.permute.xlu0 0
        %901 = vperm.xlu0 %900, %v897
        %v902 = vpop.permute.xlu0 %901
        %v904 = vmul.f32 %v898, %v902
        %v906 = vrot.slane %v904, 1
        %v907 = vrot.slane %v904, 2
        %v908 = vrot.slane %v904, 3
        %v909 = vrot.slane %v904, 4
        %v910 = vrot.slane %v904, 5
        %v911 = vrot.slane %v904, 6
        %v912 = vrot.slane %v904, 7
        %vm920 = vcmask 57344
        %921 = vst.msk [vmem:[%s287] sm:$0x1] %vm920, %v904
        %922 = vst.msk [vmem:[%s287 + $0x4] sm:$0x1] %vm920, %v906
        %923 = vst.msk [vmem:[%s287 + $0x8] sm:$0x1] %vm920, %v907
        %924 = vst.msk [vmem:[%s287 + $0xc] sm:$0x1] %vm920, %v908
        %925 = vst.msk [vmem:[%s287 + $0x10] sm:$0x1] %vm920, %v909
        %926 = vst.msk [vmem:[%s287 + $0x14] sm:$0x1] %vm920, %v910
        %927 = vst.msk [vmem:[%s287 + $0x18] sm:$0x1] %vm920, %v911
        %928 = vst.msk [vmem:[%s287 + $0x1c] sm:$0x1] %vm920, %v912
        %s929 = scalar_lea.vmem [#allocation3], 8
        %v930 = vld [vmem:[%s929] sm:$0xff]
        %v931 = vrcp.pop %v930
        %s932 = scalar_lea.vmem [#allocation4], 8
        %v933 = vld [vmem:[%s932] sm:$0xff]
        %935 = vset.pattern.permute.xlu0 0
        %936 = vperm.xlu0 %935, %v931
        %v937 = vpop.permute.xlu0 %936
        %v939 = vmul.f32 %v933, %v937
        %v941 = vrot.slane %v939, 1
        %v942 = vrot.slane %v939, 2
        %v943 = vrot.slane %v939, 3
        %v944 = vrot.slane %v939, 4
        %v945 = vrot.slane %v939, 5
        %v946 = vrot.slane %v939, 6
        %v947 = vrot.slane %v939, 7
        %955 = vst.msk [vmem:[%s287 + $0x1] sm:$0x1] %vm920, %v939
        %956 = vst.msk [vmem:[%s287 + $0x5] sm:$0x1] %vm920, %v941
        %957 = vst.msk [vmem:[%s287 + $0x9] sm:$0x1] %vm920, %v942
        %958 = vst.msk [vmem:[%s287 + $0xd] sm:$0x1] %vm920, %v943
        %959 = vst.msk [vmem:[%s287 + $0x11] sm:$0x1] %vm920, %v944
        %960 = vst.msk [vmem:[%s287 + $0x15] sm:$0x1] %vm920, %v945
        %961 = vst.msk [vmem:[%s287 + $0x19] sm:$0x1] %vm920, %v946
        %962 = vst.msk [vmem:[%s287 + $0x1d] sm:$0x1] %vm920, %v947
        %s963 = scalar_lea.vmem [#allocation3], 16
        %v964 = vld [vmem:[%s963] sm:$0xff]
        %v965 = vrcp.pop %v964
        %s966 = scalar_lea.vmem [#allocation4], 16
        %v967 = vld [vmem:[%s966] sm:$0xff]
        %969 = vset.pattern.permute.xlu0 0
        %970 = vperm.xlu0 %969, %v965
        %v971 = vpop.permute.xlu0 %970
        %v973 = vmul.f32 %v967, %v971
        %v975 = vrot.slane %v973, 1
        %v976 = vrot.slane %v973, 2
        %v977 = vrot.slane %v973, 3
        %v978 = vrot.slane %v973, 4
        %v979 = vrot.slane %v973, 5
        %v980 = vrot.slane %v973, 6
        %v981 = vrot.slane %v973, 7
        %989 = vst.msk [vmem:[%s287 + $0x2] sm:$0x1] %vm920, %v973
        %990 = vst.msk [vmem:[%s287 + $0x6] sm:$0x1] %vm920, %v975
        %991 = vst.msk [vmem:[%s287 + $0xa] sm:$0x1] %vm920, %v976
        %992 = vst.msk [vmem:[%s287 + $0xe] sm:$0x1] %vm920, %v977
        %993 = vst.msk [vmem:[%s287 + $0x12] sm:$0x1] %vm920, %v978
        %994 = vst.msk [vmem:[%s287 + $0x16] sm:$0x1] %vm920, %v979
        %995 = vst.msk [vmem:[%s287 + $0x1a] sm:$0x1] %vm920, %v980
        %996 = vst.msk [vmem:[%s287 + $0x1e] sm:$0x1] %vm920, %v981
        %s997 = scalar_lea.vmem [#allocation3], 24
        %v998 = vld [vmem:[%s997] sm:$0xff]
        %v999 = vrcp.pop %v998
        %s1000 = scalar_lea.vmem [#allocation4], 24
        %v1001 = vld [vmem:[%s1000] sm:$0xff]
        %1003 = vset.pattern.permute.xlu0 0
        %1004 = vperm.xlu0 %1003, %v999
        %v1005 = vpop.permute.xlu0 %1004
        %v1007 = vmul.f32 %v1001, %v1005
        %v1009 = vrot.slane %v1007, 1
        %v1010 = vrot.slane %v1007, 2
        %v1011 = vrot.slane %v1007, 3
        %v1012 = vrot.slane %v1007, 4
        %v1013 = vrot.slane %v1007, 5
        %v1014 = vrot.slane %v1007, 6
        %v1015 = vrot.slane %v1007, 7
        %1023 = vst.msk [vmem:[%s287 + $0x3] sm:$0x1] %vm920, %v1007
        %1024 = vst.msk [vmem:[%s287 + $0x7] sm:$0x1] %vm920, %v1009
        %1025 = vst.msk [vmem:[%s287 + $0xb] sm:$0x1] %vm920, %v1010
        %1026 = vst.msk [vmem:[%s287 + $0xf] sm:$0x1] %vm920, %v1011
        %1027 = vst.msk [vmem:[%s287 + $0x13] sm:$0x1] %vm920, %v1012
        %1028 = vst.msk [vmem:[%s287 + $0x17] sm:$0x1] %vm920, %v1013
        %1029 = vst.msk [vmem:[%s287 + $0x1b] sm:$0x1] %vm920, %v1014
        %1030 = vst.msk [vmem:[%s287 + $0x1f] sm:$0x1] %vm920, %v1015
      $region44: #{conv_lm_head_model_forward.24} parent=31 // pred_fallthru
        _
      %s1031 = smul.u32 8, %s20
      %p1032 = scmp.lt.s32.totalorder %s19, 1
      %s1033 = scalar_select %p1032, %s19, 1
      %p1034 = scmp.lt.s32.totalorder %s1031, 7
      %s1035 = scalar_select %p1034, %s1031, 7
      %s1036 = smul.addr %s1033, 8
      %s1037 = sadd.s32 %s1035, %s1036
      %s1038 = smul.addr %s1037, 4
      %s1039 = scalar_lea.vmem %s3, %s1038
      // Predicated region
      $region45: #{conv_lm_head_model_forward.24} parent=31 // pred_check
        %p1040 = pneg %p137
      $region46: #{conv_lm_head_model_forward.24} parent=31 // pred_check_branch
        %1042 = sbr.rel (%p1040) target = $region48
      $region47: #{conv_lm_head_model_forward.24} parent=31 // pred_region
        %s1043 = smul.u32 8, %s20
      $region48: #{conv_lm_head_model_forward.24} parent=31 // pred_fallthru
        _
    $region32: #{conv_lm_head_model_forward.24} parent=5 // pred_fallthru
      _
    %p1044 = scmp.le.s32.totalorder 2, %s9
    // Predicated region
    $region49: #{conv_lm_head_model_forward.24} parent=5 // pred_check
      %p1045 = pneg %p1044
    $region50: #{conv_lm_head_model_forward.24} parent=5 // pred_check_branch
      %1047 = sbr.rel (%p1045) target = $region52
    $region51: #{conv_lm_head_model_forward.24} parent=5 // pred_region
      %s1048 = ssub.s32 %s9, 2
      // Predicated region
      $region53: #{conv_lm_head_model_forward.24} parent=51 // pred_check
        %p1049 = pneg %p143
      $region54: #{conv_lm_head_model_forward.24} parent=51 // pred_check_branch
        %1051 = sbr.rel (%p1049) target = $region56
      $region55: #{conv_lm_head_model_forward.24} parent=51 // pred_region
        %s1052 = smul.u32 8, %s23
        %p1053 = scmp.lt.s32.totalorder %s22, 1
        %s1054 = scalar_select %p1053, %s22, 1
        %p1055 = scmp.lt.s32.totalorder %s1052, 7
        %s1056 = scalar_select %p1055, %s1052, 7
        %s1057 = smul.addr %s1054, 8
        %s1058 = sadd.s32 %s1056, %s1057
        %s1059 = smul.addr %s1058, 4
        %s1060 = scalar_lea.vmem %s3, %s1059
      $region56: #{conv_lm_head_model_forward.24} parent=51 // pred_fallthru
        _
    $region52: #{conv_lm_head_model_forward.24} parent=5 // pred_fallthru
      _
  $region6: #{conv_lm_head_model_forward.24} parent=0 // loop_footer
    %s13 = sadd.s32 1, %s9
  $region7: #{conv_lm_head_model_forward.24} parent=0 // loop_footer_branch
    %8 = sbr.rel target = $region3
  $region8: #{conv_lm_head_model_forward.24} parent=0 // loop_exit
    _

// kernel: conv_lm_head_model_forward.28
$region0: #{conv_lm_head_model_forward.28}
  #allocation0 [shape = 'u32[]', space=smem, size = 0x4, offset = 0x4, fixed_abs, tag = 'smem constant byte address 0x4 - core index']
  #allocation1 [shape = 'u32[72,128]{1,0:T(1,128)}', space=vmem, size = 0x9000, scoped, tag = 'internal scratch']
  #allocation2 [shape = 'f32[16,32]{1,0:T(8,128)}', space=vmem, size = 0x2000, scoped, tag = 'scratch operand']
  %s0 = inlined_call_operand.vmem [shape: f32[16,128], index: 0, kind: input, shape index: {}]
  %s1 = inlined_call_operand.vmem [shape: f32[128,32], index: 1, kind: input, shape index: {}]
  %s2 = inlined_call_operand.vmem [shape: f32[1,32], index: 2, kind: input, shape index: {}]
  %s3 = inlined_call_operand.vmem [shape: f32[16,32], index: 3, kind: output, shape index: {}]
  %s4 = sld [smem:[#allocation0]]
  $region30: #{conv_lm_head_model_forward.28} parent=0
    _
  %s6 = ssub.s32 1, %s4
  %s7 = scalar_select 0, %s6, %s4
  // Predicated region
  $region2: #{conv_lm_head_model_forward.28} parent=0 // pred_check
    _
  $region3: #{conv_lm_head_model_forward.28} parent=0 // pred_check_branch
    %9 = sbr.rel (0) target = $region5
  $region4: #{conv_lm_head_model_forward.28} parent=0 // pred_region
    _
  $region5: #{conv_lm_head_model_forward.28} parent=0 // pred_fallthru
    _
  // Predicated region
  $region6: #{conv_lm_head_model_forward.28} parent=0 // pred_check
    _
  $region7: #{conv_lm_head_model_forward.28} parent=0 // pred_check_branch
    %11 = sbr.rel (0) target = $region9
  $region8: #{conv_lm_head_model_forward.28} parent=0 // pred_region
    _
  $region9: #{conv_lm_head_model_forward.28} parent=0 // pred_fallthru
    _
  // Predicated region
  $region10: #{conv_lm_head_model_forward.28} parent=0 // pred_check
    _
  $region11: #{conv_lm_head_model_forward.28} parent=0 // pred_check_branch
    %13 = sbr.rel (0) target = $region13
  $region12: #{conv_lm_head_model_forward.28} parent=0 // pred_region
    _
  $region13: #{conv_lm_head_model_forward.28} parent=0 // pred_fallthru
    _
  %p14 = scmp.eq.s32.totalorder 0, 0
  // Predicated region
  $region14: #{conv_lm_head_model_forward.28} parent=0 // pred_check
    %p15 = pneg %p14
  $region15: #{conv_lm_head_model_forward.28} parent=0 // pred_check_branch
    %17 = sbr.rel (%p15) target = $region17
  $region16: #{conv_lm_head_model_forward.28} parent=0 // pred_region
    %vm18 = vcmask 261120
    %19 = vst.msk [vmem:[#allocation2] sm:$0xff] %vm18, 0.0
    %20 = vst.msk [vmem:[#allocation2 + $0x8] sm:$0xff] %vm18, 0.0
  $region17: #{conv_lm_head_model_forward.28} parent=0 // pred_fallthru
    _
  %v21 = vld [vmem:[%s0] sm:$0xff]
  %v22 = vld [vmem:[%s0 + $0x8] sm:$0xff]
  %v23 = vld [vmem:[%s1] sm:$0xff]
  %v24 = vld [vmem:[%s1 + $0x8] sm:$0xff]
  %v25 = vld [vmem:[%s1 + $0x10] sm:$0xff]
  %v26 = vld [vmem:[%s1 + $0x18] sm:$0xff]
  %v27 = vld [vmem:[%s1 + $0x20] sm:$0xff]
  %v28 = vld [vmem:[%s1 + $0x28] sm:$0xff]
  %v29 = vld [vmem:[%s1 + $0x30] sm:$0xff]
  %v30 = vld [vmem:[%s1 + $0x38] sm:$0xff]
  %v31 = vld [vmem:[%s1 + $0x40] sm:$0xff]
  %v32 = vld [vmem:[%s1 + $0x48] sm:$0xff]
  %v33 = vld [vmem:[%s1 + $0x50] sm:$0xff]
  %v34 = vld [vmem:[%s1 + $0x58] sm:$0xff]
  %v35 = vld [vmem:[%s1 + $0x60] sm:$0xff]
  %v36 = vld [vmem:[%s1 + $0x68] sm:$0xff]
  %v37 = vld [vmem:[%s1 + $0x70] sm:$0xff]
  %v38 = vld [vmem:[%s1 + $0x78] sm:$0xff]
  %v39 = vld [vmem:[#allocation2] sm:$0xff]
  %v40 = vld [vmem:[#allocation2 + $0x8] sm:$0xff]
  %41 = vmatpush.msra.mxu0 %v38
  %42 = vmatpush.msra.mxu0 %v37
  %43 = vmatpush.msra.mxu0 %v36
  %44 = vmatpush.msra.mxu0 %v35
  %45 = vmatpush.msra.mxu0 %v34
  %46 = vmatpush.msra.mxu0 %v33
  %47 = vmatpush.msra.mxu0 %v32
  %48 = vmatpush.msra.mxu0 %v31
  %49 = vmatpush.msra.mxu0 %v30
  %50 = vmatpush.msra.mxu0 %v29
  %51 = vmatpush.msra.mxu0 %v28
  %52 = vmatpush.msra.mxu0 %v27
  %53 = vmatpush.msra.mxu0 %v26
  %54 = vmatpush.msra.mxu0 %v25
  %55 = vmatpush.msra.mxu0 %v24
  %56 = vmatpush.msra.mxu0 %v23
  %57 = vmatmul.f32.gmra.mxu0 %v21
  %v58 = vpop.f32.mrf.mxu0
  %v59 = vadd.f32 0.0, %v58
  %60 = vmatmul.f32.gmra.mxu0 %v22
  %v61 = vpop.f32.mrf.mxu0
  %v62 = vadd.f32 0.0, %v61
  %63 = vdwg.mxu0
  %v64 = vadd.f32 %v39, %v59
  %v65 = vadd.f32 %v40, %v62
  %vm66 = vcmask 261120
  %67 = vst.msk [vmem:[#allocation2] sm:$0xff] %vm66, %v64
  %68 = vst.msk [vmem:[#allocation2 + $0x8] sm:$0xff] %vm66, %v65
  // Predicated region
  $region18: #{conv_lm_head_model_forward.28} parent=0 // pred_check
    %p69 = pneg %p14
  $region19: #{conv_lm_head_model_forward.28} parent=0 // pred_check_branch
    %71 = sbr.rel (%p69) target = $region21
  $region20: #{conv_lm_head_model_forward.28} parent=0 // pred_region
    %v72 = vld [vmem:[#allocation2] sm:$0xff]
    %v73 = vld [vmem:[#allocation2 + $0x8] sm:$0xff]
    %v74 = vld [vmem:[%s2] sm:$0x1]
    %v76 = vperm.slane %v74, 0
    %v78 = vadd.f32 %v72, %v76
    %v79 = vadd.f32 %v73, %v76
    %80 = vst.msk [vmem:[%s3] sm:$0xff] %vm66, %v78
    %81 = vst.msk [vmem:[%s3 + $0x8] sm:$0xff] %vm66, %v79
  $region21: #{conv_lm_head_model_forward.28} parent=0 // pred_fallthru
    _
  // Predicated region
  $region22: #{conv_lm_head_model_forward.28} parent=0 // pred_check
    _
  $region23: #{conv_lm_head_model_forward.28} parent=0 // pred_check_branch
    %83 = sbr.rel (0) target = $region25
  $region24: #{conv_lm_head_model_forward.28} parent=0 // pred_region
    _
  $region25: #{conv_lm_head_model_forward.28} parent=0 // pred_fallthru
    _
  // Predicated region
  $region26: #{conv_lm_head_model_forward.28} parent=0 // pred_check
    _
  $region27: #{conv_lm_head_model_forward.28} parent=0 // pred_check_branch
    %85 = sbr.rel (0) target = $region29
  $region28: #{conv_lm_head_model_forward.28} parent=0 // pred_region
    _
  $region29: #{conv_lm_head_model_forward.28} parent=0 // pred_fallthru
    _

// kernel: conv_lm_head_model_forward.38
$region0: #{conv_lm_head_model_forward.38}
  #allocation0 [shape = 'u32[]', space=smem, size = 0x4, offset = 0x4, fixed_abs, tag = 'smem constant byte address 0x4 - core index']
  #allocation1 [shape = 'u32[72,128]{1,0:T(1,128)}', space=vmem, size = 0x9000, scoped, tag = 'internal scratch']
  %s0 = inlined_call_operand.vmem [shape: f32[16,32], index: 0, kind: input, shape index: {}]
  %s1 = inlined_call_operand.vmem [shape: f32[16,32], index: 1, kind: input, shape index: {}]
  %s2 = inlined_call_operand.vmem [shape: f32[1,32], index: 2, kind: input, shape index: {}]
  %s3 = inlined_call_operand.vmem [shape: f32[1,32], index: 3, kind: input, shape index: {}]
  %s4 = inlined_call_operand.hbm [shape: f32[16,32], index: 4, kind: output, shape index: {0}]
  %s5 = inlined_call_operand.vmem [shape: f32[16,32], index: 5, kind: output, shape index: {1}]
  %6 = xla_tuple %s4, %s5
  %s7 = sld [smem:[#allocation0]]
  $region34: #{conv_lm_head_model_forward.38} parent=0
    _
  %s9 = ssub.s32 1, %s7
  %s10 = scalar_select 0, %s9, %s7
  $region1: #{conv_lm_head_model_forward.38} parent=0
    #allocation2 [shape = 'u8[8192]{0}', space=vmem, size = 0x2000, scoped, tag = 'output window, operand 0, single buffered']
    #allocation3 [shape = 's32[1]{0}', space=sflag, size = 0x4, scoped, tag = 'scoped memory for conv_lm_head_model_forward.38']
    %11 = vsyncpa [#allocation3], 0
    // Predicated region
    $region2: #{conv_lm_head_model_forward.38} parent=1 // pred_check
      _
    $region3: #{conv_lm_head_model_forward.38} parent=1 // pred_check_branch
      %13 = sbr.rel (0) target = $region5
    $region4: #{conv_lm_head_model_forward.38} parent=1 // pred_region
      _
    $region5: #{conv_lm_head_model_forward.38} parent=1 // pred_fallthru
      _
    // Predicated region
    $region6: #{conv_lm_head_model_forward.38} parent=1 // pred_check
      _
    $region7: #{conv_lm_head_model_forward.38} parent=1 // pred_check_branch
      %15 = sbr.rel (0) target = $region9
    $region8: #{conv_lm_head_model_forward.38} parent=1 // pred_region
      _
    $region9: #{conv_lm_head_model_forward.38} parent=1 // pred_fallthru
      _
    // Predicated region
    $region10: #{conv_lm_head_model_forward.38} parent=1 // pred_check
      _
    $region11: #{conv_lm_head_model_forward.38} parent=1 // pred_check_branch
      %17 = sbr.rel (0) target = $region13
    $region12: #{conv_lm_head_model_forward.38} parent=1 // pred_region
      _
    $region13: #{conv_lm_head_model_forward.38} parent=1 // pred_fallthru
      _
    // Predicated region
    $region14: #{conv_lm_head_model_forward.38} parent=1 // pred_check
      _
    $region15: #{conv_lm_head_model_forward.38} parent=1 // pred_check_branch
      %19 = sbr.rel (0) target = $region17
    $region16: #{conv_lm_head_model_forward.38} parent=1 // pred_region
      _
    $region17: #{conv_lm_head_model_forward.38} parent=1 // pred_fallthru
      _
    %v20 = vld [vmem:[%s0] sm:$0xff]
    %v21 = vld [vmem:[%s0 + $0x8] sm:$0xff]
    %v22 = vld [vmem:[%s1] sm:$0xff]
    %v23 = vld [vmem:[%s1 + $0x8] sm:$0xff]
    %v24 = vadd.f32 %v20, %v22
    %v25 = vadd.f32 %v21, %v23
    %vm26 = vcmask 261120
    %27 = vst.msk [vmem:[#allocation2] sm:$0xff] %vm26, %v24
    %28 = vst.msk [vmem:[#allocation2 + $0x8] sm:$0xff] %vm26, %v25
    %v29 = vsel %vm26, %v24, 0.0
    %30 = vadd.xlane.f32.xlu0 %v29
    %v31 = vpop.xlane.xlu0 %30
    %v32 = vsel %vm26, %v25, 0.0
    %33 = vadd.xlane.f32.xlu0 %v32
    %v34 = vpop.xlane.xlu0 %33
    %v35 = vrcp.pop 32.0
    %v36 = vmul.f32 32.0, %v35
    %v37 = vsub.f32 1.0, %v36
    %v38 = vmul.f32 %v35, %v37
    %v39 = vadd.f32 %v35, %v38
    %vm40 = vweird.f32 %v35
    %v41 = vsel %vm40, %v35, %v39
    %v42 = vmul.f32 %v31, %v41
    %v43 = vmul.f32 %v34, %v41
    %v44 = vsub.f32 %v24, %v42
    %v45 = vsub.f32 %v25, %v43
    %v46 = vmul.f32 %v44, %v44
    %v47 = vmul.f32 %v45, %v45
    %v48 = vsel %vm26, %v46, 0.0
    %49 = vadd.xlane.f32.xlu0 %v48
    %v50 = vpop.xlane.xlu0 %49
    %v51 = vsel %vm26, %v47, 0.0
    %52 = vadd.xlane.f32.xlu0 %v51
    %v53 = vpop.xlane.xlu0 %52
    %v54 = vmul.f32 %v50, %v41
    %v55 = vmul.f32 %v53, %v41
    %v56 = vadd.f32 %v54, 1e-05
    %v57 = vadd.f32 %v55, 1e-05
    %v58 = vrsqrt.pop %v56
    %v59 = vmul.f32 %v58, %v56
    %v60 = vmul.f32 %v59, %v58
    %v61 = vmul.f32 0.5, %v60
    %v62 = vsub.f32 1.5, %v61
    %v63 = vmul.f32 %v58, %v62
    %vm64 = vweird.f32 %v56
    %vm65 = vweird.f32 %v58
    %vm66 = vmor %vm64, %vm65
    %v67 = vsel %vm66, %v58, %v63
    %v68 = vrsqrt.pop %v57
    %v69 = vmul.f32 %v68, %v57
    %v70 = vmul.f32 %v69, %v68
    %v71 = vmul.f32 0.5, %v70
    %v72 = vsub.f32 1.5, %v71
    %v73 = vmul.f32 %v68, %v72
    %vm74 = vweird.f32 %v57
    %vm75 = vweird.f32 %v68
    %vm76 = vmor %vm74, %vm75
    %v77 = vsel %vm76, %v68, %v73
    %v78 = vmul.f32 %v44, %v67
    %v79 = vmul.f32 %v45, %v77
    %v80 = vld [vmem:[%s2] sm:$0x1]
    %v82 = vperm.slane %v80, 0
    %v84 = vmul.f32 %v78, %v82
    %v85 = vmul.f32 %v79, %v82
    %v86 = vld [vmem:[%s3] sm:$0x1]
    %v88 = vperm.slane %v86, 0
    %v90 = vadd.f32 %v84, %v88
    %v91 = vadd.f32 %v85, %v88
    %92 = vst.msk [vmem:[%s5] sm:$0xff] %vm26, %v90
    %93 = vst.msk [vmem:[%s5 + $0x8] sm:$0xff] %vm26, %v91
    // Predicated region
    $region18: #{conv_lm_head_model_forward.38} parent=1 // pred_check
      _
    $region19: #{conv_lm_head_model_forward.38} parent=1 // pred_check_branch
      %95 = sbr.rel (0) target = $region21
    $region20: #{conv_lm_head_model_forward.38} parent=1 // pred_region
      %97 = vsyncadd [#allocation3], 0
      %s98 = sshll.u32 [#allocation2], 4
      %s99 = int_to_ptr.vmem [resolvable:$true] %s98
      %s100 = sshll.u32 %s4, 4
      %s101 = int_to_ptr.hbm [resolvable:$true] %s100
      %106 = dma.vmem_to_hbm [thread:$0]  %s99, 256, %s101, [#allocation3], 128, 128, 8
    $region21: #{conv_lm_head_model_forward.38} parent=1 // pred_fallthru
      _
    // Predicated region
    $region22: #{conv_lm_head_model_forward.38} parent=1 // pred_check
      _
    $region23: #{conv_lm_head_model_forward.38} parent=1 // pred_check_branch
      %108 = sbr.rel (0) target = $region25
    $region24: #{conv_lm_head_model_forward.38} parent=1 // pred_region
      _
    $region25: #{conv_lm_head_model_forward.38} parent=1 // pred_fallthru
      _
    // Predicated region
    $region26: #{conv_lm_head_model_forward.38} parent=1 // pred_check
      _
    $region27: #{conv_lm_head_model_forward.38} parent=1 // pred_check_branch
      %110 = sbr.rel (0) target = $region29
    $region28: #{conv_lm_head_model_forward.38} parent=1 // pred_region
      %112 = dma.done [#allocation3], 256
    $region29: #{conv_lm_head_model_forward.38} parent=1 // pred_fallthru
      _
    // Predicated region
    $region30: #{conv_lm_head_model_forward.38} parent=1 // pred_check
      _
    $region31: #{conv_lm_head_model_forward.38} parent=1 // pred_check_branch
      %114 = sbr.rel (0) target = $region33
    $region32: #{conv_lm_head_model_forward.38} parent=1 // pred_region
      _
    $region33: #{conv_lm_head_model_forward.38} parent=1 // pred_fallthru
      _
    %115 = vsyncpa [#allocation3], 1

// kernel: conv_lm_head_model_forward.39
$region0: #{conv_lm_head_model_forward.39}
  #allocation0 [shape = 'u32[]', space=smem, size = 0x4, offset = 0x4, fixed_abs, tag = 'smem constant byte address 0x4 - core index']
  #allocation1 [shape = 'u32[72,128]{1,0:T(1,128)}', space=vmem, size = 0x9000, scoped, tag = 'internal scratch']
  #allocation2 [shape = 'f32[16,128]{1,0:T(8,128)}', space=vmem, size = 0x2000, scoped, tag = 'scratch operand']
  %s0 = inlined_call_operand.vmem [shape: f32[16,32], index: 0, kind: input, shape index: {}]
  %s1 = inlined_call_operand.vmem [shape: f32[128,32], index: 1, kind: input, shape index: {}]
  %s2 = inlined_call_operand.hbm [shape: f32[16,128], index: 2, kind: output, shape index: {}]
  %s3 = sld [smem:[#allocation0]]
  $region26: #{conv_lm_head_model_forward.39} parent=0
    _
  %s5 = ssub.s32 1, %s3
  %s6 = scalar_select 0, %s5, %s3
  $region1: #{conv_lm_head_model_forward.39} parent=0
    #allocation3 [shape = 'u8[8192]{0}', space=vmem, size = 0x2000, scoped, tag = 'output window, operand 0, single buffered']
    #allocation4 [shape = 's32[1]{0}', space=sflag, size = 0x4, scoped, tag = 'scoped memory for conv_lm_head_model_forward.39']
    %7 = vsyncpa [#allocation4], 0
    // Predicated region
    $region2: #{conv_lm_head_model_forward.39} parent=1 // pred_check
      _
    $region3: #{conv_lm_head_model_forward.39} parent=1 // pred_check_branch
      %9 = sbr.rel (0) target = $region5
    $region4: #{conv_lm_head_model_forward.39} parent=1 // pred_region
      _
    $region5: #{conv_lm_head_model_forward.39} parent=1 // pred_fallthru
      _
    // Predicated region
    $region6: #{conv_lm_head_model_forward.39} parent=1 // pred_check
      _
    $region7: #{conv_lm_head_model_forward.39} parent=1 // pred_check_branch
      %11 = sbr.rel (0) target = $region9
    $region8: #{conv_lm_head_model_forward.39} parent=1 // pred_region
      _
    $region9: #{conv_lm_head_model_forward.39} parent=1 // pred_fallthru
      _
    %p12 = scmp.eq.s32.totalorder 0, 0
    // Predicated region
    $region10: #{conv_lm_head_model_forward.39} parent=1 // pred_check
      %p13 = pneg %p12
    $region11: #{conv_lm_head_model_forward.39} parent=1 // pred_check_branch
      %15 = sbr.rel (%p13) target = $region13
    $region12: #{conv_lm_head_model_forward.39} parent=1 // pred_region
      %16 = vst [vmem:[#allocation2] sm:$0xff] 0.0
      %17 = vst [vmem:[#allocation2 + $0x8] sm:$0xff] 0.0
    $region13: #{conv_lm_head_model_forward.39} parent=1 // pred_fallthru
      _
    %v18 = vld [vmem:[%s0] sm:$0xff]
    %v19 = vld [vmem:[%s0 + $0x8] sm:$0xff]
    %v20 = vld [vmem:[%s1] sm:$0xff]
    %v21 = vld [vmem:[%s1 + $0x8] sm:$0xff]
    %v22 = vld [vmem:[%s1 + $0x10] sm:$0xff]
    %v23 = vld [vmem:[%s1 + $0x18] sm:$0xff]
    %v24 = vld [vmem:[%s1 + $0x20] sm:$0xff]
    %v25 = vld [vmem:[%s1 + $0x28] sm:$0xff]
    %v26 = vld [vmem:[%s1 + $0x30] sm:$0xff]
    %v27 = vld [vmem:[%s1 + $0x38] sm:$0xff]
    %v28 = vld [vmem:[%s1 + $0x40] sm:$0xff]
    %v29 = vld [vmem:[%s1 + $0x48] sm:$0xff]
    %v30 = vld [vmem:[%s1 + $0x50] sm:$0xff]
    %v31 = vld [vmem:[%s1 + $0x58] sm:$0xff]
    %v32 = vld [vmem:[%s1 + $0x60] sm:$0xff]
    %v33 = vld [vmem:[%s1 + $0x68] sm:$0xff]
    %v34 = vld [vmem:[%s1 + $0x70] sm:$0xff]
    %v35 = vld [vmem:[%s1 + $0x78] sm:$0xff]
    %v36 = vld [vmem:[#allocation2] sm:$0xff]
    %v37 = vld [vmem:[#allocation2 + $0x8] sm:$0xff]
    %vm38 = vcmask 261120
    %v40 = vsel %vm38, %v18, 0
    %v43 = vsel %vm38, %v19, 0
    %v46 = vsel %vm38, %v20, 0
    %v49 = vsel %vm38, %v21, 0
    %v52 = vsel %vm38, %v22, 0
    %v55 = vsel %vm38, %v23, 0
    %v58 = vsel %vm38, %v24, 0
    %v61 = vsel %vm38, %v25, 0
    %v64 = vsel %vm38, %v26, 0
    %v67 = vsel %vm38, %v27, 0
    %v70 = vsel %vm38, %v28, 0
    %v73 = vsel %vm38, %v29, 0
    %v76 = vsel %vm38, %v30, 0
    %v79 = vsel %vm38, %v31, 0
    %v82 = vsel %vm38, %v32, 0
    %v85 = vsel %vm38, %v33, 0
    %v88 = vsel %vm38, %v34, 0
    %v91 = vsel %vm38, %v35, 0
    %93 = vmatpush.xpose.msra.mxu0 %v91
    %94 = vmatpush.xpose.msra.mxu0 %v88
    %95 = vmatpush.xpose.msra.mxu0 %v85
    %96 = vmatpush.xpose.msra.mxu0 %v82
    %97 = vmatpush.xpose.msra.mxu0 %v79
    %98 = vmatpush.xpose.msra.mxu0 %v76
    %99 = vmatpush.xpose.msra.mxu0 %v73
    %100 = vmatpush.xpose.msra.mxu0 %v70
    %101 = vmatpush.xpose.msra.mxu0 %v67
    %102 = vmatpush.xpose.msra.mxu0 %v64
    %103 = vmatpush.xpose.msra.mxu0 %v61
    %104 = vmatpush.xpose.msra.mxu0 %v58
    %105 = vmatpush.xpose.msra.mxu0 %v55
    %106 = vmatpush.xpose.msra.mxu0 %v52
    %107 = vmatpush.xpose.msra.mxu0 %v49
    %108 = vmatpush.xpose.msra.mxu0 %v46
    %109 = vmatmul.f32.gmra.mxu0 %v40
    %v110 = vpop.f32.mrf.mxu0
    %v111 = vadd.f32 0.0, %v110
    %112 = vmatmul.f32.gmra.mxu0 %v43
    %v113 = vpop.f32.mrf.mxu0
    %v114 = vadd.f32 0.0, %v113
    %115 = vdwg.mxu0
    %v116 = vadd.f32 %v36, %v111
    %v117 = vadd.f32 %v37, %v114
    %118 = vst [vmem:[#allocation2] sm:$0xff] %v116
    %119 = vst [vmem:[#allocation2 + $0x8] sm:$0xff] %v117
    // Predicated region
    $region14: #{conv_lm_head_model_forward.39} parent=1 // pred_check
      %p120 = pneg %p12
    $region15: #{conv_lm_head_model_forward.39} parent=1 // pred_check_branch
      %122 = sbr.rel (%p120) target = $region17
    $region16: #{conv_lm_head_model_forward.39} parent=1 // pred_region
      %v123 = vld [vmem:[#allocation2] sm:$0xff]
      %v124 = vld [vmem:[#allocation2 + $0x8] sm:$0xff]
      %125 = vst [vmem:[#allocation3] sm:$0xff] %v123
      %126 = vst [vmem:[#allocation3 + $0x8] sm:$0xff] %v124
    $region17: #{conv_lm_head_model_forward.39} parent=1 // pred_fallthru
      _
    // Predicated region
    $region18: #{conv_lm_head_model_forward.39} parent=1 // pred_check
      _
    $region19: #{conv_lm_head_model_forward.39} parent=1 // pred_check_branch
      %128 = sbr.rel (0) target = $region21
    $region20: #{conv_lm_head_model_forward.39} parent=1 // pred_region
      %130 = vsyncadd [#allocation4], 0
      %s131 = sshll.u32 [#allocation3], 4
      %s132 = int_to_ptr.vmem [resolvable:$true] %s131
      %s133 = sshll.u32 %s2, 4
      %s134 = int_to_ptr.hbm [resolvable:$true] %s133
      %139 = dma.vmem_to_hbm [thread:$0]  %s132, 256, %s134, [#allocation4], 128, 128, 8
    $region21: #{conv_lm_head_model_forward.39} parent=1 // pred_fallthru
      _
    // Predicated region
    $region22: #{conv_lm_head_model_forward.39} parent=1 // pred_check
      _
    $region23: #{conv_lm_head_model_forward.39} parent=1 // pred_check_branch
      %141 = sbr.rel (0) target = $region25
    $region24: #{conv_lm_head_model_forward.39} parent=1 // pred_region
      %143 = dma.done [#allocation4], 256
    $region25: #{conv_lm_head_model_forward.39} parent=1 // pred_fallthru
      _
    %144 = vsyncpa [#allocation4], 1

</llo_original>
